<compile_context>
chip_gen: v7x
topology: tpu7x:2x2x1
jax: 0.10.0
libtpu: 0.0.40
codegen_flags: <defaults>
</compile_context>

<pallas_src>
import jax
import jax.numpy as jnp
from jax.experimental import pallas as pl
from jax.experimental.pallas import tpu as pltpu

# Logical (PyTorch) layer sizes.
HID1, HID2, LAT = 1000, 500, 50
# Lane-aligned (multiple-of-128) sizes used inside the kernel.
HID1_P, HID2_P, LAT_P = 1024, 512, 128


def _round_up(n, m):
    return ((n + m - 1) // m) * m


# ----------------------------------------------------------------------------
# Kernel: one batch tile through the whole 6-layer MLP. Weights are bf16 and
# lane-padded; activations stay f32 and are cast to bf16 only at MXU inputs.
# ----------------------------------------------------------------------------
def vfe_kernel(x_ref,
               w1_ref, b1_ref, w2_ref, b2_ref, w3_ref, b3_ref,   # encoder
               w4_ref, b4_ref, w5_ref, b5_ref, w6_ref, b6_ref,   # decoder
               out_ref, lat_ref):

    def dense(h, w_ref, b_ref):
        return jnp.dot(h.astype(jnp.bfloat16), w_ref[...],
                       preferred_element_type=jnp.float32) + b_ref[...]

    x = x_ref[...]
    # ---------------- Encoder ----------------
    h = jnp.maximum(dense(x, w1_ref, b1_ref), 0.0)        # ReLU
    h = jnp.maximum(dense(h, w2_ref, b2_ref), 0.0)        # ReLU
    lat = dense(h, w3_ref, b3_ref)                         # self.lant_vec
    lat_ref[...] = lat.astype(lat_ref.dtype)
    # ---------------- Decoder ----------------
    h = jnp.maximum(dense(lat, w4_ref, b4_ref), 0.0)       # ReLU
    h = jnp.maximum(dense(h, w5_ref, b5_ref), 0.0)         # ReLU
    out_ref[...] = jnp.tanh(dense(h, w6_ref, b6_ref)).astype(out_ref.dtype)


# ----------------------------------------------------------------------------
# Parameter init (PyTorch nn.Linear-style) + packing (pad + bf16 cast).
# ----------------------------------------------------------------------------
def init_linear(key, in_f, out_f):
    kw, kb = jax.random.split(key)
    bound = 1.0 / jnp.sqrt(jnp.float32(in_f))
    w = jax.random.uniform(kw, (in_f, out_f), jnp.float32, -bound, bound)
    b = jax.random.uniform(kb, (1, out_f), jnp.float32, -bound, bound)
    return w, b


def init_vfe_params(key, width, height):
    wh = width * height
    ks = jax.random.split(key, 6)
    w1, b1 = init_linear(ks[0], wh, HID1)       # Encoder
    w2, b2 = init_linear(ks[1], HID1, HID2)
    w3, b3 = init_linear(ks[2], HID2, LAT)
    w4, b4 = init_linear(ks[3], LAT, HID2)      # Decoder
    w5, b5 = init_linear(ks[4], HID2, HID1)
    w6, b6 = init_linear(ks[5], HID1, wh)
    return (w1, b1, w2, b2, w3, b3, w4, b4, w5, b5, w6, b6)


def _pad2(a, rows, cols):
    r, c = a.shape
    return jnp.pad(a, ((0, rows - r), (0, cols - c)))


def pack_params(params, wh):
    """Zero-pad every dim to a multiple of 128 and cast weights to bf16
    (biases stay f32). Zero padding is mathematically inert here."""
    (w1, b1, w2, b2, w3, b3, w4, b4, w5, b5, w6, b6) = params
    wh_p = _round_up(wh, 128)
    W = lambda w, r, c: _pad2(w, r, c).astype(jnp.bfloat16)
    Bv = lambda b, c: _pad2(b, 1, c).astype(jnp.float32)
    return (W(w1, wh_p, HID1_P),  Bv(b1, HID1_P),
            W(w2, HID1_P, HID2_P), Bv(b2, HID2_P),
            W(w3, HID2_P, LAT_P),  Bv(b3, LAT_P),
            W(w4, LAT_P, HID2_P),  Bv(b4, HID2_P),
            W(w5, HID2_P, HID1_P), Bv(b5, HID1_P),
            W(w6, HID1_P, wh_p),   Bv(b6, wh_p))


# ----------------------------------------------------------------------------
# Wrapper: batch grid with resident weights.
# ----------------------------------------------------------------------------
def vfe_forward(x, packed, *, block_m=256):
    """x: [B, width*height] float32. Returns (reconstruction [B, wh], latent [B, 50])."""
    B, wh = x.shape
    params = packed
    (w1, b1, w2, b2, w3, b3, w4, b4, w5, b5, w6, b6) = params
    wh_p = w1.shape[0]

    tm = min(_round_up(B, 8), block_m)          # batch tile (sublane-aligned)
    B_p = _round_up(B, tm)
    grid = (B_p // tm,)

    xp = jnp.pad(x, ((0, B_p - B), (0, wh_p - wh)))

    # Batch tile moves with the grid; weights/biases stay resident (block (0,0)).
    in_specs = [pl.BlockSpec((tm, wh_p), lambda i: (i, 0))]
    for arr in params:
        in_specs.append(pl.BlockSpec(arr.shape, lambda i: (0, 0)))

    # Cost estimate for XLA's scheduler.
    flops = 2 * B_p * (wh_p * HID1_P + HID1_P * HID2_P + HID2_P * LAT_P
                       + LAT_P * HID2_P + HID2_P * HID1_P + HID1_P * wh_p)
    weight_bytes = sum(int(a.size) * a.dtype.itemsize for a in params)
    bytes_accessed = weight_bytes + 4 * B_p * (2 * wh_p + LAT_P)

    # VMEM budget: double-buffered moving tiles (x, recon, latent) + resident
    # params (double-buffered worst case) + f32 activation headroom.
    tile_bytes = 4 * tm * (2 * wh_p + LAT_P)
    act_bytes = 4 * tm * (wh_p + HID1_P + HID2_P + LAT_P)
    vmem_bytes = 2 * (weight_bytes + tile_bytes) + act_bytes + (4 << 20)
    vmem_bytes = int(min(max(vmem_bytes, 16 << 20), 64 << 20))

    recon_p, lat_p = pl.pallas_call(
        vfe_kernel,
        grid=grid,
        out_shape=(jax.ShapeDtypeStruct((B_p, wh_p), jnp.float32),    # reconstruction
                   jax.ShapeDtypeStruct((B_p, LAT_P), jnp.float32)),  # latent (padded)
        in_specs=in_specs,
        out_specs=(pl.BlockSpec((tm, wh_p), lambda i: (i, 0)),
                   pl.BlockSpec((tm, LAT_P), lambda i: (i, 0))),
        compiler_params=pltpu.CompilerParams(
            dimension_semantics=("parallel",),
            vmem_limit_bytes=vmem_bytes),
        cost_estimate=pl.CostEstimate(flops=flops,
                                      transcendentals=B_p * wh_p,
                                      bytes_accessed=bytes_accessed),
    )(xp, *params)

    return recon_p[:B, :wh], lat_p[:B, :LAT]


# ----------------------------------------------------------------------------
# Pure-JAX reference mirroring the kernel math (bf16 matmul inputs, f32 accum).
# ----------------------------------------------------------------------------
def vfe_reference(x, params):
    (w1, b1, w2, b2, w3, b3, w4, b4, w5, b5, w6, b6) = params

    def dense(h, w, b):
        return jnp.dot(h.astype(jnp.bfloat16), w.astype(jnp.bfloat16),
                       preferred_element_type=jnp.float32) + b

    h = jnp.maximum(dense(x, w1, b1), 0.0)
    h = jnp.maximum(dense(h, w2, b2), 0.0)
    lat = dense(h, w3, b3)
    h = jnp.maximum(dense(lat, w4, b4), 0.0)
    h = jnp.maximum(dense(h, w5, b5), 0.0)
    return jnp.tanh(dense(h, w6, b6)), lat


if __name__ == "__main__":
    width, height = 16, 16        # width*height = 256
    batch = 16

    key = jax.random.PRNGKey(0)
    k_params, k_x = jax.random.split(key)

    params = init_vfe_params(k_params, width, height)       # logical f32 params
    packed = pack_params(params, width * height)            # padded bf16 params
    x = jax.random.normal(k_x, (batch, width * height), jnp.float32)

    recon, latent = vfe_forward(x, packed)
    recon = jax.block_until_ready(recon)
    latent = jax.block_until_ready(latent)

    recon_ref, latent_ref = vfe_reference(x, params)
    assert recon.shape == (batch, width * height)
    assert latent.shape == (batch, LAT)
    assert jnp.allclose(recon, recon_ref, atol=1e-2, rtol=1e-2)
    assert jnp.allclose(latent, latent_ref, atol=2e-2, rtol=2e-2)

    print("KERNEL_OK")
</pallas_src>

<mosaic_0001>
module attributes {stable_mosaic.version = 11 : i64} {
  func.func @vfe_kernel(%arg0: i32, %arg1: memref<16x256xf32, #tpu.memory_space<vmem>>, %arg2: memref<256x1024xbf16, #tpu.memory_space<vmem>>, %arg3: memref<1x1024xf32, #tpu.memory_space<vmem>>, %arg4: memref<1024x512xbf16, #tpu.memory_space<vmem>>, %arg5: memref<1x512xf32, #tpu.memory_space<vmem>>, %arg6: memref<512x128xbf16, #tpu.memory_space<vmem>>, %arg7: memref<1x128xf32, #tpu.memory_space<vmem>>, %arg8: memref<128x512xbf16, #tpu.memory_space<vmem>>, %arg9: memref<1x512xf32, #tpu.memory_space<vmem>>, %arg10: memref<512x1024xbf16, #tpu.memory_space<vmem>>, %arg11: memref<1x1024xf32, #tpu.memory_space<vmem>>, %arg12: memref<1024x256xbf16, #tpu.memory_space<vmem>>, %arg13: memref<1x256xf32, #tpu.memory_space<vmem>>, %arg14: memref<16x256xf32, #tpu.memory_space<vmem>>, %arg15: memref<16x128xf32, #tpu.memory_space<vmem>>) attributes {dimension_semantics = [#tpu.dimension_semantics<parallel>], iteration_bounds = array<i64: 1>, scalar_prefetch = 0 : i64, scratch_operands = 0 : i64, tpu.core_type = #tpu.core_type<tc>, window_params = [{transform_indices = @transform_0, window_bounds = array<i64: 16, 256>}, {pipeline_mode = #tpu.pipeline_mode<synchronous>, transform_indices = @transform_1, window_bounds = array<i64: 256, 1024>}, {pipeline_mode = #tpu.pipeline_mode<synchronous>, transform_indices = @transform_2, window_bounds = array<i64: 1, 1024>}, {pipeline_mode = #tpu.pipeline_mode<synchronous>, transform_indices = @transform_3, window_bounds = array<i64: 1024, 512>}, {pipeline_mode = #tpu.pipeline_mode<synchronous>, transform_indices = @transform_4, window_bounds = array<i64: 1, 512>}, {pipeline_mode = #tpu.pipeline_mode<synchronous>, transform_indices = @transform_5, window_bounds = array<i64: 512, 128>}, {pipeline_mode = #tpu.pipeline_mode<synchronous>, transform_indices = @transform_6, window_bounds = array<i64: 1, 128>}, {pipeline_mode = #tpu.pipeline_mode<synchronous>, transform_indices = @transform_7, window_bounds = array<i64: 128, 512>}, {pipeline_mode = #tpu.pipeline_mode<synchronous>, transform_indices = @transform_8, window_bounds = array<i64: 1, 512>}, {pipeline_mode = #tpu.pipeline_mode<synchronous>, transform_indices = @transform_9, window_bounds = array<i64: 512, 1024>}, {pipeline_mode = #tpu.pipeline_mode<synchronous>, transform_indices = @transform_10, window_bounds = array<i64: 1, 1024>}, {pipeline_mode = #tpu.pipeline_mode<synchronous>, transform_indices = @transform_11, window_bounds = array<i64: 1024, 256>}, {pipeline_mode = #tpu.pipeline_mode<synchronous>, transform_indices = @transform_12, window_bounds = array<i64: 1, 256>}, {transform_indices = @transform_13, window_bounds = array<i64: 16, 256>}, {transform_indices = @transform_14, window_bounds = array<i64: 16, 128>}]} {
    %c0 = arith.constant 0 : index
    %c0_0 = arith.constant 0 : index
    %0 = vector.load %arg1[%c0, %c0_0] : memref<16x256xf32, #tpu.memory_space<vmem>>, vector<16x256xf32>
    %1 = arith.truncf %0 : vector<16x256xf32> to vector<16x256xbf16>
    %c0_1 = arith.constant 0 : index
    %c0_2 = arith.constant 0 : index
    %2 = vector.load %arg2[%c0_1, %c0_2] : memref<256x1024xbf16, #tpu.memory_space<vmem>>, vector<256x1024xbf16>
    %cst = arith.constant dense<0.000000e+00> : vector<16x1024xf32>
    %3 = tpu.matmul %1, %2, %cst {dimension_numbers = #tpu.dot_dimension_numbers<[1], [0], [0], [1], [0, 0, 1, 1], [], []>} : vector<16x256xbf16>, vector<256x1024xbf16>, vector<16x1024xf32> -> vector<16x1024xf32>
    %c0_3 = arith.constant 0 : index
    %c0_4 = arith.constant 0 : index
    %4 = vector.load %arg3[%c0_3, %c0_4] : memref<1x1024xf32, #tpu.memory_space<vmem>>, vector<1x1024xf32>
    %5 = vector.broadcast %4 : vector<1x1024xf32> to vector<16x1024xf32>
    %6 = arith.addf %3, %5 : vector<16x1024xf32>
    %cst_5 = arith.constant 0.000000e+00 : f32
    %7 = vector.broadcast %cst_5 : f32 to vector<16x1024xf32>
    %8 = arith.maximumf %6, %7 : vector<16x1024xf32>
    %9 = arith.truncf %8 : vector<16x1024xf32> to vector<16x1024xbf16>
    %c0_6 = arith.constant 0 : index
    %c0_7 = arith.constant 0 : index
    %10 = vector.load %arg4[%c0_6, %c0_7] : memref<1024x512xbf16, #tpu.memory_space<vmem>>, vector<1024x512xbf16>
    %cst_8 = arith.constant dense<0.000000e+00> : vector<16x512xf32>
    %11 = tpu.matmul %9, %10, %cst_8 {dimension_numbers = #tpu.dot_dimension_numbers<[1], [0], [0], [1], [0, 0, 1, 1], [], []>} : vector<16x1024xbf16>, vector<1024x512xbf16>, vector<16x512xf32> -> vector<16x512xf32>
    %c0_9 = arith.constant 0 : index
    %c0_10 = arith.constant 0 : index
    %12 = vector.load %arg5[%c0_9, %c0_10] : memref<1x512xf32, #tpu.memory_space<vmem>>, vector<1x512xf32>
    %13 = vector.broadcast %12 : vector<1x512xf32> to vector<16x512xf32>
    %14 = arith.addf %11, %13 : vector<16x512xf32>
    %cst_11 = arith.constant 0.000000e+00 : f32
    %15 = vector.broadcast %cst_11 : f32 to vector<16x512xf32>
    %16 = arith.maximumf %14, %15 : vector<16x512xf32>
    %17 = arith.truncf %16 : vector<16x512xf32> to vector<16x512xbf16>
    %c0_12 = arith.constant 0 : index
    %c0_13 = arith.constant 0 : index
    %18 = vector.load %arg6[%c0_12, %c0_13] : memref<512x128xbf16, #tpu.memory_space<vmem>>, vector<512x128xbf16>
    %cst_14 = arith.constant dense<0.000000e+00> : vector<16x128xf32>
    %19 = tpu.matmul %17, %18, %cst_14 {dimension_numbers = #tpu.dot_dimension_numbers<[1], [0], [0], [1], [0, 0, 1, 1], [], []>} : vector<16x512xbf16>, vector<512x128xbf16>, vector<16x128xf32> -> vector<16x128xf32>
    %c0_15 = arith.constant 0 : index
    %c0_16 = arith.constant 0 : index
    %20 = vector.load %arg7[%c0_15, %c0_16] : memref<1x128xf32, #tpu.memory_space<vmem>>, vector<1x128xf32>
    %21 = vector.broadcast %20 : vector<1x128xf32> to vector<16x128xf32>
    %22 = arith.addf %19, %21 : vector<16x128xf32>
    %c0_17 = arith.constant 0 : index
    %c0_18 = arith.constant 0 : index
    %23 = vector.load %arg15[%c0_17, %c0_18] : memref<16x128xf32, #tpu.memory_space<vmem>>, vector<16x128xf32>
    tpu.vector_store %arg15[%c0_17, %c0_18], %22 {strides = array<i32>} : memref<16x128xf32, #tpu.memory_space<vmem>>, vector<16x128xf32>,
    %24 = arith.truncf %22 : vector<16x128xf32> to vector<16x128xbf16>
    %c0_19 = arith.constant 0 : index
    %c0_20 = arith.constant 0 : index
    %25 = vector.load %arg8[%c0_19, %c0_20] : memref<128x512xbf16, #tpu.memory_space<vmem>>, vector<128x512xbf16>
    %cst_21 = arith.constant dense<0.000000e+00> : vector<16x512xf32>
    %26 = tpu.matmul %24, %25, %cst_21 {dimension_numbers = #tpu.dot_dimension_numbers<[1], [0], [0], [1], [0, 0, 1, 1], [], []>} : vector<16x128xbf16>, vector<128x512xbf16>, vector<16x512xf32> -> vector<16x512xf32>
    %c0_22 = arith.constant 0 : index
    %c0_23 = arith.constant 0 : index
    %27 = vector.load %arg9[%c0_22, %c0_23] : memref<1x512xf32, #tpu.memory_space<vmem>>, vector<1x512xf32>
    %28 = vector.broadcast %27 : vector<1x512xf32> to vector<16x512xf32>
    %29 = arith.addf %26, %28 : vector<16x512xf32>
    %cst_24 = arith.constant 0.000000e+00 : f32
    %30 = vector.broadcast %cst_24 : f32 to vector<16x512xf32>
    %31 = arith.maximumf %29, %30 : vector<16x512xf32>
    %32 = arith.truncf %31 : vector<16x512xf32> to vector<16x512xbf16>
    %c0_25 = arith.constant 0 : index
    %c0_26 = arith.constant 0 : index
    %33 = vector.load %arg10[%c0_25, %c0_26] : memref<512x1024xbf16, #tpu.memory_space<vmem>>, vector<512x1024xbf16>
    %cst_27 = arith.constant dense<0.000000e+00> : vector<16x1024xf32>
    %34 = tpu.matmul %32, %33, %cst_27 {dimension_numbers = #tpu.dot_dimension_numbers<[1], [0], [0], [1], [0, 0, 1, 1], [], []>} : vector<16x512xbf16>, vector<512x1024xbf16>, vector<16x1024xf32> -> vector<16x1024xf32>
    %c0_28 = arith.constant 0 : index
    %c0_29 = arith.constant 0 : index
    %35 = vector.load %arg11[%c0_28, %c0_29] : memref<1x1024xf32, #tpu.memory_space<vmem>>, vector<1x1024xf32>
    %36 = vector.broadcast %35 : vector<1x1024xf32> to vector<16x1024xf32>
    %37 = arith.addf %34, %36 : vector<16x1024xf32>
    %cst_30 = arith.constant 0.000000e+00 : f32
    %38 = vector.broadcast %cst_30 : f32 to vector<16x1024xf32>
    %39 = arith.maximumf %37, %38 : vector<16x1024xf32>
    %40 = arith.truncf %39 : vector<16x1024xf32> to vector<16x1024xbf16>
    %c0_31 = arith.constant 0 : index
    %c0_32 = arith.constant 0 : index
    %41 = vector.load %arg12[%c0_31, %c0_32] : memref<1024x256xbf16, #tpu.memory_space<vmem>>, vector<1024x256xbf16>
    %cst_33 = arith.constant dense<0.000000e+00> : vector<16x256xf32>
    %42 = tpu.matmul %40, %41, %cst_33 {dimension_numbers = #tpu.dot_dimension_numbers<[1], [0], [0], [1], [0, 0, 1, 1], [], []>} : vector<16x1024xbf16>, vector<1024x256xbf16>, vector<16x256xf32> -> vector<16x256xf32>
    %c0_34 = arith.constant 0 : index
    %c0_35 = arith.constant 0 : index
    %43 = vector.load %arg13[%c0_34, %c0_35] : memref<1x256xf32, #tpu.memory_space<vmem>>, vector<1x256xf32>
    %44 = vector.broadcast %43 : vector<1x256xf32> to vector<16x256xf32>
    %45 = arith.addf %42, %44 : vector<16x256xf32>
    %46 = math.tanh %45 : vector<16x256xf32>
    %c0_36 = arith.constant 0 : index
    %c0_37 = arith.constant 0 : index
    %47 = vector.load %arg14[%c0_36, %c0_37] : memref<16x256xf32, #tpu.memory_space<vmem>>, vector<16x256xf32>
    tpu.vector_store %arg14[%c0_36, %c0_37], %46 {strides = array<i32>} : memref<16x256xf32, #tpu.memory_space<vmem>>, vector<16x256xf32>,
    return
  }
  func.func @transform_0(%arg0: i32) -> (i32, i32) {
    %c0_i32 = arith.constant 0 : i32
    %c0_i32_0 = arith.constant 0 : i32
    return %arg0, %c0_i32 : i32, i32
  }
  func.func @transform_1(%arg0: i32) -> (i32, i32) {
    %c0_i32 = arith.constant 0 : i32
    %c0_i32_0 = arith.constant 0 : i32
    %c0_i32_1 = arith.constant 0 : i32
    return %c0_i32, %c0_i32_0 : i32, i32
  }
  func.func @transform_2(%arg0: i32) -> (i32, i32) {
    %c0_i32 = arith.constant 0 : i32
    %c0_i32_0 = arith.constant 0 : i32
    %c0_i32_1 = arith.constant 0 : i32
    return %c0_i32, %c0_i32_0 : i32, i32
  }
  func.func @transform_3(%arg0: i32) -> (i32, i32) {
    %c0_i32 = arith.constant 0 : i32
    %c0_i32_0 = arith.constant 0 : i32
    %c0_i32_1 = arith.constant 0 : i32
    return %c0_i32, %c0_i32_0 : i32, i32
  }
  func.func @transform_4(%arg0: i32) -> (i32, i32) {
    %c0_i32 = arith.constant 0 : i32
    %c0_i32_0 = arith.constant 0 : i32
    %c0_i32_1 = arith.constant 0 : i32
    return %c0_i32, %c0_i32_0 : i32, i32
  }
  func.func @transform_5(%arg0: i32) -> (i32, i32) {
    %c0_i32 = arith.constant 0 : i32
    %c0_i32_0 = arith.constant 0 : i32
    %c0_i32_1 = arith.constant 0 : i32
    return %c0_i32, %c0_i32_0 : i32, i32
  }
  func.func @transform_6(%arg0: i32) -> (i32, i32) {
    %c0_i32 = arith.constant 0 : i32
    %c0_i32_0 = arith.constant 0 : i32
    %c0_i32_1 = arith.constant 0 : i32
    return %c0_i32, %c0_i32_0 : i32, i32
  }
  func.func @transform_7(%arg0: i32) -> (i32, i32) {
    %c0_i32 = arith.constant 0 : i32
    %c0_i32_0 = arith.constant 0 : i32
    %c0_i32_1 = arith.constant 0 : i32
    return %c0_i32, %c0_i32_0 : i32, i32
  }
  func.func @transform_8(%arg0: i32) -> (i32, i32) {
    %c0_i32 = arith.constant 0 : i32
    %c0_i32_0 = arith.constant 0 : i32
    %c0_i32_1 = arith.constant 0 : i32
    return %c0_i32, %c0_i32_0 : i32, i32
  }
  func.func @transform_9(%arg0: i32) -> (i32, i32) {
    %c0_i32 = arith.constant 0 : i32
    %c0_i32_0 = arith.constant 0 : i32
    %c0_i32_1 = arith.constant 0 : i32
    return %c0_i32, %c0_i32_0 : i32, i32
  }
  func.func @transform_10(%arg0: i32) -> (i32, i32) {
    %c0_i32 = arith.constant 0 : i32
    %c0_i32_0 = arith.constant 0 : i32
    %c0_i32_1 = arith.constant 0 : i32
    return %c0_i32, %c0_i32_0 : i32, i32
  }
  func.func @transform_11(%arg0: i32) -> (i32, i32) {
    %c0_i32 = arith.constant 0 : i32
    %c0_i32_0 = arith.constant 0 : i32
    %c0_i32_1 = arith.constant 0 : i32
    return %c0_i32, %c0_i32_0 : i32, i32
  }
  func.func @transform_12(%arg0: i32) -> (i32, i32) {
    %c0_i32 = arith.constant 0 : i32
    %c0_i32_0 = arith.constant 0 : i32
    %c0_i32_1 = arith.constant 0 : i32
    return %c0_i32, %c0_i32_0 : i32, i32
  }
  func.func @transform_13(%arg0: i32) -> (i32, i32) {
    %c0_i32 = arith.constant 0 : i32
    %c0_i32_0 = arith.constant 0 : i32
    return %arg0, %c0_i32 : i32, i32
  }
  func.func @transform_14(%arg0: i32) -> (i32, i32) {
    %c0_i32 = arith.constant 0 : i32
    %c0_i32_0 = arith.constant 0 : i32
    return %arg0, %c0_i32 : i32, i32
  }
}

</mosaic_0001>

<llo_original>
// kernel: tpu_custom_call.1
$region0: #{tpu_custom_call.1}
  #allocation0 [shape = 'u32[]', space=smem, size = 0x4, offset = 0x4, fixed_abs, tag = 'smem constant byte address 0x4 - core index']
  #allocation1 [shape = 'u32[144,128]{1,0:T(1,128)}', space=vmem, size = 0x12000, scoped, tag = 'internal scratch']
  %s0 = inlined_call_operand.hbm [shape: f32[16,256], index: 0, kind: input, shape index: {}]
  %s1 = inlined_call_operand.hbm [shape: bf16[256,1024], index: 1, kind: input, shape index: {}]
  %s2 = inlined_call_operand.hbm [shape: f32[1,1024], index: 2, kind: input, shape index: {}]
  %s3 = inlined_call_operand.hbm [shape: bf16[1024,512], index: 3, kind: input, shape index: {}]
  %s4 = inlined_call_operand.vmem [shape: f32[1,512], index: 4, kind: input, shape index: {}]
  %s5 = inlined_call_operand.hbm [shape: bf16[512,128], index: 5, kind: input, shape index: {}]
  %s6 = inlined_call_operand.vmem [shape: f32[1,128], index: 6, kind: input, shape index: {}]
  %s7 = inlined_call_operand.hbm [shape: bf16[128,512], index: 7, kind: input, shape index: {}]
  %s8 = inlined_call_operand.vmem [shape: f32[1,512], index: 8, kind: input, shape index: {}]
  %s9 = inlined_call_operand.hbm [shape: bf16[512,1024], index: 9, kind: input, shape index: {}]
  %s10 = inlined_call_operand.vmem [shape: f32[1,1024], index: 10, kind: input, shape index: {}]
  %s11 = inlined_call_operand.hbm [shape: bf16[1024,256], index: 11, kind: input, shape index: {}]
  %s12 = inlined_call_operand.vmem [shape: f32[1,256], index: 12, kind: input, shape index: {}]
  %s13 = inlined_call_operand.hbm [shape: f32[16,256], index: 13, kind: output, shape index: {0}]
  %s14 = inlined_call_operand.hbm [shape: f32[16,128], index: 14, kind: output, shape index: {1}]
  %15 = xla_tuple %s13, %s14
  %s16 = sld [smem:[#allocation0]]
  $region102: #{tpu_custom_call.1} parent=0
    _
  %s18 = ssub.s32 1, %s16
  %s19 = scalar_select 0, %s18, %s16
  $region1: #{tpu_custom_call.1} parent=0
    #allocation2 [shape = 'u8[16384]{0}', space=vmem, size = 0x4000, scoped, tag = 'input window, operand 0, single buffered']
    #allocation3 [shape = 's32[1]{0}', space=sflag, size = 0x4, scoped, tag = 'scoped memory for tpu_custom_call.1']
    #allocation4 [shape = 's32[1]{0}', space=sflag, size = 0x4, scoped, tag = 'scoped memory for tpu_custom_call.1']
    #allocation5 [shape = 'u8[524288]{0}', space=vmem, size = 0x80000, scoped, tag = 'input window, operand 1, single buffered']
    #allocation6 [shape = 's32[1]{0}', space=sflag, size = 0x4, scoped, tag = 'scoped memory for tpu_custom_call.1']
    #allocation7 [shape = 'u8[4096]{0}', space=vmem, size = 0x1000, scoped, tag = 'input window, operand 2, single buffered']
    #allocation8 [shape = 'u8[1048576]{0}', space=vmem, size = 0x100000, scoped, tag = 'input window, operand 3, single buffered']
    #allocation9 [shape = 's32[1]{0}', space=sflag, size = 0x4, scoped, tag = 'scoped memory for tpu_custom_call.1']
    #allocation10 [shape = 'u8[131072]{0}', space=vmem, size = 0x20000, scoped, tag = 'input window, operand 5, single buffered']
    #allocation11 [shape = 'u8[131072]{0}', space=vmem, size = 0x20000, scoped, tag = 'input window, operand 7, single buffered']
    #allocation12 [shape = 's32[1]{0}', space=sflag, size = 0x4, scoped, tag = 'scoped memory for tpu_custom_call.1']
    #allocation13 [shape = 'u8[1048576]{0}', space=vmem, size = 0x100000, scoped, tag = 'input window, operand 9, single buffered']
    #allocation14 [shape = 'u8[524288]{0}', space=vmem, size = 0x80000, scoped, tag = 'input window, operand 11, single buffered']
    #allocation15 [shape = 's32[1]{0}', space=sflag, size = 0x4, scoped, tag = 'scoped memory for tpu_custom_call.1']
    #allocation16 [shape = 'u8[16384]{0}', space=vmem, size = 0x4000, scoped, tag = 'output window, operand 0, single buffered']
    #allocation17 [shape = 'u8[8192]{0}', space=vmem, size = 0x2000, scoped, tag = 'output window, operand 1, single buffered']
    #allocation18 [shape = 's32[1]{0}', space=sflag, size = 0x4, scoped, tag = 'scoped memory for tpu_custom_call.1']
    %20 = vsyncpa [#allocation3], 0
    %21 = vsyncpa [#allocation6], 0
    %22 = vsyncpa [#allocation9], 0
    %23 = vsyncpa [#allocation12], 0
    %24 = vsyncpa [#allocation15], 0
    %25 = vsyncpa [#allocation4], 0
    %26 = vsyncpa [#allocation18], 0
    // Predicated region
    $region2: #{tpu_custom_call.1} parent=1 // pred_check
      _
    $region3: #{tpu_custom_call.1} parent=1 // pred_check_branch
      %28 = sbr.rel (0) target = $region5
    $region4: #{tpu_custom_call.1} parent=1 // pred_region
      %s30 = ssub.s32 512, 512
      %31 = vsyncadd [#allocation3], %s30
      %s32 = sshll.u32 [#allocation2], 4
      %s33 = int_to_ptr.vmem [resolvable:$true] %s32
      %38 = dma.hbm_to_vmem [thread:$0]  %s0, 512, %s33, [#allocation3], 256, 256, 16
    $region5: #{tpu_custom_call.1} parent=1 // pred_fallthru
      _
    // Predicated region
    $region6: #{tpu_custom_call.1} parent=1 // pred_check
      _
    $region7: #{tpu_custom_call.1} parent=1 // pred_check_branch
      %40 = sbr.rel (0) target = $region9
    $region8: #{tpu_custom_call.1} parent=1 // pred_region
      %s42 = ssub.s32 16384, 16384
      %43 = vsyncadd [#allocation6], %s42
      %s44 = sshll.u32 [#allocation5], 4
      %s45 = int_to_ptr.vmem [resolvable:$true] %s44
      %50 = dma.hbm_to_vmem [thread:$0]  %s1, 16384, %s45, [#allocation6], 512, 512, 32
    $region9: #{tpu_custom_call.1} parent=1 // pred_fallthru
      _
    // Predicated region
    $region10: #{tpu_custom_call.1} parent=1 // pred_check
      _
    $region11: #{tpu_custom_call.1} parent=1 // pred_check_branch
      %52 = sbr.rel (0) target = $region13
    $region12: #{tpu_custom_call.1} parent=1 // pred_region
      %s54 = ssub.s32 128, 128
      %55 = vsyncadd [#allocation6], %s54
      %s57 = sshll.u32 [#allocation7], 4
      %s58 = int_to_ptr.vmem [resolvable:$true] %s57
      %60 = dma.hbm_to_vmem [thread:$0]  %s2, 128, %s58, [#allocation6]
    $region13: #{tpu_custom_call.1} parent=1 // pred_fallthru
      _
    // Predicated region
    $region14: #{tpu_custom_call.1} parent=1 // pred_check
      _
    $region15: #{tpu_custom_call.1} parent=1 // pred_check_branch
      %62 = sbr.rel (0) target = $region17
    $region16: #{tpu_custom_call.1} parent=1 // pred_region
      %s64 = ssub.s32 32768, 32768
      %65 = vsyncadd [#allocation9], %s64
      %s66 = sshll.u32 [#allocation8], 4
      %s67 = int_to_ptr.vmem [resolvable:$true] %s66
      %72 = dma.hbm_to_vmem [thread:$0]  %s3, 32768, %s67, [#allocation9], 256, 256, 16
    $region17: #{tpu_custom_call.1} parent=1 // pred_fallthru
      _
    // Predicated region
    $region18: #{tpu_custom_call.1} parent=1 // pred_check
      _
    $region19: #{tpu_custom_call.1} parent=1 // pred_check_branch
      %74 = sbr.rel (0) target = $region21
    $region20: #{tpu_custom_call.1} parent=1 // pred_region
      _
    $region21: #{tpu_custom_call.1} parent=1 // pred_fallthru
      _
    // Predicated region
    $region22: #{tpu_custom_call.1} parent=1 // pred_check
      _
    $region23: #{tpu_custom_call.1} parent=1 // pred_check_branch
      %76 = sbr.rel (0) target = $region25
    $region24: #{tpu_custom_call.1} parent=1 // pred_region
      %s78 = ssub.s32 4096, 4096
      %79 = vsyncadd [#allocation9], %s78
      %s80 = sshll.u32 [#allocation10], 4
      %s81 = int_to_ptr.vmem [resolvable:$true] %s80
      %86 = dma.hbm_to_vmem [thread:$0]  %s5, 4096, %s81, [#allocation9], 64, 64, 4
    $region25: #{tpu_custom_call.1} parent=1 // pred_fallthru
      _
    // Predicated region
    $region26: #{tpu_custom_call.1} parent=1 // pred_check
      _
    $region27: #{tpu_custom_call.1} parent=1 // pred_check_branch
      %88 = sbr.rel (0) target = $region29
    $region28: #{tpu_custom_call.1} parent=1 // pred_region
      _
    $region29: #{tpu_custom_call.1} parent=1 // pred_fallthru
      _
    // Predicated region
    $region30: #{tpu_custom_call.1} parent=1 // pred_check
      _
    $region31: #{tpu_custom_call.1} parent=1 // pred_check_branch
      %90 = sbr.rel (0) target = $region33
    $region32: #{tpu_custom_call.1} parent=1 // pred_region
      %s92 = ssub.s32 4096, 4096
      %93 = vsyncadd [#allocation12], %s92
      %s94 = sshll.u32 [#allocation11], 4
      %s95 = int_to_ptr.vmem [resolvable:$true] %s94
      %100 = dma.hbm_to_vmem [thread:$0]  %s7, 4096, %s95, [#allocation12], 256, 256, 16
    $region33: #{tpu_custom_call.1} parent=1 // pred_fallthru
      _
    // Predicated region
    $region34: #{tpu_custom_call.1} parent=1 // pred_check
      _
    $region35: #{tpu_custom_call.1} parent=1 // pred_check_branch
      %102 = sbr.rel (0) target = $region37
    $region36: #{tpu_custom_call.1} parent=1 // pred_region
      _
    $region37: #{tpu_custom_call.1} parent=1 // pred_fallthru
      _
    // Predicated region
    $region38: #{tpu_custom_call.1} parent=1 // pred_check
      _
    $region39: #{tpu_custom_call.1} parent=1 // pred_check_branch
      %104 = sbr.rel (0) target = $region41
    $region40: #{tpu_custom_call.1} parent=1 // pred_region
      %s106 = ssub.s32 32768, 32768
      %107 = vsyncadd [#allocation12], %s106
      %s108 = sshll.u32 [#allocation13], 4
      %s109 = int_to_ptr.vmem [resolvable:$true] %s108
      %114 = dma.hbm_to_vmem [thread:$0]  %s9, 32768, %s109, [#allocation12], 512, 512, 32
    $region41: #{tpu_custom_call.1} parent=1 // pred_fallthru
      _
    // Predicated region
    $region42: #{tpu_custom_call.1} parent=1 // pred_check
      _
    $region43: #{tpu_custom_call.1} parent=1 // pred_check_branch
      %116 = sbr.rel (0) target = $region45
    $region44: #{tpu_custom_call.1} parent=1 // pred_region
      _
    $region45: #{tpu_custom_call.1} parent=1 // pred_fallthru
      _
    // Predicated region
    $region46: #{tpu_custom_call.1} parent=1 // pred_check
      _
    $region47: #{tpu_custom_call.1} parent=1 // pred_check_branch
      %118 = sbr.rel (0) target = $region49
    $region48: #{tpu_custom_call.1} parent=1 // pred_region
      %s120 = ssub.s32 16384, 16384
      %121 = vsyncadd [#allocation15], %s120
      %s122 = sshll.u32 [#allocation14], 4
      %s123 = int_to_ptr.vmem [resolvable:$true] %s122
      %128 = dma.hbm_to_vmem [thread:$0]  %s11, 16384, %s123, [#allocation15], 128, 128, 8
    $region49: #{tpu_custom_call.1} parent=1 // pred_fallthru
      _
    // Predicated region
    $region50: #{tpu_custom_call.1} parent=1 // pred_check
      _
    $region51: #{tpu_custom_call.1} parent=1 // pred_check_branch
      %130 = sbr.rel (0) target = $region53
    $region52: #{tpu_custom_call.1} parent=1 // pred_region
      _
    $region53: #{tpu_custom_call.1} parent=1 // pred_fallthru
      _
    // Predicated region
    $region54: #{tpu_custom_call.1} parent=1 // pred_check
      _
    $region55: #{tpu_custom_call.1} parent=1 // pred_check_branch
      %132 = sbr.rel (0) target = $region57
    $region56: #{tpu_custom_call.1} parent=1 // pred_region
      %133 = dma.done [#allocation3], 512
    $region57: #{tpu_custom_call.1} parent=1 // pred_fallthru
      _
    // Predicated region
    $region58: #{tpu_custom_call.1} parent=1 // pred_check
      _
    $region59: #{tpu_custom_call.1} parent=1 // pred_check_branch
      %135 = sbr.rel (0) target = $region61
    $region60: #{tpu_custom_call.1} parent=1 // pred_region
      %136 = dma.done [#allocation6], 16384
    $region61: #{tpu_custom_call.1} parent=1 // pred_fallthru
      _
    // Predicated region
    $region62: #{tpu_custom_call.1} parent=1 // pred_check
      _
    $region63: #{tpu_custom_call.1} parent=1 // pred_check_branch
      %138 = sbr.rel (0) target = $region65
    $region64: #{tpu_custom_call.1} parent=1 // pred_region
      %139 = dma.done [#allocation6], 128
    $region65: #{tpu_custom_call.1} parent=1 // pred_fallthru
      _
    // Predicated region
    $region66: #{tpu_custom_call.1} parent=1 // pred_check
      _
    $region67: #{tpu_custom_call.1} parent=1 // pred_check_branch
      %141 = sbr.rel (0) target = $region69
    $region68: #{tpu_custom_call.1} parent=1 // pred_region
      %142 = dma.done [#allocation9], 32768
    $region69: #{tpu_custom_call.1} parent=1 // pred_fallthru
      _
    // Predicated region
    $region70: #{tpu_custom_call.1} parent=1 // pred_check
      _
    $region71: #{tpu_custom_call.1} parent=1 // pred_check_branch
      %144 = sbr.rel (0) target = $region73
    $region72: #{tpu_custom_call.1} parent=1 // pred_region
      %145 = dma.done [#allocation9], 4096
    $region73: #{tpu_custom_call.1} parent=1 // pred_fallthru
      _
    // Predicated region
    $region74: #{tpu_custom_call.1} parent=1 // pred_check
      _
    $region75: #{tpu_custom_call.1} parent=1 // pred_check_branch
      %147 = sbr.rel (0) target = $region77
    $region76: #{tpu_custom_call.1} parent=1 // pred_region
      %148 = dma.done [#allocation12], 4096
    $region77: #{tpu_custom_call.1} parent=1 // pred_fallthru
      _
    // Predicated region
    $region78: #{tpu_custom_call.1} parent=1 // pred_check
      _
    $region79: #{tpu_custom_call.1} parent=1 // pred_check_branch
      %150 = sbr.rel (0) target = $region81
    $region80: #{tpu_custom_call.1} parent=1 // pred_region
      %151 = dma.done [#allocation12], 32768
    $region81: #{tpu_custom_call.1} parent=1 // pred_fallthru
      _
    // Predicated region
    $region82: #{tpu_custom_call.1} parent=1 // pred_check
      _
    $region83: #{tpu_custom_call.1} parent=1 // pred_check_branch
      %153 = sbr.rel (0) target = $region85
    $region84: #{tpu_custom_call.1} parent=1 // pred_region
      %154 = dma.done [#allocation15], 16384
    $region85: #{tpu_custom_call.1} parent=1 // pred_fallthru
      _
    %v156 = vld [vmem:[#allocation2] sm:$0xff]
    %v157 = vld [vmem:[#allocation2 + $0x8] sm:$0xff]
    %v158 = vld [vmem:[#allocation2 + $0x10] sm:$0xff]
    %v159 = vld [vmem:[#allocation2 + $0x18] sm:$0xff]
    %v160 = vpack.c.bf16 %v158, %v156
    %v161 = vpack.c.bf16 %v159, %v157
    %v162 = vld [vmem:[#allocation5] sm:$0xff]
    %v163 = vld [vmem:[#allocation5 + $0x8] sm:$0xff]
    %v164 = vld [vmem:[#allocation5 + $0x10] sm:$0xff]
    %v165 = vld [vmem:[#allocation5 + $0x18] sm:$0xff]
    %v166 = vld [vmem:[#allocation5 + $0x20] sm:$0xff]
    %v167 = vld [vmem:[#allocation5 + $0x28] sm:$0xff]
    %v168 = vld [vmem:[#allocation5 + $0x30] sm:$0xff]
    %v169 = vld [vmem:[#allocation5 + $0x38] sm:$0xff]
    %v170 = vld [vmem:[#allocation5 + $0x40] sm:$0xff]
    %v171 = vld [vmem:[#allocation5 + $0x48] sm:$0xff]
    %v172 = vld [vmem:[#allocation5 + $0x50] sm:$0xff]
    %v173 = vld [vmem:[#allocation5 + $0x58] sm:$0xff]
    %v174 = vld [vmem:[#allocation5 + $0x60] sm:$0xff]
    %v175 = vld [vmem:[#allocation5 + $0x68] sm:$0xff]
    %v176 = vld [vmem:[#allocation5 + $0x70] sm:$0xff]
    %v177 = vld [vmem:[#allocation5 + $0x78] sm:$0xff]
    %v178 = vld [vmem:[#allocation5 + $0x80] sm:$0xff]
    %v179 = vld [vmem:[#allocation5 + $0x88] sm:$0xff]
    %v180 = vld [vmem:[#allocation5 + $0x90] sm:$0xff]
    %v181 = vld [vmem:[#allocation5 + $0x98] sm:$0xff]
    %v182 = vld [vmem:[#allocation5 + $0xa0] sm:$0xff]
    %v183 = vld [vmem:[#allocation5 + $0xa8] sm:$0xff]
    %v184 = vld [vmem:[#allocation5 + $0xb0] sm:$0xff]
    %v185 = vld [vmem:[#allocation5 + $0xb8] sm:$0xff]
    %v186 = vld [vmem:[#allocation5 + $0xc0] sm:$0xff]
    %v187 = vld [vmem:[#allocation5 + $0xc8] sm:$0xff]
    %v188 = vld [vmem:[#allocation5 + $0xd0] sm:$0xff]
    %v189 = vld [vmem:[#allocation5 + $0xd8] sm:$0xff]
    %v190 = vld [vmem:[#allocation5 + $0xe0] sm:$0xff]
    %v191 = vld [vmem:[#allocation5 + $0xe8] sm:$0xff]
    %v192 = vld [vmem:[#allocation5 + $0xf0] sm:$0xff]
    %v193 = vld [vmem:[#allocation5 + $0xf8] sm:$0xff]
    %v194 = vld [vmem:[#allocation5 + $0x100] sm:$0xff]
    %v195 = vld [vmem:[#allocation5 + $0x108] sm:$0xff]
    %v196 = vld [vmem:[#allocation5 + $0x110] sm:$0xff]
    %v197 = vld [vmem:[#allocation5 + $0x118] sm:$0xff]
    %v198 = vld [vmem:[#allocation5 + $0x120] sm:$0xff]
    %v199 = vld [vmem:[#allocation5 + $0x128] sm:$0xff]
    %v200 = vld [vmem:[#allocation5 + $0x130] sm:$0xff]
    %v201 = vld [vmem:[#allocation5 + $0x138] sm:$0xff]
    %v202 = vld [vmem:[#allocation5 + $0x140] sm:$0xff]
    %v203 = vld [vmem:[#allocation5 + $0x148] sm:$0xff]
    %v204 = vld [vmem:[#allocation5 + $0x150] sm:$0xff]
    %v205 = vld [vmem:[#allocation5 + $0x158] sm:$0xff]
    %v206 = vld [vmem:[#allocation5 + $0x160] sm:$0xff]
    %v207 = vld [vmem:[#allocation5 + $0x168] sm:$0xff]
    %v208 = vld [vmem:[#allocation5 + $0x170] sm:$0xff]
    %v209 = vld [vmem:[#allocation5 + $0x178] sm:$0xff]
    %v210 = vld [vmem:[#allocation5 + $0x180] sm:$0xff]
    %v211 = vld [vmem:[#allocation5 + $0x188] sm:$0xff]
    %v212 = vld [vmem:[#allocation5 + $0x190] sm:$0xff]
    %v213 = vld [vmem:[#allocation5 + $0x198] sm:$0xff]
    %v214 = vld [vmem:[#allocation5 + $0x1a0] sm:$0xff]
    %v215 = vld [vmem:[#allocation5 + $0x1a8] sm:$0xff]
    %v216 = vld [vmem:[#allocation5 + $0x1b0] sm:$0xff]
    %v217 = vld [vmem:[#allocation5 + $0x1b8] sm:$0xff]
    %v218 = vld [vmem:[#allocation5 + $0x1c0] sm:$0xff]
    %v219 = vld [vmem:[#allocation5 + $0x1c8] sm:$0xff]
    %v220 = vld [vmem:[#allocation5 + $0x1d0] sm:$0xff]
    %v221 = vld [vmem:[#allocation5 + $0x1d8] sm:$0xff]
    %v222 = vld [vmem:[#allocation5 + $0x1e0] sm:$0xff]
    %v223 = vld [vmem:[#allocation5 + $0x1e8] sm:$0xff]
    %v224 = vld [vmem:[#allocation5 + $0x1f0] sm:$0xff]
    %v225 = vld [vmem:[#allocation5 + $0x1f8] sm:$0xff]
    %v226 = vld [vmem:[#allocation5 + $0x200] sm:$0xff]
    %v227 = vld [vmem:[#allocation5 + $0x208] sm:$0xff]
    %v228 = vld [vmem:[#allocation5 + $0x210] sm:$0xff]
    %v229 = vld [vmem:[#allocation5 + $0x218] sm:$0xff]
    %v230 = vld [vmem:[#allocation5 + $0x220] sm:$0xff]
    %v231 = vld [vmem:[#allocation5 + $0x228] sm:$0xff]
    %v232 = vld [vmem:[#allocation5 + $0x230] sm:$0xff]
    %v233 = vld [vmem:[#allocation5 + $0x238] sm:$0xff]
    %v234 = vld [vmem:[#allocation5 + $0x240] sm:$0xff]
    %v235 = vld [vmem:[#allocation5 + $0x248] sm:$0xff]
    %v236 = vld [vmem:[#allocation5 + $0x250] sm:$0xff]
    %v237 = vld [vmem:[#allocation5 + $0x258] sm:$0xff]
    %v238 = vld [vmem:[#allocation5 + $0x260] sm:$0xff]
    %v239 = vld [vmem:[#allocation5 + $0x268] sm:$0xff]
    %v240 = vld [vmem:[#allocation5 + $0x270] sm:$0xff]
    %v241 = vld [vmem:[#allocation5 + $0x278] sm:$0xff]
    %v242 = vld [vmem:[#allocation5 + $0x280] sm:$0xff]
    %v243 = vld [vmem:[#allocation5 + $0x288] sm:$0xff]
    %v244 = vld [vmem:[#allocation5 + $0x290] sm:$0xff]
    %v245 = vld [vmem:[#allocation5 + $0x298] sm:$0xff]
    %v246 = vld [vmem:[#allocation5 + $0x2a0] sm:$0xff]
    %v247 = vld [vmem:[#allocation5 + $0x2a8] sm:$0xff]
    %v248 = vld [vmem:[#allocation5 + $0x2b0] sm:$0xff]
    %v249 = vld [vmem:[#allocation5 + $0x2b8] sm:$0xff]
    %v250 = vld [vmem:[#allocation5 + $0x2c0] sm:$0xff]
    %v251 = vld [vmem:[#allocation5 + $0x2c8] sm:$0xff]
    %v252 = vld [vmem:[#allocation5 + $0x2d0] sm:$0xff]
    %v253 = vld [vmem:[#allocation5 + $0x2d8] sm:$0xff]
    %v254 = vld [vmem:[#allocation5 + $0x2e0] sm:$0xff]
    %v255 = vld [vmem:[#allocation5 + $0x2e8] sm:$0xff]
    %v256 = vld [vmem:[#allocation5 + $0x2f0] sm:$0xff]
    %v257 = vld [vmem:[#allocation5 + $0x2f8] sm:$0xff]
    %v258 = vld [vmem:[#allocation5 + $0x300] sm:$0xff]
    %v259 = vld [vmem:[#allocation5 + $0x308] sm:$0xff]
    %v260 = vld [vmem:[#allocation5 + $0x310] sm:$0xff]
    %v261 = vld [vmem:[#allocation5 + $0x318] sm:$0xff]
    %v262 = vld [vmem:[#allocation5 + $0x320] sm:$0xff]
    %v263 = vld [vmem:[#allocation5 + $0x328] sm:$0xff]
    %v264 = vld [vmem:[#allocation5 + $0x330] sm:$0xff]
    %v265 = vld [vmem:[#allocation5 + $0x338] sm:$0xff]
    %v266 = vld [vmem:[#allocation5 + $0x340] sm:$0xff]
    %v267 = vld [vmem:[#allocation5 + $0x348] sm:$0xff]
    %v268 = vld [vmem:[#allocation5 + $0x350] sm:$0xff]
    %v269 = vld [vmem:[#allocation5 + $0x358] sm:$0xff]
    %v270 = vld [vmem:[#allocation5 + $0x360] sm:$0xff]
    %v271 = vld [vmem:[#allocation5 + $0x368] sm:$0xff]
    %v272 = vld [vmem:[#allocation5 + $0x370] sm:$0xff]
    %v273 = vld [vmem:[#allocation5 + $0x378] sm:$0xff]
    %v274 = vld [vmem:[#allocation5 + $0x380] sm:$0xff]
    %v275 = vld [vmem:[#allocation5 + $0x388] sm:$0xff]
    %v276 = vld [vmem:[#allocation5 + $0x390] sm:$0xff]
    %v277 = vld [vmem:[#allocation5 + $0x398] sm:$0xff]
    %v278 = vld [vmem:[#allocation5 + $0x3a0] sm:$0xff]
    %v279 = vld [vmem:[#allocation5 + $0x3a8] sm:$0xff]
    %v280 = vld [vmem:[#allocation5 + $0x3b0] sm:$0xff]
    %v281 = vld [vmem:[#allocation5 + $0x3b8] sm:$0xff]
    %v282 = vld [vmem:[#allocation5 + $0x3c0] sm:$0xff]
    %v283 = vld [vmem:[#allocation5 + $0x3c8] sm:$0xff]
    %v284 = vld [vmem:[#allocation5 + $0x3d0] sm:$0xff]
    %v285 = vld [vmem:[#allocation5 + $0x3d8] sm:$0xff]
    %v286 = vld [vmem:[#allocation5 + $0x3e0] sm:$0xff]
    %v287 = vld [vmem:[#allocation5 + $0x3e8] sm:$0xff]
    %v288 = vld [vmem:[#allocation5 + $0x3f0] sm:$0xff]
    %v289 = vld [vmem:[#allocation5 + $0x3f8] sm:$0xff]
    %v290 = vld [vmem:[#allocation7] sm:$0xff]
    %v292 = vlaneseq
    %v293 = vshrl.u32 %v292, 7
    %v294 = vsub.s32 0, %v293
    %v295 = vrot.slane %v290, %v294
    %v296 = vlaneseq
    %v297 = vshrl.u32 %v296, 7
    %v298 = vsub.s32 1, %v297
    %v299 = vrot.slane %v290, %v298
    %v300 = vlaneseq
    %v301 = vshrl.u32 %v300, 7
    %v302 = vsub.s32 2, %v301
    %v303 = vrot.slane %v290, %v302
    %v304 = vlaneseq
    %v305 = vshrl.u32 %v304, 7
    %v306 = vsub.s32 3, %v305
    %v307 = vrot.slane %v290, %v306
    %v308 = vlaneseq
    %v309 = vshrl.u32 %v308, 7
    %v310 = vsub.s32 4, %v309
    %v311 = vrot.slane %v290, %v310
    %v312 = vlaneseq
    %v313 = vshrl.u32 %v312, 7
    %v314 = vsub.s32 5, %v313
    %v315 = vrot.slane %v290, %v314
    %v316 = vlaneseq
    %v317 = vshrl.u32 %v316, 7
    %v318 = vsub.s32 6, %v317
    %v319 = vrot.slane %v290, %v318
    %v320 = vlaneseq
    %v321 = vshrl.u32 %v320, 7
    %v322 = vsub.s32 7, %v321
    %v323 = vrot.slane %v290, %v322
    %v460 = vunpack.c.l.b16 %v162
    %v461 = vunpack.c.h.b16 %v162
    %v462 = vunpack.c.l.b16 %v163
    %v463 = vunpack.c.h.b16 %v163
    %v464 = vunpack.c.l.b16 %v164
    %v465 = vunpack.c.h.b16 %v164
    %v466 = vunpack.c.l.b16 %v165
    %v467 = vunpack.c.h.b16 %v165
    %v468 = vunpack.c.l.b16 %v166
    %v469 = vunpack.c.h.b16 %v166
    %v470 = vunpack.c.l.b16 %v167
    %v471 = vunpack.c.h.b16 %v167
    %v472 = vunpack.c.l.b16 %v168
    %v473 = vunpack.c.h.b16 %v168
    %v474 = vunpack.c.l.b16 %v169
    %v475 = vunpack.c.h.b16 %v169
    %v476 = vunpack.c.l.b16 %v170
    %v477 = vunpack.c.h.b16 %v170
    %v478 = vunpack.c.l.b16 %v171
    %v479 = vunpack.c.h.b16 %v171
    %v480 = vunpack.c.l.b16 %v172
    %v481 = vunpack.c.h.b16 %v172
    %v482 = vunpack.c.l.b16 %v173
    %v483 = vunpack.c.h.b16 %v173
    %v484 = vunpack.c.l.b16 %v174
    %v485 = vunpack.c.h.b16 %v174
    %v486 = vunpack.c.l.b16 %v175
    %v487 = vunpack.c.h.b16 %v175
    %v488 = vunpack.c.l.b16 %v176
    %v489 = vunpack.c.h.b16 %v176
    %v490 = vunpack.c.l.b16 %v177
    %v491 = vunpack.c.h.b16 %v177
    %v492 = vunpack.c.l.b16 %v178
    %v493 = vunpack.c.h.b16 %v178
    %v494 = vunpack.c.l.b16 %v179
    %v495 = vunpack.c.h.b16 %v179
    %v496 = vunpack.c.l.b16 %v180
    %v497 = vunpack.c.h.b16 %v180
    %v498 = vunpack.c.l.b16 %v181
    %v499 = vunpack.c.h.b16 %v181
    %v500 = vunpack.c.l.b16 %v182
    %v501 = vunpack.c.h.b16 %v182
    %v502 = vunpack.c.l.b16 %v183
    %v503 = vunpack.c.h.b16 %v183
    %v504 = vunpack.c.l.b16 %v184
    %v505 = vunpack.c.h.b16 %v184
    %v506 = vunpack.c.l.b16 %v185
    %v507 = vunpack.c.h.b16 %v185
    %v508 = vunpack.c.l.b16 %v186
    %v509 = vunpack.c.h.b16 %v186
    %v510 = vunpack.c.l.b16 %v187
    %v511 = vunpack.c.h.b16 %v187
    %v512 = vunpack.c.l.b16 %v188
    %v513 = vunpack.c.h.b16 %v188
    %v514 = vunpack.c.l.b16 %v189
    %v515 = vunpack.c.h.b16 %v189
    %v516 = vunpack.c.l.b16 %v190
    %v517 = vunpack.c.h.b16 %v190
    %v518 = vunpack.c.l.b16 %v191
    %v519 = vunpack.c.h.b16 %v191
    %v520 = vunpack.c.l.b16 %v192
    %v521 = vunpack.c.h.b16 %v192
    %v522 = vunpack.c.l.b16 %v193
    %v523 = vunpack.c.h.b16 %v193
    %v524 = vunpack.c.l.b16 %v194
    %v525 = vunpack.c.h.b16 %v194
    %v526 = vunpack.c.l.b16 %v195
    %v527 = vunpack.c.h.b16 %v195
    %v528 = vunpack.c.l.b16 %v196
    %v529 = vunpack.c.h.b16 %v196
    %v530 = vunpack.c.l.b16 %v197
    %v531 = vunpack.c.h.b16 %v197
    %v532 = vunpack.c.l.b16 %v198
    %v533 = vunpack.c.h.b16 %v198
    %v534 = vunpack.c.l.b16 %v199
    %v535 = vunpack.c.h.b16 %v199
    %v536 = vunpack.c.l.b16 %v200
    %v537 = vunpack.c.h.b16 %v200
    %v538 = vunpack.c.l.b16 %v201
    %v539 = vunpack.c.h.b16 %v201
    %v540 = vunpack.c.l.b16 %v202
    %v541 = vunpack.c.h.b16 %v202
    %v542 = vunpack.c.l.b16 %v203
    %v543 = vunpack.c.h.b16 %v203
    %v544 = vunpack.c.l.b16 %v204
    %v545 = vunpack.c.h.b16 %v204
    %v546 = vunpack.c.l.b16 %v205
    %v547 = vunpack.c.h.b16 %v205
    %v548 = vunpack.c.l.b16 %v206
    %v549 = vunpack.c.h.b16 %v206
    %v550 = vunpack.c.l.b16 %v207
    %v551 = vunpack.c.h.b16 %v207
    %v552 = vunpack.c.l.b16 %v208
    %v553 = vunpack.c.h.b16 %v208
    %v554 = vunpack.c.l.b16 %v209
    %v555 = vunpack.c.h.b16 %v209
    %v556 = vunpack.c.l.b16 %v210
    %v557 = vunpack.c.h.b16 %v210
    %v558 = vunpack.c.l.b16 %v211
    %v559 = vunpack.c.h.b16 %v211
    %v560 = vunpack.c.l.b16 %v212
    %v561 = vunpack.c.h.b16 %v212
    %v562 = vunpack.c.l.b16 %v213
    %v563 = vunpack.c.h.b16 %v213
    %v564 = vunpack.c.l.b16 %v214
    %v565 = vunpack.c.h.b16 %v214
    %v566 = vunpack.c.l.b16 %v215
    %v567 = vunpack.c.h.b16 %v215
    %v568 = vunpack.c.l.b16 %v216
    %v569 = vunpack.c.h.b16 %v216
    %v570 = vunpack.c.l.b16 %v217
    %v571 = vunpack.c.h.b16 %v217
    %v572 = vunpack.c.l.b16 %v218
    %v573 = vunpack.c.h.b16 %v218
    %v574 = vunpack.c.l.b16 %v219
    %v575 = vunpack.c.h.b16 %v219
    %v576 = vunpack.c.l.b16 %v220
    %v577 = vunpack.c.h.b16 %v220
    %v578 = vunpack.c.l.b16 %v221
    %v579 = vunpack.c.h.b16 %v221
    %v580 = vunpack.c.l.b16 %v222
    %v581 = vunpack.c.h.b16 %v222
    %v582 = vunpack.c.l.b16 %v223
    %v583 = vunpack.c.h.b16 %v223
    %v584 = vunpack.c.l.b16 %v224
    %v585 = vunpack.c.h.b16 %v224
    %v586 = vunpack.c.l.b16 %v225
    %v587 = vunpack.c.h.b16 %v225
    %v588 = vunpack.c.l.b16 %v226
    %v589 = vunpack.c.h.b16 %v226
    %v590 = vunpack.c.l.b16 %v227
    %v591 = vunpack.c.h.b16 %v227
    %v592 = vunpack.c.l.b16 %v228
    %v593 = vunpack.c.h.b16 %v228
    %v594 = vunpack.c.l.b16 %v229
    %v595 = vunpack.c.h.b16 %v229
    %v596 = vunpack.c.l.b16 %v230
    %v597 = vunpack.c.h.b16 %v230
    %v598 = vunpack.c.l.b16 %v231
    %v599 = vunpack.c.h.b16 %v231
    %v600 = vunpack.c.l.b16 %v232
    %v601 = vunpack.c.h.b16 %v232
    %v602 = vunpack.c.l.b16 %v233
    %v603 = vunpack.c.h.b16 %v233
    %v604 = vunpack.c.l.b16 %v234
    %v605 = vunpack.c.h.b16 %v234
    %v606 = vunpack.c.l.b16 %v235
    %v607 = vunpack.c.h.b16 %v235
    %v608 = vunpack.c.l.b16 %v236
    %v609 = vunpack.c.h.b16 %v236
    %v610 = vunpack.c.l.b16 %v237
    %v611 = vunpack.c.h.b16 %v237
    %v612 = vunpack.c.l.b16 %v238
    %v613 = vunpack.c.h.b16 %v238
    %v614 = vunpack.c.l.b16 %v239
    %v615 = vunpack.c.h.b16 %v239
    %v616 = vunpack.c.l.b16 %v240
    %v617 = vunpack.c.h.b16 %v240
    %v618 = vunpack.c.l.b16 %v241
    %v619 = vunpack.c.h.b16 %v241
    %v620 = vunpack.c.l.b16 %v242
    %v621 = vunpack.c.h.b16 %v242
    %v622 = vunpack.c.l.b16 %v243
    %v623 = vunpack.c.h.b16 %v243
    %v624 = vunpack.c.l.b16 %v244
    %v625 = vunpack.c.h.b16 %v244
    %v626 = vunpack.c.l.b16 %v245
    %v627 = vunpack.c.h.b16 %v245
    %v628 = vunpack.c.l.b16 %v246
    %v629 = vunpack.c.h.b16 %v246
    %v630 = vunpack.c.l.b16 %v247
    %v631 = vunpack.c.h.b16 %v247
    %v632 = vunpack.c.l.b16 %v248
    %v633 = vunpack.c.h.b16 %v248
    %v634 = vunpack.c.l.b16 %v249
    %v635 = vunpack.c.h.b16 %v249
    %v636 = vunpack.c.l.b16 %v250
    %v637 = vunpack.c.h.b16 %v250
    %v638 = vunpack.c.l.b16 %v251
    %v639 = vunpack.c.h.b16 %v251
    %v640 = vunpack.c.l.b16 %v252
    %v641 = vunpack.c.h.b16 %v252
    %v642 = vunpack.c.l.b16 %v253
    %v643 = vunpack.c.h.b16 %v253
    %v644 = vunpack.c.l.b16 %v254
    %v645 = vunpack.c.h.b16 %v254
    %v646 = vunpack.c.l.b16 %v255
    %v647 = vunpack.c.h.b16 %v255
    %v648 = vunpack.c.l.b16 %v256
    %v649 = vunpack.c.h.b16 %v256
    %v650 = vunpack.c.l.b16 %v257
    %v651 = vunpack.c.h.b16 %v257
    %v652 = vunpack.c.l.b16 %v258
    %v653 = vunpack.c.h.b16 %v258
    %v654 = vunpack.c.l.b16 %v259
    %v655 = vunpack.c.h.b16 %v259
    %v656 = vunpack.c.l.b16 %v260
    %v657 = vunpack.c.h.b16 %v260
    %v658 = vunpack.c.l.b16 %v261
    %v659 = vunpack.c.h.b16 %v261
    %v660 = vunpack.c.l.b16 %v262
    %v661 = vunpack.c.h.b16 %v262
    %v662 = vunpack.c.l.b16 %v263
    %v663 = vunpack.c.h.b16 %v263
    %v664 = vunpack.c.l.b16 %v264
    %v665 = vunpack.c.h.b16 %v264
    %v666 = vunpack.c.l.b16 %v265
    %v667 = vunpack.c.h.b16 %v265
    %v668 = vunpack.c.l.b16 %v266
    %v669 = vunpack.c.h.b16 %v266
    %v670 = vunpack.c.l.b16 %v267
    %v671 = vunpack.c.h.b16 %v267
    %v672 = vunpack.c.l.b16 %v268
    %v673 = vunpack.c.h.b16 %v268
    %v674 = vunpack.c.l.b16 %v269
    %v675 = vunpack.c.h.b16 %v269
    %v676 = vunpack.c.l.b16 %v270
    %v677 = vunpack.c.h.b16 %v270
    %v678 = vunpack.c.l.b16 %v271
    %v679 = vunpack.c.h.b16 %v271
    %v680 = vunpack.c.l.b16 %v272
    %v681 = vunpack.c.h.b16 %v272
    %v682 = vunpack.c.l.b16 %v273
    %v683 = vunpack.c.h.b16 %v273
    %v684 = vunpack.c.l.b16 %v274
    %v685 = vunpack.c.h.b16 %v274
    %v686 = vunpack.c.l.b16 %v275
    %v687 = vunpack.c.h.b16 %v275
    %v688 = vunpack.c.l.b16 %v276
    %v689 = vunpack.c.h.b16 %v276
    %v690 = vunpack.c.l.b16 %v277
    %v691 = vunpack.c.h.b16 %v277
    %v692 = vunpack.c.l.b16 %v278
    %v693 = vunpack.c.h.b16 %v278
    %v694 = vunpack.c.l.b16 %v279
    %v695 = vunpack.c.h.b16 %v279
    %v696 = vunpack.c.l.b16 %v280
    %v697 = vunpack.c.h.b16 %v280
    %v698 = vunpack.c.l.b16 %v281
    %v699 = vunpack.c.h.b16 %v281
    %v700 = vunpack.c.l.b16 %v282
    %v701 = vunpack.c.h.b16 %v282
    %v702 = vunpack.c.l.b16 %v283
    %v703 = vunpack.c.h.b16 %v283
    %v704 = vunpack.c.l.b16 %v284
    %v705 = vunpack.c.h.b16 %v284
    %v706 = vunpack.c.l.b16 %v285
    %v707 = vunpack.c.h.b16 %v285
    %v708 = vunpack.c.l.b16 %v286
    %v709 = vunpack.c.h.b16 %v286
    %v710 = vunpack.c.l.b16 %v287
    %v711 = vunpack.c.h.b16 %v287
    %v712 = vunpack.c.l.b16 %v288
    %v713 = vunpack.c.h.b16 %v288
    %v714 = vunpack.c.l.b16 %v289
    %v715 = vunpack.c.h.b16 %v289
    %v716 = vpack.c.b16 %v468, %v460
    %v717 = vpack.c.b16 %v469, %v461
    %v718 = vpack.c.b16 %v470, %v462
    %v719 = vpack.c.b16 %v471, %v463
    %v720 = vpack.c.b16 %v472, %v464
    %v721 = vpack.c.b16 %v473, %v465
    %v722 = vpack.c.b16 %v474, %v466
    %v723 = vpack.c.b16 %v475, %v467
    %v724 = vpack.c.b16 %v484, %v476
    %v725 = vpack.c.b16 %v485, %v477
    %v726 = vpack.c.b16 %v486, %v478
    %v727 = vpack.c.b16 %v487, %v479
    %v728 = vpack.c.b16 %v488, %v480
    %v729 = vpack.c.b16 %v489, %v481
    %v730 = vpack.c.b16 %v490, %v482
    %v731 = vpack.c.b16 %v491, %v483
    %v732 = vpack.c.b16 %v500, %v492
    %v733 = vpack.c.b16 %v501, %v493
    %v734 = vpack.c.b16 %v502, %v494
    %v735 = vpack.c.b16 %v503, %v495
    %v736 = vpack.c.b16 %v504, %v496
    %v737 = vpack.c.b16 %v505, %v497
    %v738 = vpack.c.b16 %v506, %v498
    %v739 = vpack.c.b16 %v507, %v499
    %v740 = vpack.c.b16 %v516, %v508
    %v741 = vpack.c.b16 %v517, %v509
    %v742 = vpack.c.b16 %v518, %v510
    %v743 = vpack.c.b16 %v519, %v511
    %v744 = vpack.c.b16 %v520, %v512
    %v745 = vpack.c.b16 %v521, %v513
    %v746 = vpack.c.b16 %v522, %v514
    %v747 = vpack.c.b16 %v523, %v515
    %v748 = vpack.c.b16 %v532, %v524
    %v749 = vpack.c.b16 %v533, %v525
    %v750 = vpack.c.b16 %v534, %v526
    %v751 = vpack.c.b16 %v535, %v527
    %v752 = vpack.c.b16 %v536, %v528
    %v753 = vpack.c.b16 %v537, %v529
    %v754 = vpack.c.b16 %v538, %v530
    %v755 = vpack.c.b16 %v539, %v531
    %v756 = vpack.c.b16 %v548, %v540
    %v757 = vpack.c.b16 %v549, %v541
    %v758 = vpack.c.b16 %v550, %v542
    %v759 = vpack.c.b16 %v551, %v543
    %v760 = vpack.c.b16 %v552, %v544
    %v761 = vpack.c.b16 %v553, %v545
    %v762 = vpack.c.b16 %v554, %v546
    %v763 = vpack.c.b16 %v555, %v547
    %v764 = vpack.c.b16 %v564, %v556
    %v765 = vpack.c.b16 %v565, %v557
    %v766 = vpack.c.b16 %v566, %v558
    %v767 = vpack.c.b16 %v567, %v559
    %v768 = vpack.c.b16 %v568, %v560
    %v769 = vpack.c.b16 %v569, %v561
    %v770 = vpack.c.b16 %v570, %v562
    %v771 = vpack.c.b16 %v571, %v563
    %v772 = vpack.c.b16 %v580, %v572
    %v773 = vpack.c.b16 %v581, %v573
    %v774 = vpack.c.b16 %v582, %v574
    %v775 = vpack.c.b16 %v583, %v575
    %v776 = vpack.c.b16 %v584, %v576
    %v777 = vpack.c.b16 %v585, %v577
    %v778 = vpack.c.b16 %v586, %v578
    %v779 = vpack.c.b16 %v587, %v579
    %v780 = vpack.c.b16 %v596, %v588
    %v781 = vpack.c.b16 %v597, %v589
    %v782 = vpack.c.b16 %v598, %v590
    %v783 = vpack.c.b16 %v599, %v591
    %v784 = vpack.c.b16 %v600, %v592
    %v785 = vpack.c.b16 %v601, %v593
    %v786 = vpack.c.b16 %v602, %v594
    %v787 = vpack.c.b16 %v603, %v595
    %v788 = vpack.c.b16 %v612, %v604
    %v789 = vpack.c.b16 %v613, %v605
    %v790 = vpack.c.b16 %v614, %v606
    %v791 = vpack.c.b16 %v615, %v607
    %v792 = vpack.c.b16 %v616, %v608
    %v793 = vpack.c.b16 %v617, %v609
    %v794 = vpack.c.b16 %v618, %v610
    %v795 = vpack.c.b16 %v619, %v611
    %v796 = vpack.c.b16 %v628, %v620
    %v797 = vpack.c.b16 %v629, %v621
    %v798 = vpack.c.b16 %v630, %v622
    %v799 = vpack.c.b16 %v631, %v623
    %v800 = vpack.c.b16 %v632, %v624
    %v801 = vpack.c.b16 %v633, %v625
    %v802 = vpack.c.b16 %v634, %v626
    %v803 = vpack.c.b16 %v635, %v627
    %v804 = vpack.c.b16 %v644, %v636
    %v805 = vpack.c.b16 %v645, %v637
    %v806 = vpack.c.b16 %v646, %v638
    %v807 = vpack.c.b16 %v647, %v639
    %v808 = vpack.c.b16 %v648, %v640
    %v809 = vpack.c.b16 %v649, %v641
    %v810 = vpack.c.b16 %v650, %v642
    %v811 = vpack.c.b16 %v651, %v643
    %v812 = vpack.c.b16 %v660, %v652
    %v813 = vpack.c.b16 %v661, %v653
    %v814 = vpack.c.b16 %v662, %v654
    %v815 = vpack.c.b16 %v663, %v655
    %v816 = vpack.c.b16 %v664, %v656
    %v817 = vpack.c.b16 %v665, %v657
    %v818 = vpack.c.b16 %v666, %v658
    %v819 = vpack.c.b16 %v667, %v659
    %v820 = vpack.c.b16 %v676, %v668
    %v821 = vpack.c.b16 %v677, %v669
    %v822 = vpack.c.b16 %v678, %v670
    %v823 = vpack.c.b16 %v679, %v671
    %v824 = vpack.c.b16 %v680, %v672
    %v825 = vpack.c.b16 %v681, %v673
    %v826 = vpack.c.b16 %v682, %v674
    %v827 = vpack.c.b16 %v683, %v675
    %v828 = vpack.c.b16 %v692, %v684
    %v829 = vpack.c.b16 %v693, %v685
    %v830 = vpack.c.b16 %v694, %v686
    %v831 = vpack.c.b16 %v695, %v687
    %v832 = vpack.c.b16 %v696, %v688
    %v833 = vpack.c.b16 %v697, %v689
    %v834 = vpack.c.b16 %v698, %v690
    %v835 = vpack.c.b16 %v699, %v691
    %v836 = vpack.c.b16 %v708, %v700
    %v837 = vpack.c.b16 %v709, %v701
    %v838 = vpack.c.b16 %v710, %v702
    %v839 = vpack.c.b16 %v711, %v703
    %v840 = vpack.c.b16 %v712, %v704
    %v841 = vpack.c.b16 %v713, %v705
    %v842 = vpack.c.b16 %v714, %v706
    %v843 = vpack.c.b16 %v715, %v707
    %972 = vmatprep.subr.bf16.mxu0 %v717
    %973 = vmatpush1.bf16.msra.mxu0 %v716
    %974 = vmatprep.subr.bf16.mxu0 %v725
    %975 = vmatpush1.bf16.msra.mxu0 %v724
    %976 = vmatprep.subr.bf16.mxu0 %v733
    %977 = vmatpush1.bf16.msra.mxu0 %v732
    %978 = vmatprep.subr.bf16.mxu0 %v741
    %979 = vmatpush1.bf16.msra.mxu0 %v740
    %980 = vmatprep.subr.bf16.mxu0 %v749
    %981 = vmatpush1.bf16.msra.mxu0 %v748
    %982 = vmatprep.subr.bf16.mxu0 %v757
    %983 = vmatpush1.bf16.msra.mxu0 %v756
    %984 = vmatprep.subr.bf16.mxu0 %v765
    %985 = vmatpush1.bf16.msra.mxu0 %v764
    %986 = vmatprep.subr.bf16.mxu0 %v773
    %987 = vmatpush1.bf16.msra.mxu0 %v772
    %988 = vmatprep.subr.bf16.mxu0 %v781
    %989 = vmatpush1.bf16.msra.mxu0 %v780
    %990 = vmatprep.subr.bf16.mxu0 %v789
    %991 = vmatpush1.bf16.msra.mxu0 %v788
    %992 = vmatprep.subr.bf16.mxu0 %v797
    %993 = vmatpush1.bf16.msra.mxu0 %v796
    %994 = vmatprep.subr.bf16.mxu0 %v805
    %995 = vmatpush1.bf16.msra.mxu0 %v804
    %996 = vmatprep.subr.bf16.mxu0 %v813
    %997 = vmatpush1.bf16.msra.mxu0 %v812
    %998 = vmatprep.subr.bf16.mxu0 %v821
    %999 = vmatpush1.bf16.msra.mxu0 %v820
    %1000 = vmatprep.subr.bf16.mxu0 %v829
    %1001 = vmatpush1.bf16.msra.mxu0 %v828
    %1002 = vmatprep.subr.bf16.mxu0 %v837
    %1003 = vmatpush1.bf16.msra.mxu0 %v836
    %1004 = vmatprep.mubr.bf16.mxu0 %v161
    %1005 = vmatmul.mubr.bf16.gmra.mrb[0].mxu0 %v160
    %v1006 = vpop.f32.mrb[0].mxu0
    %v1007 = vadd.f32 %v295, %v1006
    %v1008 = vpop.f32.mrb[0].mxu0
    %v1009 = vadd.f32 %v299, %v1008
    %v1010 = vpop.f32.mrb[0].mxu0
    %v1011 = vadd.f32 %v295, %v1010
    %v1012 = vpop.f32.mrb[0].mxu0
    %v1013 = vadd.f32 %v299, %v1012
    %1014 = vdwg.mxu0
    %1015 = vmatprep.subr.bf16.mxu0 %v719
    %1016 = vmatpush1.bf16.msra.mxu0 %v718
    %1017 = vmatprep.subr.bf16.mxu0 %v727
    %1018 = vmatpush1.bf16.msra.mxu0 %v726
    %1019 = vmatprep.subr.bf16.mxu0 %v735
    %1020 = vmatpush1.bf16.msra.mxu0 %v734
    %1021 = vmatprep.subr.bf16.mxu0 %v743
    %1022 = vmatpush1.bf16.msra.mxu0 %v742
    %1023 = vmatprep.subr.bf16.mxu0 %v751
    %1024 = vmatpush1.bf16.msra.mxu0 %v750
    %1025 = vmatprep.subr.bf16.mxu0 %v759
    %1026 = vmatpush1.bf16.msra.mxu0 %v758
    %1027 = vmatprep.subr.bf16.mxu0 %v767
    %1028 = vmatpush1.bf16.msra.mxu0 %v766
    %1029 = vmatprep.subr.bf16.mxu0 %v775
    %1030 = vmatpush1.bf16.msra.mxu0 %v774
    %1031 = vmatprep.subr.bf16.mxu0 %v783
    %1032 = vmatpush1.bf16.msra.mxu0 %v782
    %1033 = vmatprep.subr.bf16.mxu0 %v791
    %1034 = vmatpush1.bf16.msra.mxu0 %v790
    %1035 = vmatprep.subr.bf16.mxu0 %v799
    %1036 = vmatpush1.bf16.msra.mxu0 %v798
    %1037 = vmatprep.subr.bf16.mxu0 %v807
    %1038 = vmatpush1.bf16.msra.mxu0 %v806
    %1039 = vmatprep.subr.bf16.mxu0 %v815
    %1040 = vmatpush1.bf16.msra.mxu0 %v814
    %1041 = vmatprep.subr.bf16.mxu0 %v823
    %1042 = vmatpush1.bf16.msra.mxu0 %v822
    %1043 = vmatprep.subr.bf16.mxu0 %v831
    %1044 = vmatpush1.bf16.msra.mxu0 %v830
    %1045 = vmatprep.subr.bf16.mxu0 %v839
    %1046 = vmatpush1.bf16.msra.mxu0 %v838
    %1047 = vmatprep.mubr.bf16.mxu0 %v161
    %1048 = vmatmul.mubr.bf16.gmra.mrb[0].mxu0 %v160
    %v1049 = vpop.f32.mrb[0].mxu0
    %v1050 = vadd.f32 %v303, %v1049
    %v1051 = vpop.f32.mrb[0].mxu0
    %v1052 = vadd.f32 %v307, %v1051
    %v1053 = vpop.f32.mrb[0].mxu0
    %v1054 = vadd.f32 %v303, %v1053
    %v1055 = vpop.f32.mrb[0].mxu0
    %v1056 = vadd.f32 %v307, %v1055
    %1057 = vdwg.mxu0
    %1058 = vmatprep.subr.bf16.mxu0 %v721
    %1059 = vmatpush1.bf16.msra.mxu0 %v720
    %1060 = vmatprep.subr.bf16.mxu0 %v729
    %1061 = vmatpush1.bf16.msra.mxu0 %v728
    %1062 = vmatprep.subr.bf16.mxu0 %v737
    %1063 = vmatpush1.bf16.msra.mxu0 %v736
    %1064 = vmatprep.subr.bf16.mxu0 %v745
    %1065 = vmatpush1.bf16.msra.mxu0 %v744
    %1066 = vmatprep.subr.bf16.mxu0 %v753
    %1067 = vmatpush1.bf16.msra.mxu0 %v752
    %1068 = vmatprep.subr.bf16.mxu0 %v761
    %1069 = vmatpush1.bf16.msra.mxu0 %v760
    %1070 = vmatprep.subr.bf16.mxu0 %v769
    %1071 = vmatpush1.bf16.msra.mxu0 %v768
    %1072 = vmatprep.subr.bf16.mxu0 %v777
    %1073 = vmatpush1.bf16.msra.mxu0 %v776
    %1074 = vmatprep.subr.bf16.mxu0 %v785
    %1075 = vmatpush1.bf16.msra.mxu0 %v784
    %1076 = vmatprep.subr.bf16.mxu0 %v793
    %1077 = vmatpush1.bf16.msra.mxu0 %v792
    %1078 = vmatprep.subr.bf16.mxu0 %v801
    %1079 = vmatpush1.bf16.msra.mxu0 %v800
    %1080 = vmatprep.subr.bf16.mxu0 %v809
    %1081 = vmatpush1.bf16.msra.mxu0 %v808
    %1082 = vmatprep.subr.bf16.mxu0 %v817
    %1083 = vmatpush1.bf16.msra.mxu0 %v816
    %1084 = vmatprep.subr.bf16.mxu0 %v825
    %1085 = vmatpush1.bf16.msra.mxu0 %v824
    %1086 = vmatprep.subr.bf16.mxu0 %v833
    %1087 = vmatpush1.bf16.msra.mxu0 %v832
    %1088 = vmatprep.subr.bf16.mxu0 %v841
    %1089 = vmatpush1.bf16.msra.mxu0 %v840
    %1090 = vmatprep.mubr.bf16.mxu0 %v161
    %1091 = vmatmul.mubr.bf16.gmra.mrb[0].mxu0 %v160
    %v1092 = vpop.f32.mrb[0].mxu0
    %v1093 = vadd.f32 %v311, %v1092
    %v1094 = vpop.f32.mrb[0].mxu0
    %v1095 = vadd.f32 %v315, %v1094
    %v1096 = vpop.f32.mrb[0].mxu0
    %v1097 = vadd.f32 %v311, %v1096
    %v1098 = vpop.f32.mrb[0].mxu0
    %v1099 = vadd.f32 %v315, %v1098
    %1100 = vdwg.mxu0
    %1101 = vmatprep.subr.bf16.mxu0 %v723
    %1102 = vmatpush1.bf16.msra.mxu0 %v722
    %1103 = vmatprep.subr.bf16.mxu0 %v731
    %1104 = vmatpush1.bf16.msra.mxu0 %v730
    %1105 = vmatprep.subr.bf16.mxu0 %v739
    %1106 = vmatpush1.bf16.msra.mxu0 %v738
    %1107 = vmatprep.subr.bf16.mxu0 %v747
    %1108 = vmatpush1.bf16.msra.mxu0 %v746
    %1109 = vmatprep.subr.bf16.mxu0 %v755
    %1110 = vmatpush1.bf16.msra.mxu0 %v754
    %1111 = vmatprep.subr.bf16.mxu0 %v763
    %1112 = vmatpush1.bf16.msra.mxu0 %v762
    %1113 = vmatprep.subr.bf16.mxu0 %v771
    %1114 = vmatpush1.bf16.msra.mxu0 %v770
    %1115 = vmatprep.subr.bf16.mxu0 %v779
    %1116 = vmatpush1.bf16.msra.mxu0 %v778
    %1117 = vmatprep.subr.bf16.mxu0 %v787
    %1118 = vmatpush1.bf16.msra.mxu0 %v786
    %1119 = vmatprep.subr.bf16.mxu0 %v795
    %1120 = vmatpush1.bf16.msra.mxu0 %v794
    %1121 = vmatprep.subr.bf16.mxu0 %v803
    %1122 = vmatpush1.bf16.msra.mxu0 %v802
    %1123 = vmatprep.subr.bf16.mxu0 %v811
    %1124 = vmatpush1.bf16.msra.mxu0 %v810
    %1125 = vmatprep.subr.bf16.mxu0 %v819
    %1126 = vmatpush1.bf16.msra.mxu0 %v818
    %1127 = vmatprep.subr.bf16.mxu0 %v827
    %1128 = vmatpush1.bf16.msra.mxu0 %v826
    %1129 = vmatprep.subr.bf16.mxu0 %v835
    %1130 = vmatpush1.bf16.msra.mxu0 %v834
    %1131 = vmatprep.subr.bf16.mxu0 %v843
    %1132 = vmatpush1.bf16.msra.mxu0 %v842
    %1133 = vmatprep.mubr.bf16.mxu0 %v161
    %1134 = vmatmul.mubr.bf16.gmra.mrb[0].mxu0 %v160
    %v1135 = vpop.f32.mrb[0].mxu0
    %v1136 = vadd.f32 %v319, %v1135
    %v1137 = vpop.f32.mrb[0].mxu0
    %v1138 = vadd.f32 %v323, %v1137
    %v1139 = vpop.f32.mrb[0].mxu0
    %v1140 = vadd.f32 %v319, %v1139
    %v1141 = vpop.f32.mrb[0].mxu0
    %v1142 = vadd.f32 %v323, %v1141
    %1143 = vdwg.mxu0
    %v1144 = vmax.f32 %v1007, 0.0
    %v1145 = vmax.f32 %v1009, 0.0
    %v1146 = vmax.f32 %v1050, 0.0
    %v1147 = vmax.f32 %v1052, 0.0
    %v1148 = vmax.f32 %v1093, 0.0
    %v1149 = vmax.f32 %v1095, 0.0
    %v1150 = vmax.f32 %v1136, 0.0
    %v1151 = vmax.f32 %v1138, 0.0
    %v1152 = vmax.f32 %v1011, 0.0
    %v1153 = vmax.f32 %v1013, 0.0
    %v1154 = vmax.f32 %v1054, 0.0
    %v1155 = vmax.f32 %v1056, 0.0
    %v1156 = vmax.f32 %v1097, 0.0
    %v1157 = vmax.f32 %v1099, 0.0
    %v1158 = vmax.f32 %v1140, 0.0
    %v1159 = vmax.f32 %v1142, 0.0
    %v1160 = vpack.c.bf16 %v1152, %v1144
    %v1161 = vpack.c.bf16 %v1153, %v1145
    %v1162 = vpack.c.bf16 %v1154, %v1146
    %v1163 = vpack.c.bf16 %v1155, %v1147
    %v1164 = vpack.c.bf16 %v1156, %v1148
    %v1165 = vpack.c.bf16 %v1157, %v1149
    %v1166 = vpack.c.bf16 %v1158, %v1150
    %v1167 = vpack.c.bf16 %v1159, %v1151
    %v1168 = vld [vmem:[#allocation8] sm:$0xff]
    %v1169 = vld [vmem:[#allocation8 + $0x8] sm:$0xff]
    %v1170 = vld [vmem:[#allocation8 + $0x10] sm:$0xff]
    %v1171 = vld [vmem:[#allocation8 + $0x18] sm:$0xff]
    %v1172 = vld [vmem:[#allocation8 + $0x20] sm:$0xff]
    %v1173 = vld [vmem:[#allocation8 + $0x28] sm:$0xff]
    %v1174 = vld [vmem:[#allocation8 + $0x30] sm:$0xff]
    %v1175 = vld [vmem:[#allocation8 + $0x38] sm:$0xff]
    %v1176 = vld [vmem:[#allocation8 + $0x40] sm:$0xff]
    %v1177 = vld [vmem:[#allocation8 + $0x48] sm:$0xff]
    %v1178 = vld [vmem:[#allocation8 + $0x50] sm:$0xff]
    %v1179 = vld [vmem:[#allocation8 + $0x58] sm:$0xff]
    %v1180 = vld [vmem:[#allocation8 + $0x60] sm:$0xff]
    %v1181 = vld [vmem:[#allocation8 + $0x68] sm:$0xff]
    %v1182 = vld [vmem:[#allocation8 + $0x70] sm:$0xff]
    %v1183 = vld [vmem:[#allocation8 + $0x78] sm:$0xff]
    %v1184 = vld [vmem:[#allocation8 + $0x80] sm:$0xff]
    %v1185 = vld [vmem:[#allocation8 + $0x88] sm:$0xff]
    %v1186 = vld [vmem:[#allocation8 + $0x90] sm:$0xff]
    %v1187 = vld [vmem:[#allocation8 + $0x98] sm:$0xff]
    %v1188 = vld [vmem:[#allocation8 + $0xa0] sm:$0xff]
    %v1189 = vld [vmem:[#allocation8 + $0xa8] sm:$0xff]
    %v1190 = vld [vmem:[#allocation8 + $0xb0] sm:$0xff]
    %v1191 = vld [vmem:[#allocation8 + $0xb8] sm:$0xff]
    %v1192 = vld [vmem:[#allocation8 + $0xc0] sm:$0xff]
    %v1193 = vld [vmem:[#allocation8 + $0xc8] sm:$0xff]
    %v1194 = vld [vmem:[#allocation8 + $0xd0] sm:$0xff]
    %v1195 = vld [vmem:[#allocation8 + $0xd8] sm:$0xff]
    %v1196 = vld [vmem:[#allocation8 + $0xe0] sm:$0xff]
    %v1197 = vld [vmem:[#allocation8 + $0xe8] sm:$0xff]
    %v1198 = vld [vmem:[#allocation8 + $0xf0] sm:$0xff]
    %v1199 = vld [vmem:[#allocation8 + $0xf8] sm:$0xff]
    %v1200 = vld [vmem:[#allocation8 + $0x100] sm:$0xff]
    %v1201 = vld [vmem:[#allocation8 + $0x108] sm:$0xff]
    %v1202 = vld [vmem:[#allocation8 + $0x110] sm:$0xff]
    %v1203 = vld [vmem:[#allocation8 + $0x118] sm:$0xff]
    %v1204 = vld [vmem:[#allocation8 + $0x120] sm:$0xff]
    %v1205 = vld [vmem:[#allocation8 + $0x128] sm:$0xff]
    %v1206 = vld [vmem:[#allocation8 + $0x130] sm:$0xff]
    %v1207 = vld [vmem:[#allocation8 + $0x138] sm:$0xff]
    %v1208 = vld [vmem:[#allocation8 + $0x140] sm:$0xff]
    %v1209 = vld [vmem:[#allocation8 + $0x148] sm:$0xff]
    %v1210 = vld [vmem:[#allocation8 + $0x150] sm:$0xff]
    %v1211 = vld [vmem:[#allocation8 + $0x158] sm:$0xff]
    %v1212 = vld [vmem:[#allocation8 + $0x160] sm:$0xff]
    %v1213 = vld [vmem:[#allocation8 + $0x168] sm:$0xff]
    %v1214 = vld [vmem:[#allocation8 + $0x170] sm:$0xff]
    %v1215 = vld [vmem:[#allocation8 + $0x178] sm:$0xff]
    %v1216 = vld [vmem:[#allocation8 + $0x180] sm:$0xff]
    %v1217 = vld [vmem:[#allocation8 + $0x188] sm:$0xff]
    %v1218 = vld [vmem:[#allocation8 + $0x190] sm:$0xff]
    %v1219 = vld [vmem:[#allocation8 + $0x198] sm:$0xff]
    %v1220 = vld [vmem:[#allocation8 + $0x1a0] sm:$0xff]
    %v1221 = vld [vmem:[#allocation8 + $0x1a8] sm:$0xff]
    %v1222 = vld [vmem:[#allocation8 + $0x1b0] sm:$0xff]
    %v1223 = vld [vmem:[#allocation8 + $0x1b8] sm:$0xff]
    %v1224 = vld [vmem:[#allocation8 + $0x1c0] sm:$0xff]
    %v1225 = vld [vmem:[#allocation8 + $0x1c8] sm:$0xff]
    %v1226 = vld [vmem:[#allocation8 + $0x1d0] sm:$0xff]
    %v1227 = vld [vmem:[#allocation8 + $0x1d8] sm:$0xff]
    %v1228 = vld [vmem:[#allocation8 + $0x1e0] sm:$0xff]
    %v1229 = vld [vmem:[#allocation8 + $0x1e8] sm:$0xff]
    %v1230 = vld [vmem:[#allocation8 + $0x1f0] sm:$0xff]
    %v1231 = vld [vmem:[#allocation8 + $0x1f8] sm:$0xff]
    %v1232 = vld [vmem:[#allocation8 + $0x200] sm:$0xff]
    %v1233 = vld [vmem:[#allocation8 + $0x208] sm:$0xff]
    %v1234 = vld [vmem:[#allocation8 + $0x210] sm:$0xff]
    %v1235 = vld [vmem:[#allocation8 + $0x218] sm:$0xff]
    %v1236 = vld [vmem:[#allocation8 + $0x220] sm:$0xff]
    %v1237 = vld [vmem:[#allocation8 + $0x228] sm:$0xff]
    %v1238 = vld [vmem:[#allocation8 + $0x230] sm:$0xff]
    %v1239 = vld [vmem:[#allocation8 + $0x238] sm:$0xff]
    %v1240 = vld [vmem:[#allocation8 + $0x240] sm:$0xff]
    %v1241 = vld [vmem:[#allocation8 + $0x248] sm:$0xff]
    %v1242 = vld [vmem:[#allocation8 + $0x250] sm:$0xff]
    %v1243 = vld [vmem:[#allocation8 + $0x258] sm:$0xff]
    %v1244 = vld [vmem:[#allocation8 + $0x260] sm:$0xff]
    %v1245 = vld [vmem:[#allocation8 + $0x268] sm:$0xff]
    %v1246 = vld [vmem:[#allocation8 + $0x270] sm:$0xff]
    %v1247 = vld [vmem:[#allocation8 + $0x278] sm:$0xff]
    %v1248 = vld [vmem:[#allocation8 + $0x280] sm:$0xff]
    %v1249 = vld [vmem:[#allocation8 + $0x288] sm:$0xff]
    %v1250 = vld [vmem:[#allocation8 + $0x290] sm:$0xff]
    %v1251 = vld [vmem:[#allocation8 + $0x298] sm:$0xff]
    %v1252 = vld [vmem:[#allocation8 + $0x2a0] sm:$0xff]
    %v1253 = vld [vmem:[#allocation8 + $0x2a8] sm:$0xff]
    %v1254 = vld [vmem:[#allocation8 + $0x2b0] sm:$0xff]
    %v1255 = vld [vmem:[#allocation8 + $0x2b8] sm:$0xff]
    %v1256 = vld [vmem:[#allocation8 + $0x2c0] sm:$0xff]
    %v1257 = vld [vmem:[#allocation8 + $0x2c8] sm:$0xff]
    %v1258 = vld [vmem:[#allocation8 + $0x2d0] sm:$0xff]
    %v1259 = vld [vmem:[#allocation8 + $0x2d8] sm:$0xff]
    %v1260 = vld [vmem:[#allocation8 + $0x2e0] sm:$0xff]
    %v1261 = vld [vmem:[#allocation8 + $0x2e8] sm:$0xff]
    %v1262 = vld [vmem:[#allocation8 + $0x2f0] sm:$0xff]
    %v1263 = vld [vmem:[#allocation8 + $0x2f8] sm:$0xff]
    %v1264 = vld [vmem:[#allocation8 + $0x300] sm:$0xff]
    %v1265 = vld [vmem:[#allocation8 + $0x308] sm:$0xff]
    %v1266 = vld [vmem:[#allocation8 + $0x310] sm:$0xff]
    %v1267 = vld [vmem:[#allocation8 + $0x318] sm:$0xff]
    %v1268 = vld [vmem:[#allocation8 + $0x320] sm:$0xff]
    %v1269 = vld [vmem:[#allocation8 + $0x328] sm:$0xff]
    %v1270 = vld [vmem:[#allocation8 + $0x330] sm:$0xff]
    %v1271 = vld [vmem:[#allocation8 + $0x338] sm:$0xff]
    %v1272 = vld [vmem:[#allocation8 + $0x340] sm:$0xff]
    %v1273 = vld [vmem:[#allocation8 + $0x348] sm:$0xff]
    %v1274 = vld [vmem:[#allocation8 + $0x350] sm:$0xff]
    %v1275 = vld [vmem:[#allocation8 + $0x358] sm:$0xff]
    %v1276 = vld [vmem:[#allocation8 + $0x360] sm:$0xff]
    %v1277 = vld [vmem:[#allocation8 + $0x368] sm:$0xff]
    %v1278 = vld [vmem:[#allocation8 + $0x370] sm:$0xff]
    %v1279 = vld [vmem:[#allocation8 + $0x378] sm:$0xff]
    %v1280 = vld [vmem:[#allocation8 + $0x380] sm:$0xff]
    %v1281 = vld [vmem:[#allocation8 + $0x388] sm:$0xff]
    %v1282 = vld [vmem:[#allocation8 + $0x390] sm:$0xff]
    %v1283 = vld [vmem:[#allocation8 + $0x398] sm:$0xff]
    %v1284 = vld [vmem:[#allocation8 + $0x3a0] sm:$0xff]
    %v1285 = vld [vmem:[#allocation8 + $0x3a8] sm:$0xff]
    %v1286 = vld [vmem:[#allocation8 + $0x3b0] sm:$0xff]
    %v1287 = vld [vmem:[#allocation8 + $0x3b8] sm:$0xff]
    %v1288 = vld [vmem:[#allocation8 + $0x3c0] sm:$0xff]
    %v1289 = vld [vmem:[#allocation8 + $0x3c8] sm:$0xff]
    %v1290 = vld [vmem:[#allocation8 + $0x3d0] sm:$0xff]
    %v1291 = vld [vmem:[#allocation8 + $0x3d8] sm:$0xff]
    %v1292 = vld [vmem:[#allocation8 + $0x3e0] sm:$0xff]
    %v1293 = vld [vmem:[#allocation8 + $0x3e8] sm:$0xff]
    %v1294 = vld [vmem:[#allocation8 + $0x3f0] sm:$0xff]
    %v1295 = vld [vmem:[#allocation8 + $0x3f8] sm:$0xff]
    %v1296 = vld [vmem:[#allocation8 + $0x400] sm:$0xff]
    %v1297 = vld [vmem:[#allocation8 + $0x408] sm:$0xff]
    %v1298 = vld [vmem:[#allocation8 + $0x410] sm:$0xff]
    %v1299 = vld [vmem:[#allocation8 + $0x418] sm:$0xff]
    %v1300 = vld [vmem:[#allocation8 + $0x420] sm:$0xff]
    %v1301 = vld [vmem:[#allocation8 + $0x428] sm:$0xff]
    %v1302 = vld [vmem:[#allocation8 + $0x430] sm:$0xff]
    %v1303 = vld [vmem:[#allocation8 + $0x438] sm:$0xff]
    %v1304 = vld [vmem:[#allocation8 + $0x440] sm:$0xff]
    %v1305 = vld [vmem:[#allocation8 + $0x448] sm:$0xff]
    %v1306 = vld [vmem:[#allocation8 + $0x450] sm:$0xff]
    %v1307 = vld [vmem:[#allocation8 + $0x458] sm:$0xff]
    %v1308 = vld [vmem:[#allocation8 + $0x460] sm:$0xff]
    %v1309 = vld [vmem:[#allocation8 + $0x468] sm:$0xff]
    %v1310 = vld [vmem:[#allocation8 + $0x470] sm:$0xff]
    %v1311 = vld [vmem:[#allocation8 + $0x478] sm:$0xff]
    %v1312 = vld [vmem:[#allocation8 + $0x480] sm:$0xff]
    %v1313 = vld [vmem:[#allocation8 + $0x488] sm:$0xff]
    %v1314 = vld [vmem:[#allocation8 + $0x490] sm:$0xff]
    %v1315 = vld [vmem:[#allocation8 + $0x498] sm:$0xff]
    %v1316 = vld [vmem:[#allocation8 + $0x4a0] sm:$0xff]
    %v1317 = vld [vmem:[#allocation8 + $0x4a8] sm:$0xff]
    %v1318 = vld [vmem:[#allocation8 + $0x4b0] sm:$0xff]
    %v1319 = vld [vmem:[#allocation8 + $0x4b8] sm:$0xff]
    %v1320 = vld [vmem:[#allocation8 + $0x4c0] sm:$0xff]
    %v1321 = vld [vmem:[#allocation8 + $0x4c8] sm:$0xff]
    %v1322 = vld [vmem:[#allocation8 + $0x4d0] sm:$0xff]
    %v1323 = vld [vmem:[#allocation8 + $0x4d8] sm:$0xff]
    %v1324 = vld [vmem:[#allocation8 + $0x4e0] sm:$0xff]
    %v1325 = vld [vmem:[#allocation8 + $0x4e8] sm:$0xff]
    %v1326 = vld [vmem:[#allocation8 + $0x4f0] sm:$0xff]
    %v1327 = vld [vmem:[#allocation8 + $0x4f8] sm:$0xff]
    %v1328 = vld [vmem:[#allocation8 + $0x500] sm:$0xff]
    %v1329 = vld [vmem:[#allocation8 + $0x508] sm:$0xff]
    %v1330 = vld [vmem:[#allocation8 + $0x510] sm:$0xff]
    %v1331 = vld [vmem:[#allocation8 + $0x518] sm:$0xff]
    %v1332 = vld [vmem:[#allocation8 + $0x520] sm:$0xff]
    %v1333 = vld [vmem:[#allocation8 + $0x528] sm:$0xff]
    %v1334 = vld [vmem:[#allocation8 + $0x530] sm:$0xff]
    %v1335 = vld [vmem:[#allocation8 + $0x538] sm:$0xff]
    %v1336 = vld [vmem:[#allocation8 + $0x540] sm:$0xff]
    %v1337 = vld [vmem:[#allocation8 + $0x548] sm:$0xff]
    %v1338 = vld [vmem:[#allocation8 + $0x550] sm:$0xff]
    %v1339 = vld [vmem:[#allocation8 + $0x558] sm:$0xff]
    %v1340 = vld [vmem:[#allocation8 + $0x560] sm:$0xff]
    %v1341 = vld [vmem:[#allocation8 + $0x568] sm:$0xff]
    %v1342 = vld [vmem:[#allocation8 + $0x570] sm:$0xff]
    %v1343 = vld [vmem:[#allocation8 + $0x578] sm:$0xff]
    %v1344 = vld [vmem:[#allocation8 + $0x580] sm:$0xff]
    %v1345 = vld [vmem:[#allocation8 + $0x588] sm:$0xff]
    %v1346 = vld [vmem:[#allocation8 + $0x590] sm:$0xff]
    %v1347 = vld [vmem:[#allocation8 + $0x598] sm:$0xff]
    %v1348 = vld [vmem:[#allocation8 + $0x5a0] sm:$0xff]
    %v1349 = vld [vmem:[#allocation8 + $0x5a8] sm:$0xff]
    %v1350 = vld [vmem:[#allocation8 + $0x5b0] sm:$0xff]
    %v1351 = vld [vmem:[#allocation8 + $0x5b8] sm:$0xff]
    %v1352 = vld [vmem:[#allocation8 + $0x5c0] sm:$0xff]
    %v1353 = vld [vmem:[#allocation8 + $0x5c8] sm:$0xff]
    %v1354 = vld [vmem:[#allocation8 + $0x5d0] sm:$0xff]
    %v1355 = vld [vmem:[#allocation8 + $0x5d8] sm:$0xff]
    %v1356 = vld [vmem:[#allocation8 + $0x5e0] sm:$0xff]
    %v1357 = vld [vmem:[#allocation8 + $0x5e8] sm:$0xff]
    %v1358 = vld [vmem:[#allocation8 + $0x5f0] sm:$0xff]
    %v1359 = vld [vmem:[#allocation8 + $0x5f8] sm:$0xff]
    %v1360 = vld [vmem:[#allocation8 + $0x600] sm:$0xff]
    %v1361 = vld [vmem:[#allocation8 + $0x608] sm:$0xff]
    %v1362 = vld [vmem:[#allocation8 + $0x610] sm:$0xff]
    %v1363 = vld [vmem:[#allocation8 + $0x618] sm:$0xff]
    %v1364 = vld [vmem:[#allocation8 + $0x620] sm:$0xff]
    %v1365 = vld [vmem:[#allocation8 + $0x628] sm:$0xff]
    %v1366 = vld [vmem:[#allocation8 + $0x630] sm:$0xff]
    %v1367 = vld [vmem:[#allocation8 + $0x638] sm:$0xff]
    %v1368 = vld [vmem:[#allocation8 + $0x640] sm:$0xff]
    %v1369 = vld [vmem:[#allocation8 + $0x648] sm:$0xff]
    %v1370 = vld [vmem:[#allocation8 + $0x650] sm:$0xff]
    %v1371 = vld [vmem:[#allocation8 + $0x658] sm:$0xff]
    %v1372 = vld [vmem:[#allocation8 + $0x660] sm:$0xff]
    %v1373 = vld [vmem:[#allocation8 + $0x668] sm:$0xff]
    %v1374 = vld [vmem:[#allocation8 + $0x670] sm:$0xff]
    %v1375 = vld [vmem:[#allocation8 + $0x678] sm:$0xff]
    %v1376 = vld [vmem:[#allocation8 + $0x680] sm:$0xff]
    %v1377 = vld [vmem:[#allocation8 + $0x688] sm:$0xff]
    %v1378 = vld [vmem:[#allocation8 + $0x690] sm:$0xff]
    %v1379 = vld [vmem:[#allocation8 + $0x698] sm:$0xff]
    %v1380 = vld [vmem:[#allocation8 + $0x6a0] sm:$0xff]
    %v1381 = vld [vmem:[#allocation8 + $0x6a8] sm:$0xff]
    %v1382 = vld [vmem:[#allocation8 + $0x6b0] sm:$0xff]
    %v1383 = vld [vmem:[#allocation8 + $0x6b8] sm:$0xff]
    %v1384 = vld [vmem:[#allocation8 + $0x6c0] sm:$0xff]
    %v1385 = vld [vmem:[#allocation8 + $0x6c8] sm:$0xff]
    %v1386 = vld [vmem:[#allocation8 + $0x6d0] sm:$0xff]
    %v1387 = vld [vmem:[#allocation8 + $0x6d8] sm:$0xff]
    %v1388 = vld [vmem:[#allocation8 + $0x6e0] sm:$0xff]
    %v1389 = vld [vmem:[#allocation8 + $0x6e8] sm:$0xff]
    %v1390 = vld [vmem:[#allocation8 + $0x6f0] sm:$0xff]
    %v1391 = vld [vmem:[#allocation8 + $0x6f8] sm:$0xff]
    %v1392 = vld [vmem:[#allocation8 + $0x700] sm:$0xff]
    %v1393 = vld [vmem:[#allocation8 + $0x708] sm:$0xff]
    %v1394 = vld [vmem:[#allocation8 + $0x710] sm:$0xff]
    %v1395 = vld [vmem:[#allocation8 + $0x718] sm:$0xff]
    %v1396 = vld [vmem:[#allocation8 + $0x720] sm:$0xff]
    %v1397 = vld [vmem:[#allocation8 + $0x728] sm:$0xff]
    %v1398 = vld [vmem:[#allocation8 + $0x730] sm:$0xff]
    %v1399 = vld [vmem:[#allocation8 + $0x738] sm:$0xff]
    %v1400 = vld [vmem:[#allocation8 + $0x740] sm:$0xff]
    %v1401 = vld [vmem:[#allocation8 + $0x748] sm:$0xff]
    %v1402 = vld [vmem:[#allocation8 + $0x750] sm:$0xff]
    %v1403 = vld [vmem:[#allocation8 + $0x758] sm:$0xff]
    %v1404 = vld [vmem:[#allocation8 + $0x760] sm:$0xff]
    %v1405 = vld [vmem:[#allocation8 + $0x768] sm:$0xff]
    %v1406 = vld [vmem:[#allocation8 + $0x770] sm:$0xff]
    %v1407 = vld [vmem:[#allocation8 + $0x778] sm:$0xff]
    %v1408 = vld [vmem:[#allocation8 + $0x780] sm:$0xff]
    %v1409 = vld [vmem:[#allocation8 + $0x788] sm:$0xff]
    %v1410 = vld [vmem:[#allocation8 + $0x790] sm:$0xff]
    %v1411 = vld [vmem:[#allocation8 + $0x798] sm:$0xff]
    %v1412 = vld [vmem:[#allocation8 + $0x7a0] sm:$0xff]
    %v1413 = vld [vmem:[#allocation8 + $0x7a8] sm:$0xff]
    %v1414 = vld [vmem:[#allocation8 + $0x7b0] sm:$0xff]
    %v1415 = vld [vmem:[#allocation8 + $0x7b8] sm:$0xff]
    %v1416 = vld [vmem:[#allocation8 + $0x7c0] sm:$0xff]
    %v1417 = vld [vmem:[#allocation8 + $0x7c8] sm:$0xff]
    %v1418 = vld [vmem:[#allocation8 + $0x7d0] sm:$0xff]
    %v1419 = vld [vmem:[#allocation8 + $0x7d8] sm:$0xff]
    %v1420 = vld [vmem:[#allocation8 + $0x7e0] sm:$0xff]
    %v1421 = vld [vmem:[#allocation8 + $0x7e8] sm:$0xff]
    %v1422 = vld [vmem:[#allocation8 + $0x7f0] sm:$0xff]
    %v1423 = vld [vmem:[#allocation8 + $0x7f8] sm:$0xff]
    %v1424 = vld [vmem:[%s4] sm:$0xf]
    %v1426 = vlaneseq
    %v1427 = vshrl.u32 %v1426, 7
    %v1428 = vsub.s32 0, %v1427
    %v1429 = vrot.slane %v1424, %v1428
    %v1430 = vlaneseq
    %v1431 = vshrl.u32 %v1430, 7
    %v1432 = vsub.s32 1, %v1431
    %v1433 = vrot.slane %v1424, %v1432
    %v1434 = vlaneseq
    %v1435 = vshrl.u32 %v1434, 7
    %v1436 = vsub.s32 2, %v1435
    %v1437 = vrot.slane %v1424, %v1436
    %v1438 = vlaneseq
    %v1439 = vshrl.u32 %v1438, 7
    %v1440 = vsub.s32 3, %v1439
    %v1441 = vrot.slane %v1424, %v1440
    %v1702 = vunpack.c.l.b16 %v1168
    %v1703 = vunpack.c.h.b16 %v1168
    %v1704 = vunpack.c.l.b16 %v1169
    %v1705 = vunpack.c.h.b16 %v1169
    %v1706 = vunpack.c.l.b16 %v1170
    %v1707 = vunpack.c.h.b16 %v1170
    %v1708 = vunpack.c.l.b16 %v1171
    %v1709 = vunpack.c.h.b16 %v1171
    %v1710 = vunpack.c.l.b16 %v1172
    %v1711 = vunpack.c.h.b16 %v1172
    %v1712 = vunpack.c.l.b16 %v1173
    %v1713 = vunpack.c.h.b16 %v1173
    %v1714 = vunpack.c.l.b16 %v1174
    %v1715 = vunpack.c.h.b16 %v1174
    %v1716 = vunpack.c.l.b16 %v1175
    %v1717 = vunpack.c.h.b16 %v1175
    %v1718 = vunpack.c.l.b16 %v1176
    %v1719 = vunpack.c.h.b16 %v1176
    %v1720 = vunpack.c.l.b16 %v1177
    %v1721 = vunpack.c.h.b16 %v1177
    %v1722 = vunpack.c.l.b16 %v1178
    %v1723 = vunpack.c.h.b16 %v1178
    %v1724 = vunpack.c.l.b16 %v1179
    %v1725 = vunpack.c.h.b16 %v1179
    %v1726 = vunpack.c.l.b16 %v1180
    %v1727 = vunpack.c.h.b16 %v1180
    %v1728 = vunpack.c.l.b16 %v1181
    %v1729 = vunpack.c.h.b16 %v1181
    %v1730 = vunpack.c.l.b16 %v1182
    %v1731 = vunpack.c.h.b16 %v1182
    %v1732 = vunpack.c.l.b16 %v1183
    %v1733 = vunpack.c.h.b16 %v1183
    %v1734 = vunpack.c.l.b16 %v1184
    %v1735 = vunpack.c.h.b16 %v1184
    %v1736 = vunpack.c.l.b16 %v1185
    %v1737 = vunpack.c.h.b16 %v1185
    %v1738 = vunpack.c.l.b16 %v1186
    %v1739 = vunpack.c.h.b16 %v1186
    %v1740 = vunpack.c.l.b16 %v1187
    %v1741 = vunpack.c.h.b16 %v1187
    %v1742 = vunpack.c.l.b16 %v1188
    %v1743 = vunpack.c.h.b16 %v1188
    %v1744 = vunpack.c.l.b16 %v1189
    %v1745 = vunpack.c.h.b16 %v1189
    %v1746 = vunpack.c.l.b16 %v1190
    %v1747 = vunpack.c.h.b16 %v1190
    %v1748 = vunpack.c.l.b16 %v1191
    %v1749 = vunpack.c.h.b16 %v1191
    %v1750 = vunpack.c.l.b16 %v1192
    %v1751 = vunpack.c.h.b16 %v1192
    %v1752 = vunpack.c.l.b16 %v1193
    %v1753 = vunpack.c.h.b16 %v1193
    %v1754 = vunpack.c.l.b16 %v1194
    %v1755 = vunpack.c.h.b16 %v1194
    %v1756 = vunpack.c.l.b16 %v1195
    %v1757 = vunpack.c.h.b16 %v1195
    %v1758 = vunpack.c.l.b16 %v1196
    %v1759 = vunpack.c.h.b16 %v1196
    %v1760 = vunpack.c.l.b16 %v1197
    %v1761 = vunpack.c.h.b16 %v1197
    %v1762 = vunpack.c.l.b16 %v1198
    %v1763 = vunpack.c.h.b16 %v1198
    %v1764 = vunpack.c.l.b16 %v1199
    %v1765 = vunpack.c.h.b16 %v1199
    %v1766 = vunpack.c.l.b16 %v1200
    %v1767 = vunpack.c.h.b16 %v1200
    %v1768 = vunpack.c.l.b16 %v1201
    %v1769 = vunpack.c.h.b16 %v1201
    %v1770 = vunpack.c.l.b16 %v1202
    %v1771 = vunpack.c.h.b16 %v1202
    %v1772 = vunpack.c.l.b16 %v1203
    %v1773 = vunpack.c.h.b16 %v1203
    %v1774 = vunpack.c.l.b16 %v1204
    %v1775 = vunpack.c.h.b16 %v1204
    %v1776 = vunpack.c.l.b16 %v1205
    %v1777 = vunpack.c.h.b16 %v1205
    %v1778 = vunpack.c.l.b16 %v1206
    %v1779 = vunpack.c.h.b16 %v1206
    %v1780 = vunpack.c.l.b16 %v1207
    %v1781 = vunpack.c.h.b16 %v1207
    %v1782 = vunpack.c.l.b16 %v1208
    %v1783 = vunpack.c.h.b16 %v1208
    %v1784 = vunpack.c.l.b16 %v1209
    %v1785 = vunpack.c.h.b16 %v1209
    %v1786 = vunpack.c.l.b16 %v1210
    %v1787 = vunpack.c.h.b16 %v1210
    %v1788 = vunpack.c.l.b16 %v1211
    %v1789 = vunpack.c.h.b16 %v1211
    %v1790 = vunpack.c.l.b16 %v1212
    %v1791 = vunpack.c.h.b16 %v1212
    %v1792 = vunpack.c.l.b16 %v1213
    %v1793 = vunpack.c.h.b16 %v1213
    %v1794 = vunpack.c.l.b16 %v1214
    %v1795 = vunpack.c.h.b16 %v1214
    %v1796 = vunpack.c.l.b16 %v1215
    %v1797 = vunpack.c.h.b16 %v1215
    %v1798 = vunpack.c.l.b16 %v1216
    %v1799 = vunpack.c.h.b16 %v1216
    %v1800 = vunpack.c.l.b16 %v1217
    %v1801 = vunpack.c.h.b16 %v1217
    %v1802 = vunpack.c.l.b16 %v1218
    %v1803 = vunpack.c.h.b16 %v1218
    %v1804 = vunpack.c.l.b16 %v1219
    %v1805 = vunpack.c.h.b16 %v1219
    %v1806 = vunpack.c.l.b16 %v1220
    %v1807 = vunpack.c.h.b16 %v1220
    %v1808 = vunpack.c.l.b16 %v1221
    %v1809 = vunpack.c.h.b16 %v1221
    %v1810 = vunpack.c.l.b16 %v1222
    %v1811 = vunpack.c.h.b16 %v1222
    %v1812 = vunpack.c.l.b16 %v1223
    %v1813 = vunpack.c.h.b16 %v1223
    %v1814 = vunpack.c.l.b16 %v1224
    %v1815 = vunpack.c.h.b16 %v1224
    %v1816 = vunpack.c.l.b16 %v1225
    %v1817 = vunpack.c.h.b16 %v1225
    %v1818 = vunpack.c.l.b16 %v1226
    %v1819 = vunpack.c.h.b16 %v1226
    %v1820 = vunpack.c.l.b16 %v1227
    %v1821 = vunpack.c.h.b16 %v1227
    %v1822 = vunpack.c.l.b16 %v1228
    %v1823 = vunpack.c.h.b16 %v1228
    %v1824 = vunpack.c.l.b16 %v1229
    %v1825 = vunpack.c.h.b16 %v1229
    %v1826 = vunpack.c.l.b16 %v1230
    %v1827 = vunpack.c.h.b16 %v1230
    %v1828 = vunpack.c.l.b16 %v1231
    %v1829 = vunpack.c.h.b16 %v1231
    %v1830 = vunpack.c.l.b16 %v1232
    %v1831 = vunpack.c.h.b16 %v1232
    %v1832 = vunpack.c.l.b16 %v1233
    %v1833 = vunpack.c.h.b16 %v1233
    %v1834 = vunpack.c.l.b16 %v1234
    %v1835 = vunpack.c.h.b16 %v1234
    %v1836 = vunpack.c.l.b16 %v1235
    %v1837 = vunpack.c.h.b16 %v1235
    %v1838 = vunpack.c.l.b16 %v1236
    %v1839 = vunpack.c.h.b16 %v1236
    %v1840 = vunpack.c.l.b16 %v1237
    %v1841 = vunpack.c.h.b16 %v1237
    %v1842 = vunpack.c.l.b16 %v1238
    %v1843 = vunpack.c.h.b16 %v1238
    %v1844 = vunpack.c.l.b16 %v1239
    %v1845 = vunpack.c.h.b16 %v1239
    %v1846 = vunpack.c.l.b16 %v1240
    %v1847 = vunpack.c.h.b16 %v1240
    %v1848 = vunpack.c.l.b16 %v1241
    %v1849 = vunpack.c.h.b16 %v1241
    %v1850 = vunpack.c.l.b16 %v1242
    %v1851 = vunpack.c.h.b16 %v1242
    %v1852 = vunpack.c.l.b16 %v1243
    %v1853 = vunpack.c.h.b16 %v1243
    %v1854 = vunpack.c.l.b16 %v1244
    %v1855 = vunpack.c.h.b16 %v1244
    %v1856 = vunpack.c.l.b16 %v1245
    %v1857 = vunpack.c.h.b16 %v1245
    %v1858 = vunpack.c.l.b16 %v1246
    %v1859 = vunpack.c.h.b16 %v1246
    %v1860 = vunpack.c.l.b16 %v1247
    %v1861 = vunpack.c.h.b16 %v1247
    %v1862 = vunpack.c.l.b16 %v1248
    %v1863 = vunpack.c.h.b16 %v1248
    %v1864 = vunpack.c.l.b16 %v1249
    %v1865 = vunpack.c.h.b16 %v1249
    %v1866 = vunpack.c.l.b16 %v1250
    %v1867 = vunpack.c.h.b16 %v1250
    %v1868 = vunpack.c.l.b16 %v1251
    %v1869 = vunpack.c.h.b16 %v1251
    %v1870 = vunpack.c.l.b16 %v1252
    %v1871 = vunpack.c.h.b16 %v1252
    %v1872 = vunpack.c.l.b16 %v1253
    %v1873 = vunpack.c.h.b16 %v1253
    %v1874 = vunpack.c.l.b16 %v1254
    %v1875 = vunpack.c.h.b16 %v1254
    %v1876 = vunpack.c.l.b16 %v1255
    %v1877 = vunpack.c.h.b16 %v1255
    %v1878 = vunpack.c.l.b16 %v1256
    %v1879 = vunpack.c.h.b16 %v1256
    %v1880 = vunpack.c.l.b16 %v1257
    %v1881 = vunpack.c.h.b16 %v1257
    %v1882 = vunpack.c.l.b16 %v1258
    %v1883 = vunpack.c.h.b16 %v1258
    %v1884 = vunpack.c.l.b16 %v1259
    %v1885 = vunpack.c.h.b16 %v1259
    %v1886 = vunpack.c.l.b16 %v1260
    %v1887 = vunpack.c.h.b16 %v1260
    %v1888 = vunpack.c.l.b16 %v1261
    %v1889 = vunpack.c.h.b16 %v1261
    %v1890 = vunpack.c.l.b16 %v1262
    %v1891 = vunpack.c.h.b16 %v1262
    %v1892 = vunpack.c.l.b16 %v1263
    %v1893 = vunpack.c.h.b16 %v1263
    %v1894 = vunpack.c.l.b16 %v1264
    %v1895 = vunpack.c.h.b16 %v1264
    %v1896 = vunpack.c.l.b16 %v1265
    %v1897 = vunpack.c.h.b16 %v1265
    %v1898 = vunpack.c.l.b16 %v1266
    %v1899 = vunpack.c.h.b16 %v1266
    %v1900 = vunpack.c.l.b16 %v1267
    %v1901 = vunpack.c.h.b16 %v1267
    %v1902 = vunpack.c.l.b16 %v1268
    %v1903 = vunpack.c.h.b16 %v1268
    %v1904 = vunpack.c.l.b16 %v1269
    %v1905 = vunpack.c.h.b16 %v1269
    %v1906 = vunpack.c.l.b16 %v1270
    %v1907 = vunpack.c.h.b16 %v1270
    %v1908 = vunpack.c.l.b16 %v1271
    %v1909 = vunpack.c.h.b16 %v1271
    %v1910 = vunpack.c.l.b16 %v1272
    %v1911 = vunpack.c.h.b16 %v1272
    %v1912 = vunpack.c.l.b16 %v1273
    %v1913 = vunpack.c.h.b16 %v1273
    %v1914 = vunpack.c.l.b16 %v1274
    %v1915 = vunpack.c.h.b16 %v1274
    %v1916 = vunpack.c.l.b16 %v1275
    %v1917 = vunpack.c.h.b16 %v1275
    %v1918 = vunpack.c.l.b16 %v1276
    %v1919 = vunpack.c.h.b16 %v1276
    %v1920 = vunpack.c.l.b16 %v1277
    %v1921 = vunpack.c.h.b16 %v1277
    %v1922 = vunpack.c.l.b16 %v1278
    %v1923 = vunpack.c.h.b16 %v1278
    %v1924 = vunpack.c.l.b16 %v1279
    %v1925 = vunpack.c.h.b16 %v1279
    %v1926 = vunpack.c.l.b16 %v1280
    %v1927 = vunpack.c.h.b16 %v1280
    %v1928 = vunpack.c.l.b16 %v1281
    %v1929 = vunpack.c.h.b16 %v1281
    %v1930 = vunpack.c.l.b16 %v1282
    %v1931 = vunpack.c.h.b16 %v1282
    %v1932 = vunpack.c.l.b16 %v1283
    %v1933 = vunpack.c.h.b16 %v1283
    %v1934 = vunpack.c.l.b16 %v1284
    %v1935 = vunpack.c.h.b16 %v1284
    %v1936 = vunpack.c.l.b16 %v1285
    %v1937 = vunpack.c.h.b16 %v1285
    %v1938 = vunpack.c.l.b16 %v1286
    %v1939 = vunpack.c.h.b16 %v1286
    %v1940 = vunpack.c.l.b16 %v1287
    %v1941 = vunpack.c.h.b16 %v1287
    %v1942 = vunpack.c.l.b16 %v1288
    %v1943 = vunpack.c.h.b16 %v1288
    %v1944 = vunpack.c.l.b16 %v1289
    %v1945 = vunpack.c.h.b16 %v1289
    %v1946 = vunpack.c.l.b16 %v1290
    %v1947 = vunpack.c.h.b16 %v1290
    %v1948 = vunpack.c.l.b16 %v1291
    %v1949 = vunpack.c.h.b16 %v1291
    %v1950 = vunpack.c.l.b16 %v1292
    %v1951 = vunpack.c.h.b16 %v1292
    %v1952 = vunpack.c.l.b16 %v1293
    %v1953 = vunpack.c.h.b16 %v1293
    %v1954 = vunpack.c.l.b16 %v1294
    %v1955 = vunpack.c.h.b16 %v1294
    %v1956 = vunpack.c.l.b16 %v1295
    %v1957 = vunpack.c.h.b16 %v1295
    %v1958 = vunpack.c.l.b16 %v1296
    %v1959 = vunpack.c.h.b16 %v1296
    %v1960 = vunpack.c.l.b16 %v1297
    %v1961 = vunpack.c.h.b16 %v1297
    %v1962 = vunpack.c.l.b16 %v1298
    %v1963 = vunpack.c.h.b16 %v1298
    %v1964 = vunpack.c.l.b16 %v1299
    %v1965 = vunpack.c.h.b16 %v1299
    %v1966 = vunpack.c.l.b16 %v1300
    %v1967 = vunpack.c.h.b16 %v1300
    %v1968 = vunpack.c.l.b16 %v1301
    %v1969 = vunpack.c.h.b16 %v1301
    %v1970 = vunpack.c.l.b16 %v1302
    %v1971 = vunpack.c.h.b16 %v1302
    %v1972 = vunpack.c.l.b16 %v1303
    %v1973 = vunpack.c.h.b16 %v1303
    %v1974 = vunpack.c.l.b16 %v1304
    %v1975 = vunpack.c.h.b16 %v1304
    %v1976 = vunpack.c.l.b16 %v1305
    %v1977 = vunpack.c.h.b16 %v1305
    %v1978 = vunpack.c.l.b16 %v1306
    %v1979 = vunpack.c.h.b16 %v1306
    %v1980 = vunpack.c.l.b16 %v1307
    %v1981 = vunpack.c.h.b16 %v1307
    %v1982 = vunpack.c.l.b16 %v1308
    %v1983 = vunpack.c.h.b16 %v1308
    %v1984 = vunpack.c.l.b16 %v1309
    %v1985 = vunpack.c.h.b16 %v1309
    %v1986 = vunpack.c.l.b16 %v1310
    %v1987 = vunpack.c.h.b16 %v1310
    %v1988 = vunpack.c.l.b16 %v1311
    %v1989 = vunpack.c.h.b16 %v1311
    %v1990 = vunpack.c.l.b16 %v1312
    %v1991 = vunpack.c.h.b16 %v1312
    %v1992 = vunpack.c.l.b16 %v1313
    %v1993 = vunpack.c.h.b16 %v1313
    %v1994 = vunpack.c.l.b16 %v1314
    %v1995 = vunpack.c.h.b16 %v1314
    %v1996 = vunpack.c.l.b16 %v1315
    %v1997 = vunpack.c.h.b16 %v1315
    %v1998 = vunpack.c.l.b16 %v1316
    %v1999 = vunpack.c.h.b16 %v1316
    %v2000 = vunpack.c.l.b16 %v1317
    %v2001 = vunpack.c.h.b16 %v1317
    %v2002 = vunpack.c.l.b16 %v1318
    %v2003 = vunpack.c.h.b16 %v1318
    %v2004 = vunpack.c.l.b16 %v1319
    %v2005 = vunpack.c.h.b16 %v1319
    %v2006 = vunpack.c.l.b16 %v1320
    %v2007 = vunpack.c.h.b16 %v1320
    %v2008 = vunpack.c.l.b16 %v1321
    %v2009 = vunpack.c.h.b16 %v1321
    %v2010 = vunpack.c.l.b16 %v1322
    %v2011 = vunpack.c.h.b16 %v1322
    %v2012 = vunpack.c.l.b16 %v1323
    %v2013 = vunpack.c.h.b16 %v1323
    %v2014 = vunpack.c.l.b16 %v1324
    %v2015 = vunpack.c.h.b16 %v1324
    %v2016 = vunpack.c.l.b16 %v1325
    %v2017 = vunpack.c.h.b16 %v1325
    %v2018 = vunpack.c.l.b16 %v1326
    %v2019 = vunpack.c.h.b16 %v1326
    %v2020 = vunpack.c.l.b16 %v1327
    %v2021 = vunpack.c.h.b16 %v1327
    %v2022 = vunpack.c.l.b16 %v1328
    %v2023 = vunpack.c.h.b16 %v1328
    %v2024 = vunpack.c.l.b16 %v1329
    %v2025 = vunpack.c.h.b16 %v1329
    %v2026 = vunpack.c.l.b16 %v1330
    %v2027 = vunpack.c.h.b16 %v1330
    %v2028 = vunpack.c.l.b16 %v1331
    %v2029 = vunpack.c.h.b16 %v1331
    %v2030 = vunpack.c.l.b16 %v1332
    %v2031 = vunpack.c.h.b16 %v1332
    %v2032 = vunpack.c.l.b16 %v1333
    %v2033 = vunpack.c.h.b16 %v1333
    %v2034 = vunpack.c.l.b16 %v1334
    %v2035 = vunpack.c.h.b16 %v1334
    %v2036 = vunpack.c.l.b16 %v1335
    %v2037 = vunpack.c.h.b16 %v1335
    %v2038 = vunpack.c.l.b16 %v1336
    %v2039 = vunpack.c.h.b16 %v1336
    %v2040 = vunpack.c.l.b16 %v1337
    %v2041 = vunpack.c.h.b16 %v1337
    %v2042 = vunpack.c.l.b16 %v1338
    %v2043 = vunpack.c.h.b16 %v1338
    %v2044 = vunpack.c.l.b16 %v1339
    %v2045 = vunpack.c.h.b16 %v1339
    %v2046 = vunpack.c.l.b16 %v1340
    %v2047 = vunpack.c.h.b16 %v1340
    %v2048 = vunpack.c.l.b16 %v1341
    %v2049 = vunpack.c.h.b16 %v1341
    %v2050 = vunpack.c.l.b16 %v1342
    %v2051 = vunpack.c.h.b16 %v1342
    %v2052 = vunpack.c.l.b16 %v1343
    %v2053 = vunpack.c.h.b16 %v1343
    %v2054 = vunpack.c.l.b16 %v1344
    %v2055 = vunpack.c.h.b16 %v1344
    %v2056 = vunpack.c.l.b16 %v1345
    %v2057 = vunpack.c.h.b16 %v1345
    %v2058 = vunpack.c.l.b16 %v1346
    %v2059 = vunpack.c.h.b16 %v1346
    %v2060 = vunpack.c.l.b16 %v1347
    %v2061 = vunpack.c.h.b16 %v1347
    %v2062 = vunpack.c.l.b16 %v1348
    %v2063 = vunpack.c.h.b16 %v1348
    %v2064 = vunpack.c.l.b16 %v1349
    %v2065 = vunpack.c.h.b16 %v1349
    %v2066 = vunpack.c.l.b16 %v1350
    %v2067 = vunpack.c.h.b16 %v1350
    %v2068 = vunpack.c.l.b16 %v1351
    %v2069 = vunpack.c.h.b16 %v1351
    %v2070 = vunpack.c.l.b16 %v1352
    %v2071 = vunpack.c.h.b16 %v1352
    %v2072 = vunpack.c.l.b16 %v1353
    %v2073 = vunpack.c.h.b16 %v1353
    %v2074 = vunpack.c.l.b16 %v1354
    %v2075 = vunpack.c.h.b16 %v1354
    %v2076 = vunpack.c.l.b16 %v1355
    %v2077 = vunpack.c.h.b16 %v1355
    %v2078 = vunpack.c.l.b16 %v1356
    %v2079 = vunpack.c.h.b16 %v1356
    %v2080 = vunpack.c.l.b16 %v1357
    %v2081 = vunpack.c.h.b16 %v1357
    %v2082 = vunpack.c.l.b16 %v1358
    %v2083 = vunpack.c.h.b16 %v1358
    %v2084 = vunpack.c.l.b16 %v1359
    %v2085 = vunpack.c.h.b16 %v1359
    %v2086 = vunpack.c.l.b16 %v1360
    %v2087 = vunpack.c.h.b16 %v1360
    %v2088 = vunpack.c.l.b16 %v1361
    %v2089 = vunpack.c.h.b16 %v1361
    %v2090 = vunpack.c.l.b16 %v1362
    %v2091 = vunpack.c.h.b16 %v1362
    %v2092 = vunpack.c.l.b16 %v1363
    %v2093 = vunpack.c.h.b16 %v1363
    %v2094 = vunpack.c.l.b16 %v1364
    %v2095 = vunpack.c.h.b16 %v1364
    %v2096 = vunpack.c.l.b16 %v1365
    %v2097 = vunpack.c.h.b16 %v1365
    %v2098 = vunpack.c.l.b16 %v1366
    %v2099 = vunpack.c.h.b16 %v1366
    %v2100 = vunpack.c.l.b16 %v1367
    %v2101 = vunpack.c.h.b16 %v1367
    %v2102 = vunpack.c.l.b16 %v1368
    %v2103 = vunpack.c.h.b16 %v1368
    %v2104 = vunpack.c.l.b16 %v1369
    %v2105 = vunpack.c.h.b16 %v1369
    %v2106 = vunpack.c.l.b16 %v1370
    %v2107 = vunpack.c.h.b16 %v1370
    %v2108 = vunpack.c.l.b16 %v1371
    %v2109 = vunpack.c.h.b16 %v1371
    %v2110 = vunpack.c.l.b16 %v1372
    %v2111 = vunpack.c.h.b16 %v1372
    %v2112 = vunpack.c.l.b16 %v1373
    %v2113 = vunpack.c.h.b16 %v1373
    %v2114 = vunpack.c.l.b16 %v1374
    %v2115 = vunpack.c.h.b16 %v1374
    %v2116 = vunpack.c.l.b16 %v1375
    %v2117 = vunpack.c.h.b16 %v1375
    %v2118 = vunpack.c.l.b16 %v1376
    %v2119 = vunpack.c.h.b16 %v1376
    %v2120 = vunpack.c.l.b16 %v1377
    %v2121 = vunpack.c.h.b16 %v1377
    %v2122 = vunpack.c.l.b16 %v1378
    %v2123 = vunpack.c.h.b16 %v1378
    %v2124 = vunpack.c.l.b16 %v1379
    %v2125 = vunpack.c.h.b16 %v1379
    %v2126 = vunpack.c.l.b16 %v1380
    %v2127 = vunpack.c.h.b16 %v1380
    %v2128 = vunpack.c.l.b16 %v1381
    %v2129 = vunpack.c.h.b16 %v1381
    %v2130 = vunpack.c.l.b16 %v1382
    %v2131 = vunpack.c.h.b16 %v1382
    %v2132 = vunpack.c.l.b16 %v1383
    %v2133 = vunpack.c.h.b16 %v1383
    %v2134 = vunpack.c.l.b16 %v1384
    %v2135 = vunpack.c.h.b16 %v1384
    %v2136 = vunpack.c.l.b16 %v1385
    %v2137 = vunpack.c.h.b16 %v1385
    %v2138 = vunpack.c.l.b16 %v1386
    %v2139 = vunpack.c.h.b16 %v1386
    %v2140 = vunpack.c.l.b16 %v1387
    %v2141 = vunpack.c.h.b16 %v1387
    %v2142 = vunpack.c.l.b16 %v1388
    %v2143 = vunpack.c.h.b16 %v1388
    %v2144 = vunpack.c.l.b16 %v1389
    %v2145 = vunpack.c.h.b16 %v1389
    %v2146 = vunpack.c.l.b16 %v1390
    %v2147 = vunpack.c.h.b16 %v1390
    %v2148 = vunpack.c.l.b16 %v1391
    %v2149 = vunpack.c.h.b16 %v1391
    %v2150 = vunpack.c.l.b16 %v1392
    %v2151 = vunpack.c.h.b16 %v1392
    %v2152 = vunpack.c.l.b16 %v1393
    %v2153 = vunpack.c.h.b16 %v1393
    %v2154 = vunpack.c.l.b16 %v1394
    %v2155 = vunpack.c.h.b16 %v1394
    %v2156 = vunpack.c.l.b16 %v1395
    %v2157 = vunpack.c.h.b16 %v1395
    %v2158 = vunpack.c.l.b16 %v1396
    %v2159 = vunpack.c.h.b16 %v1396
    %v2160 = vunpack.c.l.b16 %v1397
    %v2161 = vunpack.c.h.b16 %v1397
    %v2162 = vunpack.c.l.b16 %v1398
    %v2163 = vunpack.c.h.b16 %v1398
    %v2164 = vunpack.c.l.b16 %v1399
    %v2165 = vunpack.c.h.b16 %v1399
    %v2166 = vunpack.c.l.b16 %v1400
    %v2167 = vunpack.c.h.b16 %v1400
    %v2168 = vunpack.c.l.b16 %v1401
    %v2169 = vunpack.c.h.b16 %v1401
    %v2170 = vunpack.c.l.b16 %v1402
    %v2171 = vunpack.c.h.b16 %v1402
    %v2172 = vunpack.c.l.b16 %v1403
    %v2173 = vunpack.c.h.b16 %v1403
    %v2174 = vunpack.c.l.b16 %v1404
    %v2175 = vunpack.c.h.b16 %v1404
    %v2176 = vunpack.c.l.b16 %v1405
    %v2177 = vunpack.c.h.b16 %v1405
    %v2178 = vunpack.c.l.b16 %v1406
    %v2179 = vunpack.c.h.b16 %v1406
    %v2180 = vunpack.c.l.b16 %v1407
    %v2181 = vunpack.c.h.b16 %v1407
    %v2182 = vunpack.c.l.b16 %v1408
    %v2183 = vunpack.c.h.b16 %v1408
    %v2184 = vunpack.c.l.b16 %v1409
    %v2185 = vunpack.c.h.b16 %v1409
    %v2186 = vunpack.c.l.b16 %v1410
    %v2187 = vunpack.c.h.b16 %v1410
    %v2188 = vunpack.c.l.b16 %v1411
    %v2189 = vunpack.c.h.b16 %v1411
    %v2190 = vunpack.c.l.b16 %v1412
    %v2191 = vunpack.c.h.b16 %v1412
    %v2192 = vunpack.c.l.b16 %v1413
    %v2193 = vunpack.c.h.b16 %v1413
    %v2194 = vunpack.c.l.b16 %v1414
    %v2195 = vunpack.c.h.b16 %v1414
    %v2196 = vunpack.c.l.b16 %v1415
    %v2197 = vunpack.c.h.b16 %v1415
    %v2198 = vunpack.c.l.b16 %v1416
    %v2199 = vunpack.c.h.b16 %v1416
    %v2200 = vunpack.c.l.b16 %v1417
    %v2201 = vunpack.c.h.b16 %v1417
    %v2202 = vunpack.c.l.b16 %v1418
    %v2203 = vunpack.c.h.b16 %v1418
    %v2204 = vunpack.c.l.b16 %v1419
    %v2205 = vunpack.c.h.b16 %v1419
    %v2206 = vunpack.c.l.b16 %v1420
    %v2207 = vunpack.c.h.b16 %v1420
    %v2208 = vunpack.c.l.b16 %v1421
    %v2209 = vunpack.c.h.b16 %v1421
    %v2210 = vunpack.c.l.b16 %v1422
    %v2211 = vunpack.c.h.b16 %v1422
    %v2212 = vunpack.c.l.b16 %v1423
    %v2213 = vunpack.c.h.b16 %v1423
    %v2214 = vpack.c.b16 %v1706, %v1702
    %v2215 = vpack.c.b16 %v1707, %v1703
    %v2216 = vpack.c.b16 %v1708, %v1704
    %v2217 = vpack.c.b16 %v1709, %v1705
    %v2218 = vpack.c.b16 %v1714, %v1710
    %v2219 = vpack.c.b16 %v1715, %v1711
    %v2220 = vpack.c.b16 %v1716, %v1712
    %v2221 = vpack.c.b16 %v1717, %v1713
    %v2222 = vpack.c.b16 %v1722, %v1718
    %v2223 = vpack.c.b16 %v1723, %v1719
    %v2224 = vpack.c.b16 %v1724, %v1720
    %v2225 = vpack.c.b16 %v1725, %v1721
    %v2226 = vpack.c.b16 %v1730, %v1726
    %v2227 = vpack.c.b16 %v1731, %v1727
    %v2228 = vpack.c.b16 %v1732, %v1728
    %v2229 = vpack.c.b16 %v1733, %v1729
    %v2230 = vpack.c.b16 %v1738, %v1734
    %v2231 = vpack.c.b16 %v1739, %v1735
    %v2232 = vpack.c.b16 %v1740, %v1736
    %v2233 = vpack.c.b16 %v1741, %v1737
    %v2234 = vpack.c.b16 %v1746, %v1742
    %v2235 = vpack.c.b16 %v1747, %v1743
    %v2236 = vpack.c.b16 %v1748, %v1744
    %v2237 = vpack.c.b16 %v1749, %v1745
    %v2238 = vpack.c.b16 %v1754, %v1750
    %v2239 = vpack.c.b16 %v1755, %v1751
    %v2240 = vpack.c.b16 %v1756, %v1752
    %v2241 = vpack.c.b16 %v1757, %v1753
    %v2242 = vpack.c.b16 %v1762, %v1758
    %v2243 = vpack.c.b16 %v1763, %v1759
    %v2244 = vpack.c.b16 %v1764, %v1760
    %v2245 = vpack.c.b16 %v1765, %v1761
    %v2246 = vpack.c.b16 %v1770, %v1766
    %v2247 = vpack.c.b16 %v1771, %v1767
    %v2248 = vpack.c.b16 %v1772, %v1768
    %v2249 = vpack.c.b16 %v1773, %v1769
    %v2250 = vpack.c.b16 %v1778, %v1774
    %v2251 = vpack.c.b16 %v1779, %v1775
    %v2252 = vpack.c.b16 %v1780, %v1776
    %v2253 = vpack.c.b16 %v1781, %v1777
    %v2254 = vpack.c.b16 %v1786, %v1782
    %v2255 = vpack.c.b16 %v1787, %v1783
    %v2256 = vpack.c.b16 %v1788, %v1784
    %v2257 = vpack.c.b16 %v1789, %v1785
    %v2258 = vpack.c.b16 %v1794, %v1790
    %v2259 = vpack.c.b16 %v1795, %v1791
    %v2260 = vpack.c.b16 %v1796, %v1792
    %v2261 = vpack.c.b16 %v1797, %v1793
    %v2262 = vpack.c.b16 %v1802, %v1798
    %v2263 = vpack.c.b16 %v1803, %v1799
    %v2264 = vpack.c.b16 %v1804, %v1800
    %v2265 = vpack.c.b16 %v1805, %v1801
    %v2266 = vpack.c.b16 %v1810, %v1806
    %v2267 = vpack.c.b16 %v1811, %v1807
    %v2268 = vpack.c.b16 %v1812, %v1808
    %v2269 = vpack.c.b16 %v1813, %v1809
    %v2270 = vpack.c.b16 %v1818, %v1814
    %v2271 = vpack.c.b16 %v1819, %v1815
    %v2272 = vpack.c.b16 %v1820, %v1816
    %v2273 = vpack.c.b16 %v1821, %v1817
    %v2274 = vpack.c.b16 %v1826, %v1822
    %v2275 = vpack.c.b16 %v1827, %v1823
    %v2276 = vpack.c.b16 %v1828, %v1824
    %v2277 = vpack.c.b16 %v1829, %v1825
    %v2278 = vpack.c.b16 %v1834, %v1830
    %v2279 = vpack.c.b16 %v1835, %v1831
    %v2280 = vpack.c.b16 %v1836, %v1832
    %v2281 = vpack.c.b16 %v1837, %v1833
    %v2282 = vpack.c.b16 %v1842, %v1838
    %v2283 = vpack.c.b16 %v1843, %v1839
    %v2284 = vpack.c.b16 %v1844, %v1840
    %v2285 = vpack.c.b16 %v1845, %v1841
    %v2286 = vpack.c.b16 %v1850, %v1846
    %v2287 = vpack.c.b16 %v1851, %v1847
    %v2288 = vpack.c.b16 %v1852, %v1848
    %v2289 = vpack.c.b16 %v1853, %v1849
    %v2290 = vpack.c.b16 %v1858, %v1854
    %v2291 = vpack.c.b16 %v1859, %v1855
    %v2292 = vpack.c.b16 %v1860, %v1856
    %v2293 = vpack.c.b16 %v1861, %v1857
    %v2294 = vpack.c.b16 %v1866, %v1862
    %v2295 = vpack.c.b16 %v1867, %v1863
    %v2296 = vpack.c.b16 %v1868, %v1864
    %v2297 = vpack.c.b16 %v1869, %v1865
    %v2298 = vpack.c.b16 %v1874, %v1870
    %v2299 = vpack.c.b16 %v1875, %v1871
    %v2300 = vpack.c.b16 %v1876, %v1872
    %v2301 = vpack.c.b16 %v1877, %v1873
    %v2302 = vpack.c.b16 %v1882, %v1878
    %v2303 = vpack.c.b16 %v1883, %v1879
    %v2304 = vpack.c.b16 %v1884, %v1880
    %v2305 = vpack.c.b16 %v1885, %v1881
    %v2306 = vpack.c.b16 %v1890, %v1886
    %v2307 = vpack.c.b16 %v1891, %v1887
    %v2308 = vpack.c.b16 %v1892, %v1888
    %v2309 = vpack.c.b16 %v1893, %v1889
    %v2310 = vpack.c.b16 %v1898, %v1894
    %v2311 = vpack.c.b16 %v1899, %v1895
    %v2312 = vpack.c.b16 %v1900, %v1896
    %v2313 = vpack.c.b16 %v1901, %v1897
    %v2314 = vpack.c.b16 %v1906, %v1902
    %v2315 = vpack.c.b16 %v1907, %v1903
    %v2316 = vpack.c.b16 %v1908, %v1904
    %v2317 = vpack.c.b16 %v1909, %v1905
    %v2318 = vpack.c.b16 %v1914, %v1910
    %v2319 = vpack.c.b16 %v1915, %v1911
    %v2320 = vpack.c.b16 %v1916, %v1912
    %v2321 = vpack.c.b16 %v1917, %v1913
    %v2322 = vpack.c.b16 %v1922, %v1918
    %v2323 = vpack.c.b16 %v1923, %v1919
    %v2324 = vpack.c.b16 %v1924, %v1920
    %v2325 = vpack.c.b16 %v1925, %v1921
    %v2326 = vpack.c.b16 %v1930, %v1926
    %v2327 = vpack.c.b16 %v1931, %v1927
    %v2328 = vpack.c.b16 %v1932, %v1928
    %v2329 = vpack.c.b16 %v1933, %v1929
    %v2330 = vpack.c.b16 %v1938, %v1934
    %v2331 = vpack.c.b16 %v1939, %v1935
    %v2332 = vpack.c.b16 %v1940, %v1936
    %v2333 = vpack.c.b16 %v1941, %v1937
    %v2334 = vpack.c.b16 %v1946, %v1942
    %v2335 = vpack.c.b16 %v1947, %v1943
    %v2336 = vpack.c.b16 %v1948, %v1944
    %v2337 = vpack.c.b16 %v1949, %v1945
    %v2338 = vpack.c.b16 %v1954, %v1950
    %v2339 = vpack.c.b16 %v1955, %v1951
    %v2340 = vpack.c.b16 %v1956, %v1952
    %v2341 = vpack.c.b16 %v1957, %v1953
    %v2342 = vpack.c.b16 %v1962, %v1958
    %v2343 = vpack.c.b16 %v1963, %v1959
    %v2344 = vpack.c.b16 %v1964, %v1960
    %v2345 = vpack.c.b16 %v1965, %v1961
    %v2346 = vpack.c.b16 %v1970, %v1966
    %v2347 = vpack.c.b16 %v1971, %v1967
    %v2348 = vpack.c.b16 %v1972, %v1968
    %v2349 = vpack.c.b16 %v1973, %v1969
    %v2350 = vpack.c.b16 %v1978, %v1974
    %v2351 = vpack.c.b16 %v1979, %v1975
    %v2352 = vpack.c.b16 %v1980, %v1976
    %v2353 = vpack.c.b16 %v1981, %v1977
    %v2354 = vpack.c.b16 %v1986, %v1982
    %v2355 = vpack.c.b16 %v1987, %v1983
    %v2356 = vpack.c.b16 %v1988, %v1984
    %v2357 = vpack.c.b16 %v1989, %v1985
    %v2358 = vpack.c.b16 %v1994, %v1990
    %v2359 = vpack.c.b16 %v1995, %v1991
    %v2360 = vpack.c.b16 %v1996, %v1992
    %v2361 = vpack.c.b16 %v1997, %v1993
    %v2362 = vpack.c.b16 %v2002, %v1998
    %v2363 = vpack.c.b16 %v2003, %v1999
    %v2364 = vpack.c.b16 %v2004, %v2000
    %v2365 = vpack.c.b16 %v2005, %v2001
    %v2366 = vpack.c.b16 %v2010, %v2006
    %v2367 = vpack.c.b16 %v2011, %v2007
    %v2368 = vpack.c.b16 %v2012, %v2008
    %v2369 = vpack.c.b16 %v2013, %v2009
    %v2370 = vpack.c.b16 %v2018, %v2014
    %v2371 = vpack.c.b16 %v2019, %v2015
    %v2372 = vpack.c.b16 %v2020, %v2016
    %v2373 = vpack.c.b16 %v2021, %v2017
    %v2374 = vpack.c.b16 %v2026, %v2022
    %v2375 = vpack.c.b16 %v2027, %v2023
    %v2376 = vpack.c.b16 %v2028, %v2024
    %v2377 = vpack.c.b16 %v2029, %v2025
    %v2378 = vpack.c.b16 %v2034, %v2030
    %v2379 = vpack.c.b16 %v2035, %v2031
    %v2380 = vpack.c.b16 %v2036, %v2032
    %v2381 = vpack.c.b16 %v2037, %v2033
    %v2382 = vpack.c.b16 %v2042, %v2038
    %v2383 = vpack.c.b16 %v2043, %v2039
    %v2384 = vpack.c.b16 %v2044, %v2040
    %v2385 = vpack.c.b16 %v2045, %v2041
    %v2386 = vpack.c.b16 %v2050, %v2046
    %v2387 = vpack.c.b16 %v2051, %v2047
    %v2388 = vpack.c.b16 %v2052, %v2048
    %v2389 = vpack.c.b16 %v2053, %v2049
    %v2390 = vpack.c.b16 %v2058, %v2054
    %v2391 = vpack.c.b16 %v2059, %v2055
    %v2392 = vpack.c.b16 %v2060, %v2056
    %v2393 = vpack.c.b16 %v2061, %v2057
    %v2394 = vpack.c.b16 %v2066, %v2062
    %v2395 = vpack.c.b16 %v2067, %v2063
    %v2396 = vpack.c.b16 %v2068, %v2064
    %v2397 = vpack.c.b16 %v2069, %v2065
    %v2398 = vpack.c.b16 %v2074, %v2070
    %v2399 = vpack.c.b16 %v2075, %v2071
    %v2400 = vpack.c.b16 %v2076, %v2072
    %v2401 = vpack.c.b16 %v2077, %v2073
    %v2402 = vpack.c.b16 %v2082, %v2078
    %v2403 = vpack.c.b16 %v2083, %v2079
    %v2404 = vpack.c.b16 %v2084, %v2080
    %v2405 = vpack.c.b16 %v2085, %v2081
    %v2406 = vpack.c.b16 %v2090, %v2086
    %v2407 = vpack.c.b16 %v2091, %v2087
    %v2408 = vpack.c.b16 %v2092, %v2088
    %v2409 = vpack.c.b16 %v2093, %v2089
    %v2410 = vpack.c.b16 %v2098, %v2094
    %v2411 = vpack.c.b16 %v2099, %v2095
    %v2412 = vpack.c.b16 %v2100, %v2096
    %v2413 = vpack.c.b16 %v2101, %v2097
    %v2414 = vpack.c.b16 %v2106, %v2102
    %v2415 = vpack.c.b16 %v2107, %v2103
    %v2416 = vpack.c.b16 %v2108, %v2104
    %v2417 = vpack.c.b16 %v2109, %v2105
    %v2418 = vpack.c.b16 %v2114, %v2110
    %v2419 = vpack.c.b16 %v2115, %v2111
    %v2420 = vpack.c.b16 %v2116, %v2112
    %v2421 = vpack.c.b16 %v2117, %v2113
    %v2422 = vpack.c.b16 %v2122, %v2118
    %v2423 = vpack.c.b16 %v2123, %v2119
    %v2424 = vpack.c.b16 %v2124, %v2120
    %v2425 = vpack.c.b16 %v2125, %v2121
    %v2426 = vpack.c.b16 %v2130, %v2126
    %v2427 = vpack.c.b16 %v2131, %v2127
    %v2428 = vpack.c.b16 %v2132, %v2128
    %v2429 = vpack.c.b16 %v2133, %v2129
    %v2430 = vpack.c.b16 %v2138, %v2134
    %v2431 = vpack.c.b16 %v2139, %v2135
    %v2432 = vpack.c.b16 %v2140, %v2136
    %v2433 = vpack.c.b16 %v2141, %v2137
    %v2434 = vpack.c.b16 %v2146, %v2142
    %v2435 = vpack.c.b16 %v2147, %v2143
    %v2436 = vpack.c.b16 %v2148, %v2144
    %v2437 = vpack.c.b16 %v2149, %v2145
    %v2438 = vpack.c.b16 %v2154, %v2150
    %v2439 = vpack.c.b16 %v2155, %v2151
    %v2440 = vpack.c.b16 %v2156, %v2152
    %v2441 = vpack.c.b16 %v2157, %v2153
    %v2442 = vpack.c.b16 %v2162, %v2158
    %v2443 = vpack.c.b16 %v2163, %v2159
    %v2444 = vpack.c.b16 %v2164, %v2160
    %v2445 = vpack.c.b16 %v2165, %v2161
    %v2446 = vpack.c.b16 %v2170, %v2166
    %v2447 = vpack.c.b16 %v2171, %v2167
    %v2448 = vpack.c.b16 %v2172, %v2168
    %v2449 = vpack.c.b16 %v2173, %v2169
    %v2450 = vpack.c.b16 %v2178, %v2174
    %v2451 = vpack.c.b16 %v2179, %v2175
    %v2452 = vpack.c.b16 %v2180, %v2176
    %v2453 = vpack.c.b16 %v2181, %v2177
    %v2454 = vpack.c.b16 %v2186, %v2182
    %v2455 = vpack.c.b16 %v2187, %v2183
    %v2456 = vpack.c.b16 %v2188, %v2184
    %v2457 = vpack.c.b16 %v2189, %v2185
    %v2458 = vpack.c.b16 %v2194, %v2190
    %v2459 = vpack.c.b16 %v2195, %v2191
    %v2460 = vpack.c.b16 %v2196, %v2192
    %v2461 = vpack.c.b16 %v2197, %v2193
    %v2462 = vpack.c.b16 %v2202, %v2198
    %v2463 = vpack.c.b16 %v2203, %v2199
    %v2464 = vpack.c.b16 %v2204, %v2200
    %v2465 = vpack.c.b16 %v2205, %v2201
    %v2466 = vpack.c.b16 %v2210, %v2206
    %v2467 = vpack.c.b16 %v2211, %v2207
    %v2468 = vpack.c.b16 %v2212, %v2208
    %v2469 = vpack.c.b16 %v2213, %v2209
    %2726 = vmatprep.subr.bf16.mxu0 %v2215
    %2727 = vmatpush1.bf16.msra.mxu0 %v2214
    %2728 = vmatprep.subr.bf16.mxu0 %v2219
    %2729 = vmatpush1.bf16.msra.mxu0 %v2218
    %2730 = vmatprep.subr.bf16.mxu0 %v2223
    %2731 = vmatpush1.bf16.msra.mxu0 %v2222
    %2732 = vmatprep.subr.bf16.mxu0 %v2227
    %2733 = vmatpush1.bf16.msra.mxu0 %v2226
    %2734 = vmatprep.subr.bf16.mxu0 %v2231
    %2735 = vmatpush1.bf16.msra.mxu0 %v2230
    %2736 = vmatprep.subr.bf16.mxu0 %v2235
    %2737 = vmatpush1.bf16.msra.mxu0 %v2234
    %2738 = vmatprep.subr.bf16.mxu0 %v2239
    %2739 = vmatpush1.bf16.msra.mxu0 %v2238
    %2740 = vmatprep.subr.bf16.mxu0 %v2243
    %2741 = vmatpush1.bf16.msra.mxu0 %v2242
    %2742 = vmatprep.subr.bf16.mxu0 %v2247
    %2743 = vmatpush1.bf16.msra.mxu0 %v2246
    %2744 = vmatprep.subr.bf16.mxu0 %v2251
    %2745 = vmatpush1.bf16.msra.mxu0 %v2250
    %2746 = vmatprep.subr.bf16.mxu0 %v2255
    %2747 = vmatpush1.bf16.msra.mxu0 %v2254
    %2748 = vmatprep.subr.bf16.mxu0 %v2259
    %2749 = vmatpush1.bf16.msra.mxu0 %v2258
    %2750 = vmatprep.subr.bf16.mxu0 %v2263
    %2751 = vmatpush1.bf16.msra.mxu0 %v2262
    %2752 = vmatprep.subr.bf16.mxu0 %v2267
    %2753 = vmatpush1.bf16.msra.mxu0 %v2266
    %2754 = vmatprep.subr.bf16.mxu0 %v2271
    %2755 = vmatpush1.bf16.msra.mxu0 %v2270
    %2756 = vmatprep.subr.bf16.mxu0 %v2275
    %2757 = vmatpush1.bf16.msra.mxu0 %v2274
    %2758 = vmatprep.mubr.bf16.mxu0 %v1161
    %2759 = vmatmul.mubr.bf16.gmra.mrb[0].mxu0 %v1160
    %v2760 = vpop.f32.mrb[0].mxu0
    %v2761 = vadd.f32 %v1429, %v2760
    %v2762 = vpop.f32.mrb[0].mxu0
    %v2763 = vadd.f32 %v1433, %v2762
    %v2764 = vpop.f32.mrb[0].mxu0
    %v2765 = vadd.f32 %v1429, %v2764
    %v2766 = vpop.f32.mrb[0].mxu0
    %v2767 = vadd.f32 %v1433, %v2766
    %2768 = vdwg.mxu0
    %2769 = vmatprep.subr.bf16.mxu0 %v2279
    %2770 = vmatpush1.bf16.msra.mxu0 %v2278
    %2771 = vmatprep.subr.bf16.mxu0 %v2283
    %2772 = vmatpush1.bf16.msra.mxu0 %v2282
    %2773 = vmatprep.subr.bf16.mxu0 %v2287
    %2774 = vmatpush1.bf16.msra.mxu0 %v2286
    %2775 = vmatprep.subr.bf16.mxu0 %v2291
    %2776 = vmatpush1.bf16.msra.mxu0 %v2290
    %2777 = vmatprep.subr.bf16.mxu0 %v2295
    %2778 = vmatpush1.bf16.msra.mxu0 %v2294
    %2779 = vmatprep.subr.bf16.mxu0 %v2299
    %2780 = vmatpush1.bf16.msra.mxu0 %v2298
    %2781 = vmatprep.subr.bf16.mxu0 %v2303
    %2782 = vmatpush1.bf16.msra.mxu0 %v2302
    %2783 = vmatprep.subr.bf16.mxu0 %v2307
    %2784 = vmatpush1.bf16.msra.mxu0 %v2306
    %2785 = vmatprep.subr.bf16.mxu0 %v2311
    %2786 = vmatpush1.bf16.msra.mxu0 %v2310
    %2787 = vmatprep.subr.bf16.mxu0 %v2315
    %2788 = vmatpush1.bf16.msra.mxu0 %v2314
    %2789 = vmatprep.subr.bf16.mxu0 %v2319
    %2790 = vmatpush1.bf16.msra.mxu0 %v2318
    %2791 = vmatprep.subr.bf16.mxu0 %v2323
    %2792 = vmatpush1.bf16.msra.mxu0 %v2322
    %2793 = vmatprep.subr.bf16.mxu0 %v2327
    %2794 = vmatpush1.bf16.msra.mxu0 %v2326
    %2795 = vmatprep.subr.bf16.mxu0 %v2331
    %2796 = vmatpush1.bf16.msra.mxu0 %v2330
    %2797 = vmatprep.subr.bf16.mxu0 %v2335
    %2798 = vmatpush1.bf16.msra.mxu0 %v2334
    %2799 = vmatprep.subr.bf16.mxu0 %v2339
    %2800 = vmatpush1.bf16.msra.mxu0 %v2338
    %2801 = vmatprep.mubr.bf16.mxu0 %v1163
    %2802 = vmatmul.mubr.bf16.gmra.mrb[0].mxu0 %v1162
    %v2803 = vpop.f32.mrb[0].mxu0
    %v2804 = vadd.f32 %v2761, %v2803
    %v2805 = vpop.f32.mrb[0].mxu0
    %v2806 = vadd.f32 %v2763, %v2805
    %v2807 = vpop.f32.mrb[0].mxu0
    %v2808 = vadd.f32 %v2765, %v2807
    %v2809 = vpop.f32.mrb[0].mxu0
    %v2810 = vadd.f32 %v2767, %v2809
    %2811 = vdwg.mxu0
    %2812 = vmatprep.subr.bf16.mxu0 %v2343
    %2813 = vmatpush1.bf16.msra.mxu0 %v2342
    %2814 = vmatprep.subr.bf16.mxu0 %v2347
    %2815 = vmatpush1.bf16.msra.mxu0 %v2346
    %2816 = vmatprep.subr.bf16.mxu0 %v2351
    %2817 = vmatpush1.bf16.msra.mxu0 %v2350
    %2818 = vmatprep.subr.bf16.mxu0 %v2355
    %2819 = vmatpush1.bf16.msra.mxu0 %v2354
    %2820 = vmatprep.subr.bf16.mxu0 %v2359
    %2821 = vmatpush1.bf16.msra.mxu0 %v2358
    %2822 = vmatprep.subr.bf16.mxu0 %v2363
    %2823 = vmatpush1.bf16.msra.mxu0 %v2362
    %2824 = vmatprep.subr.bf16.mxu0 %v2367
    %2825 = vmatpush1.bf16.msra.mxu0 %v2366
    %2826 = vmatprep.subr.bf16.mxu0 %v2371
    %2827 = vmatpush1.bf16.msra.mxu0 %v2370
    %2828 = vmatprep.subr.bf16.mxu0 %v2375
    %2829 = vmatpush1.bf16.msra.mxu0 %v2374
    %2830 = vmatprep.subr.bf16.mxu0 %v2379
    %2831 = vmatpush1.bf16.msra.mxu0 %v2378
    %2832 = vmatprep.subr.bf16.mxu0 %v2383
    %2833 = vmatpush1.bf16.msra.mxu0 %v2382
    %2834 = vmatprep.subr.bf16.mxu0 %v2387
    %2835 = vmatpush1.bf16.msra.mxu0 %v2386
    %2836 = vmatprep.subr.bf16.mxu0 %v2391
    %2837 = vmatpush1.bf16.msra.mxu0 %v2390
    %2838 = vmatprep.subr.bf16.mxu0 %v2395
    %2839 = vmatpush1.bf16.msra.mxu0 %v2394
    %2840 = vmatprep.subr.bf16.mxu0 %v2399
    %2841 = vmatpush1.bf16.msra.mxu0 %v2398
    %2842 = vmatprep.subr.bf16.mxu0 %v2403
    %2843 = vmatpush1.bf16.msra.mxu0 %v2402
    %2844 = vmatprep.mubr.bf16.mxu0 %v1165
    %2845 = vmatmul.mubr.bf16.gmra.mrb[0].mxu0 %v1164
    %v2846 = vpop.f32.mrb[0].mxu0
    %v2847 = vadd.f32 %v2804, %v2846
    %v2848 = vpop.f32.mrb[0].mxu0
    %v2849 = vadd.f32 %v2806, %v2848
    %v2850 = vpop.f32.mrb[0].mxu0
    %v2851 = vadd.f32 %v2808, %v2850
    %v2852 = vpop.f32.mrb[0].mxu0
    %v2853 = vadd.f32 %v2810, %v2852
    %2854 = vdwg.mxu0
    %2855 = vmatprep.subr.bf16.mxu0 %v2407
    %2856 = vmatpush1.bf16.msra.mxu0 %v2406
    %2857 = vmatprep.subr.bf16.mxu0 %v2411
    %2858 = vmatpush1.bf16.msra.mxu0 %v2410
    %2859 = vmatprep.subr.bf16.mxu0 %v2415
    %2860 = vmatpush1.bf16.msra.mxu0 %v2414
    %2861 = vmatprep.subr.bf16.mxu0 %v2419
    %2862 = vmatpush1.bf16.msra.mxu0 %v2418
    %2863 = vmatprep.subr.bf16.mxu0 %v2423
    %2864 = vmatpush1.bf16.msra.mxu0 %v2422
    %2865 = vmatprep.subr.bf16.mxu0 %v2427
    %2866 = vmatpush1.bf16.msra.mxu0 %v2426
    %2867 = vmatprep.subr.bf16.mxu0 %v2431
    %2868 = vmatpush1.bf16.msra.mxu0 %v2430
    %2869 = vmatprep.subr.bf16.mxu0 %v2435
    %2870 = vmatpush1.bf16.msra.mxu0 %v2434
    %2871 = vmatprep.subr.bf16.mxu0 %v2439
    %2872 = vmatpush1.bf16.msra.mxu0 %v2438
    %2873 = vmatprep.subr.bf16.mxu0 %v2443
    %2874 = vmatpush1.bf16.msra.mxu0 %v2442
    %2875 = vmatprep.subr.bf16.mxu0 %v2447
    %2876 = vmatpush1.bf16.msra.mxu0 %v2446
    %2877 = vmatprep.subr.bf16.mxu0 %v2451
    %2878 = vmatpush1.bf16.msra.mxu0 %v2450
    %2879 = vmatprep.subr.bf16.mxu0 %v2455
    %2880 = vmatpush1.bf16.msra.mxu0 %v2454
    %2881 = vmatprep.subr.bf16.mxu0 %v2459
    %2882 = vmatpush1.bf16.msra.mxu0 %v2458
    %2883 = vmatprep.subr.bf16.mxu0 %v2463
    %2884 = vmatpush1.bf16.msra.mxu0 %v2462
    %2885 = vmatprep.subr.bf16.mxu0 %v2467
    %2886 = vmatpush1.bf16.msra.mxu0 %v2466
    %2887 = vmatprep.mubr.bf16.mxu0 %v1167
    %2888 = vmatmul.mubr.bf16.gmra.mrb[0].mxu0 %v1166
    %v2889 = vpop.f32.mrb[0].mxu0
    %v2890 = vadd.f32 %v2847, %v2889
    %v2891 = vpop.f32.mrb[0].mxu0
    %v2892 = vadd.f32 %v2849, %v2891
    %v2893 = vpop.f32.mrb[0].mxu0
    %v2894 = vadd.f32 %v2851, %v2893
    %v2895 = vpop.f32.mrb[0].mxu0
    %v2896 = vadd.f32 %v2853, %v2895
    %2897 = vdwg.mxu0
    %2898 = vmatprep.subr.bf16.mxu0 %v2217
    %2899 = vmatpush1.bf16.msra.mxu0 %v2216
    %2900 = vmatprep.subr.bf16.mxu0 %v2221
    %2901 = vmatpush1.bf16.msra.mxu0 %v2220
    %2902 = vmatprep.subr.bf16.mxu0 %v2225
    %2903 = vmatpush1.bf16.msra.mxu0 %v2224
    %2904 = vmatprep.subr.bf16.mxu0 %v2229
    %2905 = vmatpush1.bf16.msra.mxu0 %v2228
    %2906 = vmatprep.subr.bf16.mxu0 %v2233
    %2907 = vmatpush1.bf16.msra.mxu0 %v2232
    %2908 = vmatprep.subr.bf16.mxu0 %v2237
    %2909 = vmatpush1.bf16.msra.mxu0 %v2236
    %2910 = vmatprep.subr.bf16.mxu0 %v2241
    %2911 = vmatpush1.bf16.msra.mxu0 %v2240
    %2912 = vmatprep.subr.bf16.mxu0 %v2245
    %2913 = vmatpush1.bf16.msra.mxu0 %v2244
    %2914 = vmatprep.subr.bf16.mxu0 %v2249
    %2915 = vmatpush1.bf16.msra.mxu0 %v2248
    %2916 = vmatprep.subr.bf16.mxu0 %v2253
    %2917 = vmatpush1.bf16.msra.mxu0 %v2252
    %2918 = vmatprep.subr.bf16.mxu0 %v2257
    %2919 = vmatpush1.bf16.msra.mxu0 %v2256
    %2920 = vmatprep.subr.bf16.mxu0 %v2261
    %2921 = vmatpush1.bf16.msra.mxu0 %v2260
    %2922 = vmatprep.subr.bf16.mxu0 %v2265
    %2923 = vmatpush1.bf16.msra.mxu0 %v2264
    %2924 = vmatprep.subr.bf16.mxu0 %v2269
    %2925 = vmatpush1.bf16.msra.mxu0 %v2268
    %2926 = vmatprep.subr.bf16.mxu0 %v2273
    %2927 = vmatpush1.bf16.msra.mxu0 %v2272
    %2928 = vmatprep.subr.bf16.mxu0 %v2277
    %2929 = vmatpush1.bf16.msra.mxu0 %v2276
    %2930 = vmatprep.mubr.bf16.mxu0 %v1161
    %2931 = vmatmul.mubr.bf16.gmra.mrb[0].mxu0 %v1160
    %v2932 = vpop.f32.mrb[0].mxu0
    %v2933 = vadd.f32 %v1437, %v2932
    %v2934 = vpop.f32.mrb[0].mxu0
    %v2935 = vadd.f32 %v1441, %v2934
    %v2936 = vpop.f32.mrb[0].mxu0
    %v2937 = vadd.f32 %v1437, %v2936
    %v2938 = vpop.f32.mrb[0].mxu0
    %v2939 = vadd.f32 %v1441, %v2938
    %2940 = vdwg.mxu0
    %2941 = vmatprep.subr.bf16.mxu0 %v2281
    %2942 = vmatpush1.bf16.msra.mxu0 %v2280
    %2943 = vmatprep.subr.bf16.mxu0 %v2285
    %2944 = vmatpush1.bf16.msra.mxu0 %v2284
    %2945 = vmatprep.subr.bf16.mxu0 %v2289
    %2946 = vmatpush1.bf16.msra.mxu0 %v2288
    %2947 = vmatprep.subr.bf16.mxu0 %v2293
    %2948 = vmatpush1.bf16.msra.mxu0 %v2292
    %2949 = vmatprep.subr.bf16.mxu0 %v2297
    %2950 = vmatpush1.bf16.msra.mxu0 %v2296
    %2951 = vmatprep.subr.bf16.mxu0 %v2301
    %2952 = vmatpush1.bf16.msra.mxu0 %v2300
    %2953 = vmatprep.subr.bf16.mxu0 %v2305
    %2954 = vmatpush1.bf16.msra.mxu0 %v2304
    %2955 = vmatprep.subr.bf16.mxu0 %v2309
    %2956 = vmatpush1.bf16.msra.mxu0 %v2308
    %2957 = vmatprep.subr.bf16.mxu0 %v2313
    %2958 = vmatpush1.bf16.msra.mxu0 %v2312
    %2959 = vmatprep.subr.bf16.mxu0 %v2317
    %2960 = vmatpush1.bf16.msra.mxu0 %v2316
    %2961 = vmatprep.subr.bf16.mxu0 %v2321
    %2962 = vmatpush1.bf16.msra.mxu0 %v2320
    %2963 = vmatprep.subr.bf16.mxu0 %v2325
    %2964 = vmatpush1.bf16.msra.mxu0 %v2324
    %2965 = vmatprep.subr.bf16.mxu0 %v2329
    %2966 = vmatpush1.bf16.msra.mxu0 %v2328
    %2967 = vmatprep.subr.bf16.mxu0 %v2333
    %2968 = vmatpush1.bf16.msra.mxu0 %v2332
    %2969 = vmatprep.subr.bf16.mxu0 %v2337
    %2970 = vmatpush1.bf16.msra.mxu0 %v2336
    %2971 = vmatprep.subr.bf16.mxu0 %v2341
    %2972 = vmatpush1.bf16.msra.mxu0 %v2340
    %2973 = vmatprep.mubr.bf16.mxu0 %v1163
    %2974 = vmatmul.mubr.bf16.gmra.mrb[0].mxu0 %v1162
    %v2975 = vpop.f32.mrb[0].mxu0
    %v2976 = vadd.f32 %v2933, %v2975
    %v2977 = vpop.f32.mrb[0].mxu0
    %v2978 = vadd.f32 %v2935, %v2977
    %v2979 = vpop.f32.mrb[0].mxu0
    %v2980 = vadd.f32 %v2937, %v2979
    %v2981 = vpop.f32.mrb[0].mxu0
    %v2982 = vadd.f32 %v2939, %v2981
    %2983 = vdwg.mxu0
    %2984 = vmatprep.subr.bf16.mxu0 %v2345
    %2985 = vmatpush1.bf16.msra.mxu0 %v2344
    %2986 = vmatprep.subr.bf16.mxu0 %v2349
    %2987 = vmatpush1.bf16.msra.mxu0 %v2348
    %2988 = vmatprep.subr.bf16.mxu0 %v2353
    %2989 = vmatpush1.bf16.msra.mxu0 %v2352
    %2990 = vmatprep.subr.bf16.mxu0 %v2357
    %2991 = vmatpush1.bf16.msra.mxu0 %v2356
    %2992 = vmatprep.subr.bf16.mxu0 %v2361
    %2993 = vmatpush1.bf16.msra.mxu0 %v2360
    %2994 = vmatprep.subr.bf16.mxu0 %v2365
    %2995 = vmatpush1.bf16.msra.mxu0 %v2364
    %2996 = vmatprep.subr.bf16.mxu0 %v2369
    %2997 = vmatpush1.bf16.msra.mxu0 %v2368
    %2998 = vmatprep.subr.bf16.mxu0 %v2373
    %2999 = vmatpush1.bf16.msra.mxu0 %v2372
    %3000 = vmatprep.subr.bf16.mxu0 %v2377
    %3001 = vmatpush1.bf16.msra.mxu0 %v2376
    %3002 = vmatprep.subr.bf16.mxu0 %v2381
    %3003 = vmatpush1.bf16.msra.mxu0 %v2380
    %3004 = vmatprep.subr.bf16.mxu0 %v2385
    %3005 = vmatpush1.bf16.msra.mxu0 %v2384
    %3006 = vmatprep.subr.bf16.mxu0 %v2389
    %3007 = vmatpush1.bf16.msra.mxu0 %v2388
    %3008 = vmatprep.subr.bf16.mxu0 %v2393
    %3009 = vmatpush1.bf16.msra.mxu0 %v2392
    %3010 = vmatprep.subr.bf16.mxu0 %v2397
    %3011 = vmatpush1.bf16.msra.mxu0 %v2396
    %3012 = vmatprep.subr.bf16.mxu0 %v2401
    %3013 = vmatpush1.bf16.msra.mxu0 %v2400
    %3014 = vmatprep.subr.bf16.mxu0 %v2405
    %3015 = vmatpush1.bf16.msra.mxu0 %v2404
    %3016 = vmatprep.mubr.bf16.mxu0 %v1165
    %3017 = vmatmul.mubr.bf16.gmra.mrb[0].mxu0 %v1164
    %v3018 = vpop.f32.mrb[0].mxu0
    %v3019 = vadd.f32 %v2976, %v3018
    %v3020 = vpop.f32.mrb[0].mxu0
    %v3021 = vadd.f32 %v2978, %v3020
    %v3022 = vpop.f32.mrb[0].mxu0
    %v3023 = vadd.f32 %v2980, %v3022
    %v3024 = vpop.f32.mrb[0].mxu0
    %v3025 = vadd.f32 %v2982, %v3024
    %3026 = vdwg.mxu0
    %3027 = vmatprep.subr.bf16.mxu0 %v2409
    %3028 = vmatpush1.bf16.msra.mxu0 %v2408
    %3029 = vmatprep.subr.bf16.mxu0 %v2413
    %3030 = vmatpush1.bf16.msra.mxu0 %v2412
    %3031 = vmatprep.subr.bf16.mxu0 %v2417
    %3032 = vmatpush1.bf16.msra.mxu0 %v2416
    %3033 = vmatprep.subr.bf16.mxu0 %v2421
    %3034 = vmatpush1.bf16.msra.mxu0 %v2420
    %3035 = vmatprep.subr.bf16.mxu0 %v2425
    %3036 = vmatpush1.bf16.msra.mxu0 %v2424
    %3037 = vmatprep.subr.bf16.mxu0 %v2429
    %3038 = vmatpush1.bf16.msra.mxu0 %v2428
    %3039 = vmatprep.subr.bf16.mxu0 %v2433
    %3040 = vmatpush1.bf16.msra.mxu0 %v2432
    %3041 = vmatprep.subr.bf16.mxu0 %v2437
    %3042 = vmatpush1.bf16.msra.mxu0 %v2436
    %3043 = vmatprep.subr.bf16.mxu0 %v2441
    %3044 = vmatpush1.bf16.msra.mxu0 %v2440
    %3045 = vmatprep.subr.bf16.mxu0 %v2445
    %3046 = vmatpush1.bf16.msra.mxu0 %v2444
    %3047 = vmatprep.subr.bf16.mxu0 %v2449
    %3048 = vmatpush1.bf16.msra.mxu0 %v2448
    %3049 = vmatprep.subr.bf16.mxu0 %v2453
    %3050 = vmatpush1.bf16.msra.mxu0 %v2452
    %3051 = vmatprep.subr.bf16.mxu0 %v2457
    %3052 = vmatpush1.bf16.msra.mxu0 %v2456
    %3053 = vmatprep.subr.bf16.mxu0 %v2461
    %3054 = vmatpush1.bf16.msra.mxu0 %v2460
    %3055 = vmatprep.subr.bf16.mxu0 %v2465
    %3056 = vmatpush1.bf16.msra.mxu0 %v2464
    %3057 = vmatprep.subr.bf16.mxu0 %v2469
    %3058 = vmatpush1.bf16.msra.mxu0 %v2468
    %3059 = vmatprep.mubr.bf16.mxu0 %v1167
    %3060 = vmatmul.mubr.bf16.gmra.mrb[0].mxu0 %v1166
    %v3061 = vpop.f32.mrb[0].mxu0
    %v3062 = vadd.f32 %v3019, %v3061
    %v3063 = vpop.f32.mrb[0].mxu0
    %v3064 = vadd.f32 %v3021, %v3063
    %v3065 = vpop.f32.mrb[0].mxu0
    %v3066 = vadd.f32 %v3023, %v3065
    %v3067 = vpop.f32.mrb[0].mxu0
    %v3068 = vadd.f32 %v3025, %v3067
    %3069 = vdwg.mxu0
    %v3070 = vmax.f32 %v2890, 0.0
    %v3071 = vmax.f32 %v2892, 0.0
    %v3072 = vmax.f32 %v3062, 0.0
    %v3073 = vmax.f32 %v3064, 0.0
    %v3074 = vmax.f32 %v2894, 0.0
    %v3075 = vmax.f32 %v2896, 0.0
    %v3076 = vmax.f32 %v3066, 0.0
    %v3077 = vmax.f32 %v3068, 0.0
    %v3078 = vpack.c.bf16 %v3074, %v3070
    %v3079 = vpack.c.bf16 %v3075, %v3071
    %v3080 = vpack.c.bf16 %v3076, %v3072
    %v3081 = vpack.c.bf16 %v3077, %v3073
    %v3082 = vld [vmem:[#allocation10] sm:$0xf]
    %v3083 = vld [vmem:[#allocation10 + $0x4] sm:$0xf]
    %v3084 = vld [vmem:[#allocation10 + $0x8] sm:$0xf]
    %v3085 = vld [vmem:[#allocation10 + $0xc] sm:$0xf]
    %v3086 = vld [vmem:[#allocation10 + $0x10] sm:$0xf]
    %v3087 = vld [vmem:[#allocation10 + $0x14] sm:$0xf]
    %v3088 = vld [vmem:[#allocation10 + $0x18] sm:$0xf]
    %v3089 = vld [vmem:[#allocation10 + $0x1c] sm:$0xf]
    %v3090 = vld [vmem:[#allocation10 + $0x20] sm:$0xf]
    %v3091 = vld [vmem:[#allocation10 + $0x24] sm:$0xf]
    %v3092 = vld [vmem:[#allocation10 + $0x28] sm:$0xf]
    %v3093 = vld [vmem:[#allocation10 + $0x2c] sm:$0xf]
    %v3094 = vld [vmem:[#allocation10 + $0x30] sm:$0xf]
    %v3095 = vld [vmem:[#allocation10 + $0x34] sm:$0xf]
    %v3096 = vld [vmem:[#allocation10 + $0x38] sm:$0xf]
    %v3097 = vld [vmem:[#allocation10 + $0x3c] sm:$0xf]
    %v3098 = vld [vmem:[#allocation10 + $0x40] sm:$0xf]
    %v3099 = vld [vmem:[#allocation10 + $0x44] sm:$0xf]
    %v3100 = vld [vmem:[#allocation10 + $0x48] sm:$0xf]
    %v3101 = vld [vmem:[#allocation10 + $0x4c] sm:$0xf]
    %v3102 = vld [vmem:[#allocation10 + $0x50] sm:$0xf]
    %v3103 = vld [vmem:[#allocation10 + $0x54] sm:$0xf]
    %v3104 = vld [vmem:[#allocation10 + $0x58] sm:$0xf]
    %v3105 = vld [vmem:[#allocation10 + $0x5c] sm:$0xf]
    %v3106 = vld [vmem:[#allocation10 + $0x60] sm:$0xf]
    %v3107 = vld [vmem:[#allocation10 + $0x64] sm:$0xf]
    %v3108 = vld [vmem:[#allocation10 + $0x68] sm:$0xf]
    %v3109 = vld [vmem:[#allocation10 + $0x6c] sm:$0xf]
    %v3110 = vld [vmem:[#allocation10 + $0x70] sm:$0xf]
    %v3111 = vld [vmem:[#allocation10 + $0x74] sm:$0xf]
    %v3112 = vld [vmem:[#allocation10 + $0x78] sm:$0xf]
    %v3113 = vld [vmem:[#allocation10 + $0x7c] sm:$0xf]
    %v3114 = vld [vmem:[#allocation10 + $0x80] sm:$0xf]
    %v3115 = vld [vmem:[#allocation10 + $0x84] sm:$0xf]
    %v3116 = vld [vmem:[#allocation10 + $0x88] sm:$0xf]
    %v3117 = vld [vmem:[#allocation10 + $0x8c] sm:$0xf]
    %v3118 = vld [vmem:[#allocation10 + $0x90] sm:$0xf]
    %v3119 = vld [vmem:[#allocation10 + $0x94] sm:$0xf]
    %v3120 = vld [vmem:[#allocation10 + $0x98] sm:$0xf]
    %v3121 = vld [vmem:[#allocation10 + $0x9c] sm:$0xf]
    %v3122 = vld [vmem:[#allocation10 + $0xa0] sm:$0xf]
    %v3123 = vld [vmem:[#allocation10 + $0xa4] sm:$0xf]
    %v3124 = vld [vmem:[#allocation10 + $0xa8] sm:$0xf]
    %v3125 = vld [vmem:[#allocation10 + $0xac] sm:$0xf]
    %v3126 = vld [vmem:[#allocation10 + $0xb0] sm:$0xf]
    %v3127 = vld [vmem:[#allocation10 + $0xb4] sm:$0xf]
    %v3128 = vld [vmem:[#allocation10 + $0xb8] sm:$0xf]
    %v3129 = vld [vmem:[#allocation10 + $0xbc] sm:$0xf]
    %v3130 = vld [vmem:[#allocation10 + $0xc0] sm:$0xf]
    %v3131 = vld [vmem:[#allocation10 + $0xc4] sm:$0xf]
    %v3132 = vld [vmem:[#allocation10 + $0xc8] sm:$0xf]
    %v3133 = vld [vmem:[#allocation10 + $0xcc] sm:$0xf]
    %v3134 = vld [vmem:[#allocation10 + $0xd0] sm:$0xf]
    %v3135 = vld [vmem:[#allocation10 + $0xd4] sm:$0xf]
    %v3136 = vld [vmem:[#allocation10 + $0xd8] sm:$0xf]
    %v3137 = vld [vmem:[#allocation10 + $0xdc] sm:$0xf]
    %v3138 = vld [vmem:[#allocation10 + $0xe0] sm:$0xf]
    %v3139 = vld [vmem:[#allocation10 + $0xe4] sm:$0xf]
    %v3140 = vld [vmem:[#allocation10 + $0xe8] sm:$0xf]
    %v3141 = vld [vmem:[#allocation10 + $0xec] sm:$0xf]
    %v3142 = vld [vmem:[#allocation10 + $0xf0] sm:$0xf]
    %v3143 = vld [vmem:[#allocation10 + $0xf4] sm:$0xf]
    %v3144 = vld [vmem:[#allocation10 + $0xf8] sm:$0xf]
    %v3145 = vld [vmem:[#allocation10 + $0xfc] sm:$0xf]
    %v3146 = vld [vmem:[%s6] sm:$0x1]
    %v3148 = vlaneseq
    %v3149 = vshrl.u32 %v3148, 7
    %v3150 = vsub.s32 0, %v3149
    %v3151 = vrot.slane %v3146, %v3150
    %v3217 = vunpack.c.l.b16 %v3082
    %v3218 = vunpack.c.l.b16 %v3083
    %v3219 = vunpack.c.l.b16 %v3084
    %v3220 = vunpack.c.l.b16 %v3085
    %v3221 = vunpack.c.l.b16 %v3086
    %v3222 = vunpack.c.l.b16 %v3087
    %v3223 = vunpack.c.l.b16 %v3088
    %v3224 = vunpack.c.l.b16 %v3089
    %v3225 = vunpack.c.l.b16 %v3090
    %v3226 = vunpack.c.l.b16 %v3091
    %v3227 = vunpack.c.l.b16 %v3092
    %v3228 = vunpack.c.l.b16 %v3093
    %v3229 = vunpack.c.l.b16 %v3094
    %v3230 = vunpack.c.l.b16 %v3095
    %v3231 = vunpack.c.l.b16 %v3096
    %v3232 = vunpack.c.l.b16 %v3097
    %v3233 = vunpack.c.l.b16 %v3098
    %v3234 = vunpack.c.l.b16 %v3099
    %v3235 = vunpack.c.l.b16 %v3100
    %v3236 = vunpack.c.l.b16 %v3101
    %v3237 = vunpack.c.l.b16 %v3102
    %v3238 = vunpack.c.l.b16 %v3103
    %v3239 = vunpack.c.l.b16 %v3104
    %v3240 = vunpack.c.l.b16 %v3105
    %v3241 = vunpack.c.l.b16 %v3106
    %v3242 = vunpack.c.l.b16 %v3107
    %v3243 = vunpack.c.l.b16 %v3108
    %v3244 = vunpack.c.l.b16 %v3109
    %v3245 = vunpack.c.l.b16 %v3110
    %v3246 = vunpack.c.l.b16 %v3111
    %v3247 = vunpack.c.l.b16 %v3112
    %v3248 = vunpack.c.l.b16 %v3113
    %v3249 = vunpack.c.l.b16 %v3114
    %v3250 = vunpack.c.l.b16 %v3115
    %v3251 = vunpack.c.l.b16 %v3116
    %v3252 = vunpack.c.l.b16 %v3117
    %v3253 = vunpack.c.l.b16 %v3118
    %v3254 = vunpack.c.l.b16 %v3119
    %v3255 = vunpack.c.l.b16 %v3120
    %v3256 = vunpack.c.l.b16 %v3121
    %v3257 = vunpack.c.l.b16 %v3122
    %v3258 = vunpack.c.l.b16 %v3123
    %v3259 = vunpack.c.l.b16 %v3124
    %v3260 = vunpack.c.l.b16 %v3125
    %v3261 = vunpack.c.l.b16 %v3126
    %v3262 = vunpack.c.l.b16 %v3127
    %v3263 = vunpack.c.l.b16 %v3128
    %v3264 = vunpack.c.l.b16 %v3129
    %v3265 = vunpack.c.l.b16 %v3130
    %v3266 = vunpack.c.l.b16 %v3131
    %v3267 = vunpack.c.l.b16 %v3132
    %v3268 = vunpack.c.l.b16 %v3133
    %v3269 = vunpack.c.l.b16 %v3134
    %v3270 = vunpack.c.l.b16 %v3135
    %v3271 = vunpack.c.l.b16 %v3136
    %v3272 = vunpack.c.l.b16 %v3137
    %v3273 = vunpack.c.l.b16 %v3138
    %v3274 = vunpack.c.l.b16 %v3139
    %v3275 = vunpack.c.l.b16 %v3140
    %v3276 = vunpack.c.l.b16 %v3141
    %v3277 = vunpack.c.l.b16 %v3142
    %v3278 = vunpack.c.l.b16 %v3143
    %v3279 = vunpack.c.l.b16 %v3144
    %v3280 = vunpack.c.l.b16 %v3145
    %v3281 = vpack.c.b16 %v3218, %v3217
    %v3282 = vpack.c.b16 %v3220, %v3219
    %v3283 = vpack.c.b16 %v3222, %v3221
    %v3284 = vpack.c.b16 %v3224, %v3223
    %v3285 = vpack.c.b16 %v3226, %v3225
    %v3286 = vpack.c.b16 %v3228, %v3227
    %v3287 = vpack.c.b16 %v3230, %v3229
    %v3288 = vpack.c.b16 %v3232, %v3231
    %v3289 = vpack.c.b16 %v3234, %v3233
    %v3290 = vpack.c.b16 %v3236, %v3235
    %v3291 = vpack.c.b16 %v3238, %v3237
    %v3292 = vpack.c.b16 %v3240, %v3239
    %v3293 = vpack.c.b16 %v3242, %v3241
    %v3294 = vpack.c.b16 %v3244, %v3243
    %v3295 = vpack.c.b16 %v3246, %v3245
    %v3296 = vpack.c.b16 %v3248, %v3247
    %v3297 = vpack.c.b16 %v3250, %v3249
    %v3298 = vpack.c.b16 %v3252, %v3251
    %v3299 = vpack.c.b16 %v3254, %v3253
    %v3300 = vpack.c.b16 %v3256, %v3255
    %v3301 = vpack.c.b16 %v3258, %v3257
    %v3302 = vpack.c.b16 %v3260, %v3259
    %v3303 = vpack.c.b16 %v3262, %v3261
    %v3304 = vpack.c.b16 %v3264, %v3263
    %v3305 = vpack.c.b16 %v3266, %v3265
    %v3306 = vpack.c.b16 %v3268, %v3267
    %v3307 = vpack.c.b16 %v3270, %v3269
    %v3308 = vpack.c.b16 %v3272, %v3271
    %v3309 = vpack.c.b16 %v3274, %v3273
    %v3310 = vpack.c.b16 %v3276, %v3275
    %v3311 = vpack.c.b16 %v3278, %v3277
    %v3312 = vpack.c.b16 %v3280, %v3279
    %3345 = vmatprep.subr.bf16.mxu0 0
    %3346 = vmatpush1.bf16.msra.mxu0 %v3281
    %3347 = vmatprep.subr.bf16.mxu0 0
    %3348 = vmatpush1.bf16.msra.mxu0 %v3282
    %3349 = vmatprep.subr.bf16.mxu0 0
    %3350 = vmatpush1.bf16.msra.mxu0 %v3283
    %3351 = vmatprep.subr.bf16.mxu0 0
    %3352 = vmatpush1.bf16.msra.mxu0 %v3284
    %3353 = vmatprep.subr.bf16.mxu0 0
    %3354 = vmatpush1.bf16.msra.mxu0 %v3285
    %3355 = vmatprep.subr.bf16.mxu0 0
    %3356 = vmatpush1.bf16.msra.mxu0 %v3286
    %3357 = vmatprep.subr.bf16.mxu0 0
    %3358 = vmatpush1.bf16.msra.mxu0 %v3287
    %3359 = vmatprep.subr.bf16.mxu0 0
    %3360 = vmatpush1.bf16.msra.mxu0 %v3288
    %3361 = vmatprep.subr.bf16.mxu0 0
    %3362 = vmatpush1.bf16.msra.mxu0 %v3289
    %3363 = vmatprep.subr.bf16.mxu0 0
    %3364 = vmatpush1.bf16.msra.mxu0 %v3290
    %3365 = vmatprep.subr.bf16.mxu0 0
    %3366 = vmatpush1.bf16.msra.mxu0 %v3291
    %3367 = vmatprep.subr.bf16.mxu0 0
    %3368 = vmatpush1.bf16.msra.mxu0 %v3292
    %3369 = vmatprep.subr.bf16.mxu0 0
    %3370 = vmatpush1.bf16.msra.mxu0 %v3293
    %3371 = vmatprep.subr.bf16.mxu0 0
    %3372 = vmatpush1.bf16.msra.mxu0 %v3294
    %3373 = vmatprep.subr.bf16.mxu0 0
    %3374 = vmatpush1.bf16.msra.mxu0 %v3295
    %3375 = vmatprep.subr.bf16.mxu0 0
    %3376 = vmatpush1.bf16.msra.mxu0 %v3296
    %3377 = vmatprep.mubr.bf16.mxu0 %v3079
    %3378 = vmatmul.mubr.bf16.gmra.mrb[0].mxu0 %v3078
    %v3379 = vpop.f32.mrb[0].mxu0
    %v3380 = vadd.f32 %v3151, %v3379
    %v3381 = vpop.f32.mrb[0].mxu0
    %v3382 = vpop.f32.mrb[0].mxu0
    %v3383 = vadd.f32 %v3151, %v3382
    %v3384 = vpop.f32.mrb[0].mxu0
    %3385 = vdwg.mxu0
    %3386 = vmatprep.subr.bf16.mxu0 0
    %3387 = vmatpush1.bf16.msra.mxu0 %v3297
    %3388 = vmatprep.subr.bf16.mxu0 0
    %3389 = vmatpush1.bf16.msra.mxu0 %v3298
    %3390 = vmatprep.subr.bf16.mxu0 0
    %3391 = vmatpush1.bf16.msra.mxu0 %v3299
    %3392 = vmatprep.subr.bf16.mxu0 0
    %3393 = vmatpush1.bf16.msra.mxu0 %v3300
    %3394 = vmatprep.subr.bf16.mxu0 0
    %3395 = vmatpush1.bf16.msra.mxu0 %v3301
    %3396 = vmatprep.subr.bf16.mxu0 0
    %3397 = vmatpush1.bf16.msra.mxu0 %v3302
    %3398 = vmatprep.subr.bf16.mxu0 0
    %3399 = vmatpush1.bf16.msra.mxu0 %v3303
    %3400 = vmatprep.subr.bf16.mxu0 0
    %3401 = vmatpush1.bf16.msra.mxu0 %v3304
    %3402 = vmatprep.subr.bf16.mxu0 0
    %3403 = vmatpush1.bf16.msra.mxu0 %v3305
    %3404 = vmatprep.subr.bf16.mxu0 0
    %3405 = vmatpush1.bf16.msra.mxu0 %v3306
    %3406 = vmatprep.subr.bf16.mxu0 0
    %3407 = vmatpush1.bf16.msra.mxu0 %v3307
    %3408 = vmatprep.subr.bf16.mxu0 0
    %3409 = vmatpush1.bf16.msra.mxu0 %v3308
    %3410 = vmatprep.subr.bf16.mxu0 0
    %3411 = vmatpush1.bf16.msra.mxu0 %v3309
    %3412 = vmatprep.subr.bf16.mxu0 0
    %3413 = vmatpush1.bf16.msra.mxu0 %v3310
    %3414 = vmatprep.subr.bf16.mxu0 0
    %3415 = vmatpush1.bf16.msra.mxu0 %v3311
    %3416 = vmatprep.subr.bf16.mxu0 0
    %3417 = vmatpush1.bf16.msra.mxu0 %v3312
    %3418 = vmatprep.mubr.bf16.mxu0 %v3081
    %3419 = vmatmul.mubr.bf16.gmra.mrb[0].mxu0 %v3080
    %v3420 = vpop.f32.mrb[0].mxu0
    %v3421 = vadd.f32 %v3380, %v3420
    %v3422 = vpop.f32.mrb[0].mxu0
    %v3423 = vpop.f32.mrb[0].mxu0
    %v3424 = vadd.f32 %v3383, %v3423
    %v3425 = vpop.f32.mrb[0].mxu0
    %3426 = vdwg.mxu0
    %3427 = vst [vmem:[#allocation17] sm:$0xff] %v3421
    %3428 = vst [vmem:[#allocation17 + $0x8] sm:$0xff] %v3424
    %v3429 = vpack.c.bf16 %v3424, %v3421
    %v3430 = vld [vmem:[#allocation11] sm:$0xff]
    %v3431 = vld [vmem:[#allocation11 + $0x8] sm:$0xff]
    %v3432 = vld [vmem:[#allocation11 + $0x10] sm:$0xff]
    %v3433 = vld [vmem:[#allocation11 + $0x18] sm:$0xff]
    %v3434 = vld [vmem:[#allocation11 + $0x20] sm:$0xff]
    %v3435 = vld [vmem:[#allocation11 + $0x28] sm:$0xff]
    %v3436 = vld [vmem:[#allocation11 + $0x30] sm:$0xff]
    %v3437 = vld [vmem:[#allocation11 + $0x38] sm:$0xff]
    %v3438 = vld [vmem:[#allocation11 + $0x40] sm:$0xff]
    %v3439 = vld [vmem:[#allocation11 + $0x48] sm:$0xff]
    %v3440 = vld [vmem:[#allocation11 + $0x50] sm:$0xff]
    %v3441 = vld [vmem:[#allocation11 + $0x58] sm:$0xff]
    %v3442 = vld [vmem:[#allocation11 + $0x60] sm:$0xff]
    %v3443 = vld [vmem:[#allocation11 + $0x68] sm:$0xff]
    %v3444 = vld [vmem:[#allocation11 + $0x70] sm:$0xff]
    %v3445 = vld [vmem:[#allocation11 + $0x78] sm:$0xff]
    %v3446 = vld [vmem:[#allocation11 + $0x80] sm:$0xff]
    %v3447 = vld [vmem:[#allocation11 + $0x88] sm:$0xff]
    %v3448 = vld [vmem:[#allocation11 + $0x90] sm:$0xff]
    %v3449 = vld [vmem:[#allocation11 + $0x98] sm:$0xff]
    %v3450 = vld [vmem:[#allocation11 + $0xa0] sm:$0xff]
    %v3451 = vld [vmem:[#allocation11 + $0xa8] sm:$0xff]
    %v3452 = vld [vmem:[#allocation11 + $0xb0] sm:$0xff]
    %v3453 = vld [vmem:[#allocation11 + $0xb8] sm:$0xff]
    %v3454 = vld [vmem:[#allocation11 + $0xc0] sm:$0xff]
    %v3455 = vld [vmem:[#allocation11 + $0xc8] sm:$0xff]
    %v3456 = vld [vmem:[#allocation11 + $0xd0] sm:$0xff]
    %v3457 = vld [vmem:[#allocation11 + $0xd8] sm:$0xff]
    %v3458 = vld [vmem:[#allocation11 + $0xe0] sm:$0xff]
    %v3459 = vld [vmem:[#allocation11 + $0xe8] sm:$0xff]
    %v3460 = vld [vmem:[#allocation11 + $0xf0] sm:$0xff]
    %v3461 = vld [vmem:[#allocation11 + $0xf8] sm:$0xff]
    %v3462 = vld [vmem:[%s8] sm:$0xf]
    %v3464 = vlaneseq
    %v3465 = vshrl.u32 %v3464, 7
    %v3466 = vsub.s32 0, %v3465
    %v3467 = vrot.slane %v3462, %v3466
    %v3468 = vlaneseq
    %v3469 = vshrl.u32 %v3468, 7
    %v3470 = vsub.s32 1, %v3469
    %v3471 = vrot.slane %v3462, %v3470
    %v3472 = vlaneseq
    %v3473 = vshrl.u32 %v3472, 7
    %v3474 = vsub.s32 2, %v3473
    %v3475 = vrot.slane %v3462, %v3474
    %v3476 = vlaneseq
    %v3477 = vshrl.u32 %v3476, 7
    %v3478 = vsub.s32 3, %v3477
    %v3479 = vrot.slane %v3462, %v3478
    %v3516 = vunpack.c.l.b16 %v3430
    %v3517 = vunpack.c.h.b16 %v3430
    %v3518 = vunpack.c.l.b16 %v3431
    %v3519 = vunpack.c.h.b16 %v3431
    %v3520 = vunpack.c.l.b16 %v3432
    %v3521 = vunpack.c.h.b16 %v3432
    %v3522 = vunpack.c.l.b16 %v3433
    %v3523 = vunpack.c.h.b16 %v3433
    %v3524 = vunpack.c.l.b16 %v3434
    %v3525 = vunpack.c.h.b16 %v3434
    %v3526 = vunpack.c.l.b16 %v3435
    %v3527 = vunpack.c.h.b16 %v3435
    %v3528 = vunpack.c.l.b16 %v3436
    %v3529 = vunpack.c.h.b16 %v3436
    %v3530 = vunpack.c.l.b16 %v3437
    %v3531 = vunpack.c.h.b16 %v3437
    %v3532 = vunpack.c.l.b16 %v3438
    %v3533 = vunpack.c.h.b16 %v3438
    %v3534 = vunpack.c.l.b16 %v3439
    %v3535 = vunpack.c.h.b16 %v3439
    %v3536 = vunpack.c.l.b16 %v3440
    %v3537 = vunpack.c.h.b16 %v3440
    %v3538 = vunpack.c.l.b16 %v3441
    %v3539 = vunpack.c.h.b16 %v3441
    %v3540 = vunpack.c.l.b16 %v3442
    %v3541 = vunpack.c.h.b16 %v3442
    %v3542 = vunpack.c.l.b16 %v3443
    %v3543 = vunpack.c.h.b16 %v3443
    %v3544 = vunpack.c.l.b16 %v3444
    %v3545 = vunpack.c.h.b16 %v3444
    %v3546 = vunpack.c.l.b16 %v3445
    %v3547 = vunpack.c.h.b16 %v3445
    %v3548 = vunpack.c.l.b16 %v3446
    %v3549 = vunpack.c.h.b16 %v3446
    %v3550 = vunpack.c.l.b16 %v3447
    %v3551 = vunpack.c.h.b16 %v3447
    %v3552 = vunpack.c.l.b16 %v3448
    %v3553 = vunpack.c.h.b16 %v3448
    %v3554 = vunpack.c.l.b16 %v3449
    %v3555 = vunpack.c.h.b16 %v3449
    %v3556 = vunpack.c.l.b16 %v3450
    %v3557 = vunpack.c.h.b16 %v3450
    %v3558 = vunpack.c.l.b16 %v3451
    %v3559 = vunpack.c.h.b16 %v3451
    %v3560 = vunpack.c.l.b16 %v3452
    %v3561 = vunpack.c.h.b16 %v3452
    %v3562 = vunpack.c.l.b16 %v3453
    %v3563 = vunpack.c.h.b16 %v3453
    %v3564 = vunpack.c.l.b16 %v3454
    %v3565 = vunpack.c.h.b16 %v3454
    %v3566 = vunpack.c.l.b16 %v3455
    %v3567 = vunpack.c.h.b16 %v3455
    %v3568 = vunpack.c.l.b16 %v3456
    %v3569 = vunpack.c.h.b16 %v3456
    %v3570 = vunpack.c.l.b16 %v3457
    %v3571 = vunpack.c.h.b16 %v3457
    %v3572 = vunpack.c.l.b16 %v3458
    %v3573 = vunpack.c.h.b16 %v3458
    %v3574 = vunpack.c.l.b16 %v3459
    %v3575 = vunpack.c.h.b16 %v3459
    %v3576 = vunpack.c.l.b16 %v3460
    %v3577 = vunpack.c.h.b16 %v3460
    %v3578 = vunpack.c.l.b16 %v3461
    %v3579 = vunpack.c.h.b16 %v3461
    %v3580 = vpack.c.b16 %v3520, %v3516
    %v3581 = vpack.c.b16 %v3521, %v3517
    %v3582 = vpack.c.b16 %v3522, %v3518
    %v3583 = vpack.c.b16 %v3523, %v3519
    %v3584 = vpack.c.b16 %v3528, %v3524
    %v3585 = vpack.c.b16 %v3529, %v3525
    %v3586 = vpack.c.b16 %v3530, %v3526
    %v3587 = vpack.c.b16 %v3531, %v3527
    %v3588 = vpack.c.b16 %v3536, %v3532
    %v3589 = vpack.c.b16 %v3537, %v3533
    %v3590 = vpack.c.b16 %v3538, %v3534
    %v3591 = vpack.c.b16 %v3539, %v3535
    %v3592 = vpack.c.b16 %v3544, %v3540
    %v3593 = vpack.c.b16 %v3545, %v3541
    %v3594 = vpack.c.b16 %v3546, %v3542
    %v3595 = vpack.c.b16 %v3547, %v3543
    %v3596 = vpack.c.b16 %v3552, %v3548
    %v3597 = vpack.c.b16 %v3553, %v3549
    %v3598 = vpack.c.b16 %v3554, %v3550
    %v3599 = vpack.c.b16 %v3555, %v3551
    %v3600 = vpack.c.b16 %v3560, %v3556
    %v3601 = vpack.c.b16 %v3561, %v3557
    %v3602 = vpack.c.b16 %v3562, %v3558
    %v3603 = vpack.c.b16 %v3563, %v3559
    %v3604 = vpack.c.b16 %v3568, %v3564
    %v3605 = vpack.c.b16 %v3569, %v3565
    %v3606 = vpack.c.b16 %v3570, %v3566
    %v3607 = vpack.c.b16 %v3571, %v3567
    %v3608 = vpack.c.b16 %v3576, %v3572
    %v3609 = vpack.c.b16 %v3577, %v3573
    %v3610 = vpack.c.b16 %v3578, %v3574
    %v3611 = vpack.c.b16 %v3579, %v3575
    %3644 = vmatprep.subr.bf16.mxu0 %v3581
    %3645 = vmatpush1.bf16.msra.mxu0 %v3580
    %3646 = vmatprep.subr.bf16.mxu0 %v3585
    %3647 = vmatpush1.bf16.msra.mxu0 %v3584
    %3648 = vmatprep.subr.bf16.mxu0 %v3589
    %3649 = vmatpush1.bf16.msra.mxu0 %v3588
    %3650 = vmatprep.subr.bf16.mxu0 %v3593
    %3651 = vmatpush1.bf16.msra.mxu0 %v3592
    %3652 = vmatprep.subr.bf16.mxu0 %v3597
    %3653 = vmatpush1.bf16.msra.mxu0 %v3596
    %3654 = vmatprep.subr.bf16.mxu0 %v3601
    %3655 = vmatpush1.bf16.msra.mxu0 %v3600
    %3656 = vmatprep.subr.bf16.mxu0 %v3605
    %3657 = vmatpush1.bf16.msra.mxu0 %v3604
    %3658 = vmatprep.subr.bf16.mxu0 %v3609
    %3659 = vmatpush1.bf16.msra.mxu0 %v3608
    %3660 = vmatprep.subr.bf16.mxu0 0
    %3661 = vmatpush1.bf16.msra.mxu0 0
    %3662 = vmatprep.subr.bf16.mxu0 0
    %3663 = vmatpush1.bf16.msra.mxu0 0
    %3664 = vmatprep.subr.bf16.mxu0 0
    %3665 = vmatpush1.bf16.msra.mxu0 0
    %3666 = vmatprep.subr.bf16.mxu0 0
    %3667 = vmatpush1.bf16.msra.mxu0 0
    %3668 = vmatprep.subr.bf16.mxu0 0
    %3669 = vmatpush1.bf16.msra.mxu0 0
    %3670 = vmatprep.subr.bf16.mxu0 0
    %3671 = vmatpush1.bf16.msra.mxu0 0
    %3672 = vmatprep.subr.bf16.mxu0 0
    %3673 = vmatpush1.bf16.msra.mxu0 0
    %3674 = vmatprep.subr.bf16.mxu0 0
    %3675 = vmatpush1.bf16.msra.mxu0 0
    %3676 = vmatprep.mubr.bf16.mxu0 0
    %3677 = vmatmul.mubr.bf16.gmra.mrb[0].mxu0 %v3429
    %v3678 = vpop.f32.mrb[0].mxu0
    %v3679 = vadd.f32 %v3467, %v3678
    %v3680 = vpop.f32.mrb[0].mxu0
    %v3681 = vadd.f32 %v3471, %v3680
    %v3682 = vpop.f32.mrb[0].mxu0
    %v3683 = vadd.f32 %v3467, %v3682
    %v3684 = vpop.f32.mrb[0].mxu0
    %v3685 = vadd.f32 %v3471, %v3684
    %3686 = vdwg.mxu0
    %3687 = vmatprep.subr.bf16.mxu0 %v3583
    %3688 = vmatpush1.bf16.msra.mxu0 %v3582
    %3689 = vmatprep.subr.bf16.mxu0 %v3587
    %3690 = vmatpush1.bf16.msra.mxu0 %v3586
    %3691 = vmatprep.subr.bf16.mxu0 %v3591
    %3692 = vmatpush1.bf16.msra.mxu0 %v3590
    %3693 = vmatprep.subr.bf16.mxu0 %v3595
    %3694 = vmatpush1.bf16.msra.mxu0 %v3594
    %3695 = vmatprep.subr.bf16.mxu0 %v3599
    %3696 = vmatpush1.bf16.msra.mxu0 %v3598
    %3697 = vmatprep.subr.bf16.mxu0 %v3603
    %3698 = vmatpush1.bf16.msra.mxu0 %v3602
    %3699 = vmatprep.subr.bf16.mxu0 %v3607
    %3700 = vmatpush1.bf16.msra.mxu0 %v3606
    %3701 = vmatprep.subr.bf16.mxu0 %v3611
    %3702 = vmatpush1.bf16.msra.mxu0 %v3610
    %3703 = vmatprep.subr.bf16.mxu0 0
    %3704 = vmatpush1.bf16.msra.mxu0 0
    %3705 = vmatprep.subr.bf16.mxu0 0
    %3706 = vmatpush1.bf16.msra.mxu0 0
    %3707 = vmatprep.subr.bf16.mxu0 0
    %3708 = vmatpush1.bf16.msra.mxu0 0
    %3709 = vmatprep.subr.bf16.mxu0 0
    %3710 = vmatpush1.bf16.msra.mxu0 0
    %3711 = vmatprep.subr.bf16.mxu0 0
    %3712 = vmatpush1.bf16.msra.mxu0 0
    %3713 = vmatprep.subr.bf16.mxu0 0
    %3714 = vmatpush1.bf16.msra.mxu0 0
    %3715 = vmatprep.subr.bf16.mxu0 0
    %3716 = vmatpush1.bf16.msra.mxu0 0
    %3717 = vmatprep.subr.bf16.mxu0 0
    %3718 = vmatpush1.bf16.msra.mxu0 0
    %3719 = vmatprep.mubr.bf16.mxu0 0
    %3720 = vmatmul.mubr.bf16.gmra.mrb[0].mxu0 %v3429
    %v3721 = vpop.f32.mrb[0].mxu0
    %v3722 = vadd.f32 %v3475, %v3721
    %v3723 = vpop.f32.mrb[0].mxu0
    %v3724 = vadd.f32 %v3479, %v3723
    %v3725 = vpop.f32.mrb[0].mxu0
    %v3726 = vadd.f32 %v3475, %v3725
    %v3727 = vpop.f32.mrb[0].mxu0
    %v3728 = vadd.f32 %v3479, %v3727
    %3729 = vdwg.mxu0
    %v3730 = vmax.f32 %v3679, 0.0
    %v3731 = vmax.f32 %v3681, 0.0
    %v3732 = vmax.f32 %v3722, 0.0
    %v3733 = vmax.f32 %v3724, 0.0
    %v3734 = vmax.f32 %v3683, 0.0
    %v3735 = vmax.f32 %v3685, 0.0
    %v3736 = vmax.f32 %v3726, 0.0
    %v3737 = vmax.f32 %v3728, 0.0
    %v3738 = vpack.c.bf16 %v3734, %v3730
    %v3739 = vpack.c.bf16 %v3735, %v3731
    %v3740 = vpack.c.bf16 %v3736, %v3732
    %v3741 = vpack.c.bf16 %v3737, %v3733
    %v3742 = vld [vmem:[#allocation13] sm:$0xff]
    %v3743 = vld [vmem:[#allocation13 + $0x8] sm:$0xff]
    %v3744 = vld [vmem:[#allocation13 + $0x10] sm:$0xff]
    %v3745 = vld [vmem:[#allocation13 + $0x18] sm:$0xff]
    %v3746 = vld [vmem:[#allocation13 + $0x20] sm:$0xff]
    %v3747 = vld [vmem:[#allocation13 + $0x28] sm:$0xff]
    %v3748 = vld [vmem:[#allocation13 + $0x30] sm:$0xff]
    %v3749 = vld [vmem:[#allocation13 + $0x38] sm:$0xff]
    %v3750 = vld [vmem:[#allocation13 + $0x40] sm:$0xff]
    %v3751 = vld [vmem:[#allocation13 + $0x48] sm:$0xff]
    %v3752 = vld [vmem:[#allocation13 + $0x50] sm:$0xff]
    %v3753 = vld [vmem:[#allocation13 + $0x58] sm:$0xff]
    %v3754 = vld [vmem:[#allocation13 + $0x60] sm:$0xff]
    %v3755 = vld [vmem:[#allocation13 + $0x68] sm:$0xff]
    %v3756 = vld [vmem:[#allocation13 + $0x70] sm:$0xff]
    %v3757 = vld [vmem:[#allocation13 + $0x78] sm:$0xff]
    %v3758 = vld [vmem:[#allocation13 + $0x80] sm:$0xff]
    %v3759 = vld [vmem:[#allocation13 + $0x88] sm:$0xff]
    %v3760 = vld [vmem:[#allocation13 + $0x90] sm:$0xff]
    %v3761 = vld [vmem:[#allocation13 + $0x98] sm:$0xff]
    %v3762 = vld [vmem:[#allocation13 + $0xa0] sm:$0xff]
    %v3763 = vld [vmem:[#allocation13 + $0xa8] sm:$0xff]
    %v3764 = vld [vmem:[#allocation13 + $0xb0] sm:$0xff]
    %v3765 = vld [vmem:[#allocation13 + $0xb8] sm:$0xff]
    %v3766 = vld [vmem:[#allocation13 + $0xc0] sm:$0xff]
    %v3767 = vld [vmem:[#allocation13 + $0xc8] sm:$0xff]
    %v3768 = vld [vmem:[#allocation13 + $0xd0] sm:$0xff]
    %v3769 = vld [vmem:[#allocation13 + $0xd8] sm:$0xff]
    %v3770 = vld [vmem:[#allocation13 + $0xe0] sm:$0xff]
    %v3771 = vld [vmem:[#allocation13 + $0xe8] sm:$0xff]
    %v3772 = vld [vmem:[#allocation13 + $0xf0] sm:$0xff]
    %v3773 = vld [vmem:[#allocation13 + $0xf8] sm:$0xff]
    %v3774 = vld [vmem:[#allocation13 + $0x100] sm:$0xff]
    %v3775 = vld [vmem:[#allocation13 + $0x108] sm:$0xff]
    %v3776 = vld [vmem:[#allocation13 + $0x110] sm:$0xff]
    %v3777 = vld [vmem:[#allocation13 + $0x118] sm:$0xff]
    %v3778 = vld [vmem:[#allocation13 + $0x120] sm:$0xff]
    %v3779 = vld [vmem:[#allocation13 + $0x128] sm:$0xff]
    %v3780 = vld [vmem:[#allocation13 + $0x130] sm:$0xff]
    %v3781 = vld [vmem:[#allocation13 + $0x138] sm:$0xff]
    %v3782 = vld [vmem:[#allocation13 + $0x140] sm:$0xff]
    %v3783 = vld [vmem:[#allocation13 + $0x148] sm:$0xff]
    %v3784 = vld [vmem:[#allocation13 + $0x150] sm:$0xff]
    %v3785 = vld [vmem:[#allocation13 + $0x158] sm:$0xff]
    %v3786 = vld [vmem:[#allocation13 + $0x160] sm:$0xff]
    %v3787 = vld [vmem:[#allocation13 + $0x168] sm:$0xff]
    %v3788 = vld [vmem:[#allocation13 + $0x170] sm:$0xff]
    %v3789 = vld [vmem:[#allocation13 + $0x178] sm:$0xff]
    %v3790 = vld [vmem:[#allocation13 + $0x180] sm:$0xff]
    %v3791 = vld [vmem:[#allocation13 + $0x188] sm:$0xff]
    %v3792 = vld [vmem:[#allocation13 + $0x190] sm:$0xff]
    %v3793 = vld [vmem:[#allocation13 + $0x198] sm:$0xff]
    %v3794 = vld [vmem:[#allocation13 + $0x1a0] sm:$0xff]
    %v3795 = vld [vmem:[#allocation13 + $0x1a8] sm:$0xff]
    %v3796 = vld [vmem:[#allocation13 + $0x1b0] sm:$0xff]
    %v3797 = vld [vmem:[#allocation13 + $0x1b8] sm:$0xff]
    %v3798 = vld [vmem:[#allocation13 + $0x1c0] sm:$0xff]
    %v3799 = vld [vmem:[#allocation13 + $0x1c8] sm:$0xff]
    %v3800 = vld [vmem:[#allocation13 + $0x1d0] sm:$0xff]
    %v3801 = vld [vmem:[#allocation13 + $0x1d8] sm:$0xff]
    %v3802 = vld [vmem:[#allocation13 + $0x1e0] sm:$0xff]
    %v3803 = vld [vmem:[#allocation13 + $0x1e8] sm:$0xff]
    %v3804 = vld [vmem:[#allocation13 + $0x1f0] sm:$0xff]
    %v3805 = vld [vmem:[#allocation13 + $0x1f8] sm:$0xff]
    %v3806 = vld [vmem:[#allocation13 + $0x200] sm:$0xff]
    %v3807 = vld [vmem:[#allocation13 + $0x208] sm:$0xff]
    %v3808 = vld [vmem:[#allocation13 + $0x210] sm:$0xff]
    %v3809 = vld [vmem:[#allocation13 + $0x218] sm:$0xff]
    %v3810 = vld [vmem:[#allocation13 + $0x220] sm:$0xff]
    %v3811 = vld [vmem:[#allocation13 + $0x228] sm:$0xff]
    %v3812 = vld [vmem:[#allocation13 + $0x230] sm:$0xff]
    %v3813 = vld [vmem:[#allocation13 + $0x238] sm:$0xff]
    %v3814 = vld [vmem:[#allocation13 + $0x240] sm:$0xff]
    %v3815 = vld [vmem:[#allocation13 + $0x248] sm:$0xff]
    %v3816 = vld [vmem:[#allocation13 + $0x250] sm:$0xff]
    %v3817 = vld [vmem:[#allocation13 + $0x258] sm:$0xff]
    %v3818 = vld [vmem:[#allocation13 + $0x260] sm:$0xff]
    %v3819 = vld [vmem:[#allocation13 + $0x268] sm:$0xff]
    %v3820 = vld [vmem:[#allocation13 + $0x270] sm:$0xff]
    %v3821 = vld [vmem:[#allocation13 + $0x278] sm:$0xff]
    %v3822 = vld [vmem:[#allocation13 + $0x280] sm:$0xff]
    %v3823 = vld [vmem:[#allocation13 + $0x288] sm:$0xff]
    %v3824 = vld [vmem:[#allocation13 + $0x290] sm:$0xff]
    %v3825 = vld [vmem:[#allocation13 + $0x298] sm:$0xff]
    %v3826 = vld [vmem:[#allocation13 + $0x2a0] sm:$0xff]
    %v3827 = vld [vmem:[#allocation13 + $0x2a8] sm:$0xff]
    %v3828 = vld [vmem:[#allocation13 + $0x2b0] sm:$0xff]
    %v3829 = vld [vmem:[#allocation13 + $0x2b8] sm:$0xff]
    %v3830 = vld [vmem:[#allocation13 + $0x2c0] sm:$0xff]
    %v3831 = vld [vmem:[#allocation13 + $0x2c8] sm:$0xff]
    %v3832 = vld [vmem:[#allocation13 + $0x2d0] sm:$0xff]
    %v3833 = vld [vmem:[#allocation13 + $0x2d8] sm:$0xff]
    %v3834 = vld [vmem:[#allocation13 + $0x2e0] sm:$0xff]
    %v3835 = vld [vmem:[#allocation13 + $0x2e8] sm:$0xff]
    %v3836 = vld [vmem:[#allocation13 + $0x2f0] sm:$0xff]
    %v3837 = vld [vmem:[#allocation13 + $0x2f8] sm:$0xff]
    %v3838 = vld [vmem:[#allocation13 + $0x300] sm:$0xff]
    %v3839 = vld [vmem:[#allocation13 + $0x308] sm:$0xff]
    %v3840 = vld [vmem:[#allocation13 + $0x310] sm:$0xff]
    %v3841 = vld [vmem:[#allocation13 + $0x318] sm:$0xff]
    %v3842 = vld [vmem:[#allocation13 + $0x320] sm:$0xff]
    %v3843 = vld [vmem:[#allocation13 + $0x328] sm:$0xff]
    %v3844 = vld [vmem:[#allocation13 + $0x330] sm:$0xff]
    %v3845 = vld [vmem:[#allocation13 + $0x338] sm:$0xff]
    %v3846 = vld [vmem:[#allocation13 + $0x340] sm:$0xff]
    %v3847 = vld [vmem:[#allocation13 + $0x348] sm:$0xff]
    %v3848 = vld [vmem:[#allocation13 + $0x350] sm:$0xff]
    %v3849 = vld [vmem:[#allocation13 + $0x358] sm:$0xff]
    %v3850 = vld [vmem:[#allocation13 + $0x360] sm:$0xff]
    %v3851 = vld [vmem:[#allocation13 + $0x368] sm:$0xff]
    %v3852 = vld [vmem:[#allocation13 + $0x370] sm:$0xff]
    %v3853 = vld [vmem:[#allocation13 + $0x378] sm:$0xff]
    %v3854 = vld [vmem:[#allocation13 + $0x380] sm:$0xff]
    %v3855 = vld [vmem:[#allocation13 + $0x388] sm:$0xff]
    %v3856 = vld [vmem:[#allocation13 + $0x390] sm:$0xff]
    %v3857 = vld [vmem:[#allocation13 + $0x398] sm:$0xff]
    %v3858 = vld [vmem:[#allocation13 + $0x3a0] sm:$0xff]
    %v3859 = vld [vmem:[#allocation13 + $0x3a8] sm:$0xff]
    %v3860 = vld [vmem:[#allocation13 + $0x3b0] sm:$0xff]
    %v3861 = vld [vmem:[#allocation13 + $0x3b8] sm:$0xff]
    %v3862 = vld [vmem:[#allocation13 + $0x3c0] sm:$0xff]
    %v3863 = vld [vmem:[#allocation13 + $0x3c8] sm:$0xff]
    %v3864 = vld [vmem:[#allocation13 + $0x3d0] sm:$0xff]
    %v3865 = vld [vmem:[#allocation13 + $0x3d8] sm:$0xff]
    %v3866 = vld [vmem:[#allocation13 + $0x3e0] sm:$0xff]
    %v3867 = vld [vmem:[#allocation13 + $0x3e8] sm:$0xff]
    %v3868 = vld [vmem:[#allocation13 + $0x3f0] sm:$0xff]
    %v3869 = vld [vmem:[#allocation13 + $0x3f8] sm:$0xff]
    %v3870 = vld [vmem:[#allocation13 + $0x400] sm:$0xff]
    %v3871 = vld [vmem:[#allocation13 + $0x408] sm:$0xff]
    %v3872 = vld [vmem:[#allocation13 + $0x410] sm:$0xff]
    %v3873 = vld [vmem:[#allocation13 + $0x418] sm:$0xff]
    %v3874 = vld [vmem:[#allocation13 + $0x420] sm:$0xff]
    %v3875 = vld [vmem:[#allocation13 + $0x428] sm:$0xff]
    %v3876 = vld [vmem:[#allocation13 + $0x430] sm:$0xff]
    %v3877 = vld [vmem:[#allocation13 + $0x438] sm:$0xff]
    %v3878 = vld [vmem:[#allocation13 + $0x440] sm:$0xff]
    %v3879 = vld [vmem:[#allocation13 + $0x448] sm:$0xff]
    %v3880 = vld [vmem:[#allocation13 + $0x450] sm:$0xff]
    %v3881 = vld [vmem:[#allocation13 + $0x458] sm:$0xff]
    %v3882 = vld [vmem:[#allocation13 + $0x460] sm:$0xff]
    %v3883 = vld [vmem:[#allocation13 + $0x468] sm:$0xff]
    %v3884 = vld [vmem:[#allocation13 + $0x470] sm:$0xff]
    %v3885 = vld [vmem:[#allocation13 + $0x478] sm:$0xff]
    %v3886 = vld [vmem:[#allocation13 + $0x480] sm:$0xff]
    %v3887 = vld [vmem:[#allocation13 + $0x488] sm:$0xff]
    %v3888 = vld [vmem:[#allocation13 + $0x490] sm:$0xff]
    %v3889 = vld [vmem:[#allocation13 + $0x498] sm:$0xff]
    %v3890 = vld [vmem:[#allocation13 + $0x4a0] sm:$0xff]
    %v3891 = vld [vmem:[#allocation13 + $0x4a8] sm:$0xff]
    %v3892 = vld [vmem:[#allocation13 + $0x4b0] sm:$0xff]
    %v3893 = vld [vmem:[#allocation13 + $0x4b8] sm:$0xff]
    %v3894 = vld [vmem:[#allocation13 + $0x4c0] sm:$0xff]
    %v3895 = vld [vmem:[#allocation13 + $0x4c8] sm:$0xff]
    %v3896 = vld [vmem:[#allocation13 + $0x4d0] sm:$0xff]
    %v3897 = vld [vmem:[#allocation13 + $0x4d8] sm:$0xff]
    %v3898 = vld [vmem:[#allocation13 + $0x4e0] sm:$0xff]
    %v3899 = vld [vmem:[#allocation13 + $0x4e8] sm:$0xff]
    %v3900 = vld [vmem:[#allocation13 + $0x4f0] sm:$0xff]
    %v3901 = vld [vmem:[#allocation13 + $0x4f8] sm:$0xff]
    %v3902 = vld [vmem:[#allocation13 + $0x500] sm:$0xff]
    %v3903 = vld [vmem:[#allocation13 + $0x508] sm:$0xff]
    %v3904 = vld [vmem:[#allocation13 + $0x510] sm:$0xff]
    %v3905 = vld [vmem:[#allocation13 + $0x518] sm:$0xff]
    %v3906 = vld [vmem:[#allocation13 + $0x520] sm:$0xff]
    %v3907 = vld [vmem:[#allocation13 + $0x528] sm:$0xff]
    %v3908 = vld [vmem:[#allocation13 + $0x530] sm:$0xff]
    %v3909 = vld [vmem:[#allocation13 + $0x538] sm:$0xff]
    %v3910 = vld [vmem:[#allocation13 + $0x540] sm:$0xff]
    %v3911 = vld [vmem:[#allocation13 + $0x548] sm:$0xff]
    %v3912 = vld [vmem:[#allocation13 + $0x550] sm:$0xff]
    %v3913 = vld [vmem:[#allocation13 + $0x558] sm:$0xff]
    %v3914 = vld [vmem:[#allocation13 + $0x560] sm:$0xff]
    %v3915 = vld [vmem:[#allocation13 + $0x568] sm:$0xff]
    %v3916 = vld [vmem:[#allocation13 + $0x570] sm:$0xff]
    %v3917 = vld [vmem:[#allocation13 + $0x578] sm:$0xff]
    %v3918 = vld [vmem:[#allocation13 + $0x580] sm:$0xff]
    %v3919 = vld [vmem:[#allocation13 + $0x588] sm:$0xff]
    %v3920 = vld [vmem:[#allocation13 + $0x590] sm:$0xff]
    %v3921 = vld [vmem:[#allocation13 + $0x598] sm:$0xff]
    %v3922 = vld [vmem:[#allocation13 + $0x5a0] sm:$0xff]
    %v3923 = vld [vmem:[#allocation13 + $0x5a8] sm:$0xff]
    %v3924 = vld [vmem:[#allocation13 + $0x5b0] sm:$0xff]
    %v3925 = vld [vmem:[#allocation13 + $0x5b8] sm:$0xff]
    %v3926 = vld [vmem:[#allocation13 + $0x5c0] sm:$0xff]
    %v3927 = vld [vmem:[#allocation13 + $0x5c8] sm:$0xff]
    %v3928 = vld [vmem:[#allocation13 + $0x5d0] sm:$0xff]
    %v3929 = vld [vmem:[#allocation13 + $0x5d8] sm:$0xff]
    %v3930 = vld [vmem:[#allocation13 + $0x5e0] sm:$0xff]
    %v3931 = vld [vmem:[#allocation13 + $0x5e8] sm:$0xff]
    %v3932 = vld [vmem:[#allocation13 + $0x5f0] sm:$0xff]
    %v3933 = vld [vmem:[#allocation13 + $0x5f8] sm:$0xff]
    %v3934 = vld [vmem:[#allocation13 + $0x600] sm:$0xff]
    %v3935 = vld [vmem:[#allocation13 + $0x608] sm:$0xff]
    %v3936 = vld [vmem:[#allocation13 + $0x610] sm:$0xff]
    %v3937 = vld [vmem:[#allocation13 + $0x618] sm:$0xff]
    %v3938 = vld [vmem:[#allocation13 + $0x620] sm:$0xff]
    %v3939 = vld [vmem:[#allocation13 + $0x628] sm:$0xff]
    %v3940 = vld [vmem:[#allocation13 + $0x630] sm:$0xff]
    %v3941 = vld [vmem:[#allocation13 + $0x638] sm:$0xff]
    %v3942 = vld [vmem:[#allocation13 + $0x640] sm:$0xff]
    %v3943 = vld [vmem:[#allocation13 + $0x648] sm:$0xff]
    %v3944 = vld [vmem:[#allocation13 + $0x650] sm:$0xff]
    %v3945 = vld [vmem:[#allocation13 + $0x658] sm:$0xff]
    %v3946 = vld [vmem:[#allocation13 + $0x660] sm:$0xff]
    %v3947 = vld [vmem:[#allocation13 + $0x668] sm:$0xff]
    %v3948 = vld [vmem:[#allocation13 + $0x670] sm:$0xff]
    %v3949 = vld [vmem:[#allocation13 + $0x678] sm:$0xff]
    %v3950 = vld [vmem:[#allocation13 + $0x680] sm:$0xff]
    %v3951 = vld [vmem:[#allocation13 + $0x688] sm:$0xff]
    %v3952 = vld [vmem:[#allocation13 + $0x690] sm:$0xff]
    %v3953 = vld [vmem:[#allocation13 + $0x698] sm:$0xff]
    %v3954 = vld [vmem:[#allocation13 + $0x6a0] sm:$0xff]
    %v3955 = vld [vmem:[#allocation13 + $0x6a8] sm:$0xff]
    %v3956 = vld [vmem:[#allocation13 + $0x6b0] sm:$0xff]
    %v3957 = vld [vmem:[#allocation13 + $0x6b8] sm:$0xff]
    %v3958 = vld [vmem:[#allocation13 + $0x6c0] sm:$0xff]
    %v3959 = vld [vmem:[#allocation13 + $0x6c8] sm:$0xff]
    %v3960 = vld [vmem:[#allocation13 + $0x6d0] sm:$0xff]
    %v3961 = vld [vmem:[#allocation13 + $0x6d8] sm:$0xff]
    %v3962 = vld [vmem:[#allocation13 + $0x6e0] sm:$0xff]
    %v3963 = vld [vmem:[#allocation13 + $0x6e8] sm:$0xff]
    %v3964 = vld [vmem:[#allocation13 + $0x6f0] sm:$0xff]
    %v3965 = vld [vmem:[#allocation13 + $0x6f8] sm:$0xff]
    %v3966 = vld [vmem:[#allocation13 + $0x700] sm:$0xff]
    %v3967 = vld [vmem:[#allocation13 + $0x708] sm:$0xff]
    %v3968 = vld [vmem:[#allocation13 + $0x710] sm:$0xff]
    %v3969 = vld [vmem:[#allocation13 + $0x718] sm:$0xff]
    %v3970 = vld [vmem:[#allocation13 + $0x720] sm:$0xff]
    %v3971 = vld [vmem:[#allocation13 + $0x728] sm:$0xff]
    %v3972 = vld [vmem:[#allocation13 + $0x730] sm:$0xff]
    %v3973 = vld [vmem:[#allocation13 + $0x738] sm:$0xff]
    %v3974 = vld [vmem:[#allocation13 + $0x740] sm:$0xff]
    %v3975 = vld [vmem:[#allocation13 + $0x748] sm:$0xff]
    %v3976 = vld [vmem:[#allocation13 + $0x750] sm:$0xff]
    %v3977 = vld [vmem:[#allocation13 + $0x758] sm:$0xff]
    %v3978 = vld [vmem:[#allocation13 + $0x760] sm:$0xff]
    %v3979 = vld [vmem:[#allocation13 + $0x768] sm:$0xff]
    %v3980 = vld [vmem:[#allocation13 + $0x770] sm:$0xff]
    %v3981 = vld [vmem:[#allocation13 + $0x778] sm:$0xff]
    %v3982 = vld [vmem:[#allocation13 + $0x780] sm:$0xff]
    %v3983 = vld [vmem:[#allocation13 + $0x788] sm:$0xff]
    %v3984 = vld [vmem:[#allocation13 + $0x790] sm:$0xff]
    %v3985 = vld [vmem:[#allocation13 + $0x798] sm:$0xff]
    %v3986 = vld [vmem:[#allocation13 + $0x7a0] sm:$0xff]
    %v3987 = vld [vmem:[#allocation13 + $0x7a8] sm:$0xff]
    %v3988 = vld [vmem:[#allocation13 + $0x7b0] sm:$0xff]
    %v3989 = vld [vmem:[#allocation13 + $0x7b8] sm:$0xff]
    %v3990 = vld [vmem:[#allocation13 + $0x7c0] sm:$0xff]
    %v3991 = vld [vmem:[#allocation13 + $0x7c8] sm:$0xff]
    %v3992 = vld [vmem:[#allocation13 + $0x7d0] sm:$0xff]
    %v3993 = vld [vmem:[#allocation13 + $0x7d8] sm:$0xff]
    %v3994 = vld [vmem:[#allocation13 + $0x7e0] sm:$0xff]
    %v3995 = vld [vmem:[#allocation13 + $0x7e8] sm:$0xff]
    %v3996 = vld [vmem:[#allocation13 + $0x7f0] sm:$0xff]
    %v3997 = vld [vmem:[#allocation13 + $0x7f8] sm:$0xff]
    %v3998 = vld [vmem:[%s10] sm:$0xff]
    %v4000 = vlaneseq
    %v4001 = vshrl.u32 %v4000, 7
    %v4002 = vsub.s32 0, %v4001
    %v4003 = vrot.slane %v3998, %v4002
    %v4004 = vlaneseq
    %v4005 = vshrl.u32 %v4004, 7
    %v4006 = vsub.s32 1, %v4005
    %v4007 = vrot.slane %v3998, %v4006
    %v4008 = vlaneseq
    %v4009 = vshrl.u32 %v4008, 7
    %v4010 = vsub.s32 2, %v4009
    %v4011 = vrot.slane %v3998, %v4010
    %v4012 = vlaneseq
    %v4013 = vshrl.u32 %v4012, 7
    %v4014 = vsub.s32 3, %v4013
    %v4015 = vrot.slane %v3998, %v4014
    %v4016 = vlaneseq
    %v4017 = vshrl.u32 %v4016, 7
    %v4018 = vsub.s32 4, %v4017
    %v4019 = vrot.slane %v3998, %v4018
    %v4020 = vlaneseq
    %v4021 = vshrl.u32 %v4020, 7
    %v4022 = vsub.s32 5, %v4021
    %v4023 = vrot.slane %v3998, %v4022
    %v4024 = vlaneseq
    %v4025 = vshrl.u32 %v4024, 7
    %v4026 = vsub.s32 6, %v4025
    %v4027 = vrot.slane %v3998, %v4026
    %v4028 = vlaneseq
    %v4029 = vshrl.u32 %v4028, 7
    %v4030 = vsub.s32 7, %v4029
    %v4031 = vrot.slane %v3998, %v4030
    %v4296 = vunpack.c.l.b16 %v3742
    %v4297 = vunpack.c.h.b16 %v3742
    %v4298 = vunpack.c.l.b16 %v3743
    %v4299 = vunpack.c.h.b16 %v3743
    %v4300 = vunpack.c.l.b16 %v3744
    %v4301 = vunpack.c.h.b16 %v3744
    %v4302 = vunpack.c.l.b16 %v3745
    %v4303 = vunpack.c.h.b16 %v3745
    %v4304 = vunpack.c.l.b16 %v3746
    %v4305 = vunpack.c.h.b16 %v3746
    %v4306 = vunpack.c.l.b16 %v3747
    %v4307 = vunpack.c.h.b16 %v3747
    %v4308 = vunpack.c.l.b16 %v3748
    %v4309 = vunpack.c.h.b16 %v3748
    %v4310 = vunpack.c.l.b16 %v3749
    %v4311 = vunpack.c.h.b16 %v3749
    %v4312 = vunpack.c.l.b16 %v3750
    %v4313 = vunpack.c.h.b16 %v3750
    %v4314 = vunpack.c.l.b16 %v3751
    %v4315 = vunpack.c.h.b16 %v3751
    %v4316 = vunpack.c.l.b16 %v3752
    %v4317 = vunpack.c.h.b16 %v3752
    %v4318 = vunpack.c.l.b16 %v3753
    %v4319 = vunpack.c.h.b16 %v3753
    %v4320 = vunpack.c.l.b16 %v3754
    %v4321 = vunpack.c.h.b16 %v3754
    %v4322 = vunpack.c.l.b16 %v3755
    %v4323 = vunpack.c.h.b16 %v3755
    %v4324 = vunpack.c.l.b16 %v3756
    %v4325 = vunpack.c.h.b16 %v3756
    %v4326 = vunpack.c.l.b16 %v3757
    %v4327 = vunpack.c.h.b16 %v3757
    %v4328 = vunpack.c.l.b16 %v3758
    %v4329 = vunpack.c.h.b16 %v3758
    %v4330 = vunpack.c.l.b16 %v3759
    %v4331 = vunpack.c.h.b16 %v3759
    %v4332 = vunpack.c.l.b16 %v3760
    %v4333 = vunpack.c.h.b16 %v3760
    %v4334 = vunpack.c.l.b16 %v3761
    %v4335 = vunpack.c.h.b16 %v3761
    %v4336 = vunpack.c.l.b16 %v3762
    %v4337 = vunpack.c.h.b16 %v3762
    %v4338 = vunpack.c.l.b16 %v3763
    %v4339 = vunpack.c.h.b16 %v3763
    %v4340 = vunpack.c.l.b16 %v3764
    %v4341 = vunpack.c.h.b16 %v3764
    %v4342 = vunpack.c.l.b16 %v3765
    %v4343 = vunpack.c.h.b16 %v3765
    %v4344 = vunpack.c.l.b16 %v3766
    %v4345 = vunpack.c.h.b16 %v3766
    %v4346 = vunpack.c.l.b16 %v3767
    %v4347 = vunpack.c.h.b16 %v3767
    %v4348 = vunpack.c.l.b16 %v3768
    %v4349 = vunpack.c.h.b16 %v3768
    %v4350 = vunpack.c.l.b16 %v3769
    %v4351 = vunpack.c.h.b16 %v3769
    %v4352 = vunpack.c.l.b16 %v3770
    %v4353 = vunpack.c.h.b16 %v3770
    %v4354 = vunpack.c.l.b16 %v3771
    %v4355 = vunpack.c.h.b16 %v3771
    %v4356 = vunpack.c.l.b16 %v3772
    %v4357 = vunpack.c.h.b16 %v3772
    %v4358 = vunpack.c.l.b16 %v3773
    %v4359 = vunpack.c.h.b16 %v3773
    %v4360 = vunpack.c.l.b16 %v3774
    %v4361 = vunpack.c.h.b16 %v3774
    %v4362 = vunpack.c.l.b16 %v3775
    %v4363 = vunpack.c.h.b16 %v3775
    %v4364 = vunpack.c.l.b16 %v3776
    %v4365 = vunpack.c.h.b16 %v3776
    %v4366 = vunpack.c.l.b16 %v3777
    %v4367 = vunpack.c.h.b16 %v3777
    %v4368 = vunpack.c.l.b16 %v3778
    %v4369 = vunpack.c.h.b16 %v3778
    %v4370 = vunpack.c.l.b16 %v3779
    %v4371 = vunpack.c.h.b16 %v3779
    %v4372 = vunpack.c.l.b16 %v3780
    %v4373 = vunpack.c.h.b16 %v3780
    %v4374 = vunpack.c.l.b16 %v3781
    %v4375 = vunpack.c.h.b16 %v3781
    %v4376 = vunpack.c.l.b16 %v3782
    %v4377 = vunpack.c.h.b16 %v3782
    %v4378 = vunpack.c.l.b16 %v3783
    %v4379 = vunpack.c.h.b16 %v3783
    %v4380 = vunpack.c.l.b16 %v3784
    %v4381 = vunpack.c.h.b16 %v3784
    %v4382 = vunpack.c.l.b16 %v3785
    %v4383 = vunpack.c.h.b16 %v3785
    %v4384 = vunpack.c.l.b16 %v3786
    %v4385 = vunpack.c.h.b16 %v3786
    %v4386 = vunpack.c.l.b16 %v3787
    %v4387 = vunpack.c.h.b16 %v3787
    %v4388 = vunpack.c.l.b16 %v3788
    %v4389 = vunpack.c.h.b16 %v3788
    %v4390 = vunpack.c.l.b16 %v3789
    %v4391 = vunpack.c.h.b16 %v3789
    %v4392 = vunpack.c.l.b16 %v3790
    %v4393 = vunpack.c.h.b16 %v3790
    %v4394 = vunpack.c.l.b16 %v3791
    %v4395 = vunpack.c.h.b16 %v3791
    %v4396 = vunpack.c.l.b16 %v3792
    %v4397 = vunpack.c.h.b16 %v3792
    %v4398 = vunpack.c.l.b16 %v3793
    %v4399 = vunpack.c.h.b16 %v3793
    %v4400 = vunpack.c.l.b16 %v3794
    %v4401 = vunpack.c.h.b16 %v3794
    %v4402 = vunpack.c.l.b16 %v3795
    %v4403 = vunpack.c.h.b16 %v3795
    %v4404 = vunpack.c.l.b16 %v3796
    %v4405 = vunpack.c.h.b16 %v3796
    %v4406 = vunpack.c.l.b16 %v3797
    %v4407 = vunpack.c.h.b16 %v3797
    %v4408 = vunpack.c.l.b16 %v3798
    %v4409 = vunpack.c.h.b16 %v3798
    %v4410 = vunpack.c.l.b16 %v3799
    %v4411 = vunpack.c.h.b16 %v3799
    %v4412 = vunpack.c.l.b16 %v3800
    %v4413 = vunpack.c.h.b16 %v3800
    %v4414 = vunpack.c.l.b16 %v3801
    %v4415 = vunpack.c.h.b16 %v3801
    %v4416 = vunpack.c.l.b16 %v3802
    %v4417 = vunpack.c.h.b16 %v3802
    %v4418 = vunpack.c.l.b16 %v3803
    %v4419 = vunpack.c.h.b16 %v3803
    %v4420 = vunpack.c.l.b16 %v3804
    %v4421 = vunpack.c.h.b16 %v3804
    %v4422 = vunpack.c.l.b16 %v3805
    %v4423 = vunpack.c.h.b16 %v3805
    %v4424 = vunpack.c.l.b16 %v3806
    %v4425 = vunpack.c.h.b16 %v3806
    %v4426 = vunpack.c.l.b16 %v3807
    %v4427 = vunpack.c.h.b16 %v3807
    %v4428 = vunpack.c.l.b16 %v3808
    %v4429 = vunpack.c.h.b16 %v3808
    %v4430 = vunpack.c.l.b16 %v3809
    %v4431 = vunpack.c.h.b16 %v3809
    %v4432 = vunpack.c.l.b16 %v3810
    %v4433 = vunpack.c.h.b16 %v3810
    %v4434 = vunpack.c.l.b16 %v3811
    %v4435 = vunpack.c.h.b16 %v3811
    %v4436 = vunpack.c.l.b16 %v3812
    %v4437 = vunpack.c.h.b16 %v3812
    %v4438 = vunpack.c.l.b16 %v3813
    %v4439 = vunpack.c.h.b16 %v3813
    %v4440 = vunpack.c.l.b16 %v3814
    %v4441 = vunpack.c.h.b16 %v3814
    %v4442 = vunpack.c.l.b16 %v3815
    %v4443 = vunpack.c.h.b16 %v3815
    %v4444 = vunpack.c.l.b16 %v3816
    %v4445 = vunpack.c.h.b16 %v3816
    %v4446 = vunpack.c.l.b16 %v3817
    %v4447 = vunpack.c.h.b16 %v3817
    %v4448 = vunpack.c.l.b16 %v3818
    %v4449 = vunpack.c.h.b16 %v3818
    %v4450 = vunpack.c.l.b16 %v3819
    %v4451 = vunpack.c.h.b16 %v3819
    %v4452 = vunpack.c.l.b16 %v3820
    %v4453 = vunpack.c.h.b16 %v3820
    %v4454 = vunpack.c.l.b16 %v3821
    %v4455 = vunpack.c.h.b16 %v3821
    %v4456 = vunpack.c.l.b16 %v3822
    %v4457 = vunpack.c.h.b16 %v3822
    %v4458 = vunpack.c.l.b16 %v3823
    %v4459 = vunpack.c.h.b16 %v3823
    %v4460 = vunpack.c.l.b16 %v3824
    %v4461 = vunpack.c.h.b16 %v3824
    %v4462 = vunpack.c.l.b16 %v3825
    %v4463 = vunpack.c.h.b16 %v3825
    %v4464 = vunpack.c.l.b16 %v3826
    %v4465 = vunpack.c.h.b16 %v3826
    %v4466 = vunpack.c.l.b16 %v3827
    %v4467 = vunpack.c.h.b16 %v3827
    %v4468 = vunpack.c.l.b16 %v3828
    %v4469 = vunpack.c.h.b16 %v3828
    %v4470 = vunpack.c.l.b16 %v3829
    %v4471 = vunpack.c.h.b16 %v3829
    %v4472 = vunpack.c.l.b16 %v3830
    %v4473 = vunpack.c.h.b16 %v3830
    %v4474 = vunpack.c.l.b16 %v3831
    %v4475 = vunpack.c.h.b16 %v3831
    %v4476 = vunpack.c.l.b16 %v3832
    %v4477 = vunpack.c.h.b16 %v3832
    %v4478 = vunpack.c.l.b16 %v3833
    %v4479 = vunpack.c.h.b16 %v3833
    %v4480 = vunpack.c.l.b16 %v3834
    %v4481 = vunpack.c.h.b16 %v3834
    %v4482 = vunpack.c.l.b16 %v3835
    %v4483 = vunpack.c.h.b16 %v3835
    %v4484 = vunpack.c.l.b16 %v3836
    %v4485 = vunpack.c.h.b16 %v3836
    %v4486 = vunpack.c.l.b16 %v3837
    %v4487 = vunpack.c.h.b16 %v3837
    %v4488 = vunpack.c.l.b16 %v3838
    %v4489 = vunpack.c.h.b16 %v3838
    %v4490 = vunpack.c.l.b16 %v3839
    %v4491 = vunpack.c.h.b16 %v3839
    %v4492 = vunpack.c.l.b16 %v3840
    %v4493 = vunpack.c.h.b16 %v3840
    %v4494 = vunpack.c.l.b16 %v3841
    %v4495 = vunpack.c.h.b16 %v3841
    %v4496 = vunpack.c.l.b16 %v3842
    %v4497 = vunpack.c.h.b16 %v3842
    %v4498 = vunpack.c.l.b16 %v3843
    %v4499 = vunpack.c.h.b16 %v3843
    %v4500 = vunpack.c.l.b16 %v3844
    %v4501 = vunpack.c.h.b16 %v3844
    %v4502 = vunpack.c.l.b16 %v3845
    %v4503 = vunpack.c.h.b16 %v3845
    %v4504 = vunpack.c.l.b16 %v3846
    %v4505 = vunpack.c.h.b16 %v3846
    %v4506 = vunpack.c.l.b16 %v3847
    %v4507 = vunpack.c.h.b16 %v3847
    %v4508 = vunpack.c.l.b16 %v3848
    %v4509 = vunpack.c.h.b16 %v3848
    %v4510 = vunpack.c.l.b16 %v3849
    %v4511 = vunpack.c.h.b16 %v3849
    %v4512 = vunpack.c.l.b16 %v3850
    %v4513 = vunpack.c.h.b16 %v3850
    %v4514 = vunpack.c.l.b16 %v3851
    %v4515 = vunpack.c.h.b16 %v3851
    %v4516 = vunpack.c.l.b16 %v3852
    %v4517 = vunpack.c.h.b16 %v3852
    %v4518 = vunpack.c.l.b16 %v3853
    %v4519 = vunpack.c.h.b16 %v3853
    %v4520 = vunpack.c.l.b16 %v3854
    %v4521 = vunpack.c.h.b16 %v3854
    %v4522 = vunpack.c.l.b16 %v3855
    %v4523 = vunpack.c.h.b16 %v3855
    %v4524 = vunpack.c.l.b16 %v3856
    %v4525 = vunpack.c.h.b16 %v3856
    %v4526 = vunpack.c.l.b16 %v3857
    %v4527 = vunpack.c.h.b16 %v3857
    %v4528 = vunpack.c.l.b16 %v3858
    %v4529 = vunpack.c.h.b16 %v3858
    %v4530 = vunpack.c.l.b16 %v3859
    %v4531 = vunpack.c.h.b16 %v3859
    %v4532 = vunpack.c.l.b16 %v3860
    %v4533 = vunpack.c.h.b16 %v3860
    %v4534 = vunpack.c.l.b16 %v3861
    %v4535 = vunpack.c.h.b16 %v3861
    %v4536 = vunpack.c.l.b16 %v3862
    %v4537 = vunpack.c.h.b16 %v3862
    %v4538 = vunpack.c.l.b16 %v3863
    %v4539 = vunpack.c.h.b16 %v3863
    %v4540 = vunpack.c.l.b16 %v3864
    %v4541 = vunpack.c.h.b16 %v3864
    %v4542 = vunpack.c.l.b16 %v3865
    %v4543 = vunpack.c.h.b16 %v3865
    %v4544 = vunpack.c.l.b16 %v3866
    %v4545 = vunpack.c.h.b16 %v3866
    %v4546 = vunpack.c.l.b16 %v3867
    %v4547 = vunpack.c.h.b16 %v3867
    %v4548 = vunpack.c.l.b16 %v3868
    %v4549 = vunpack.c.h.b16 %v3868
    %v4550 = vunpack.c.l.b16 %v3869
    %v4551 = vunpack.c.h.b16 %v3869
    %v4552 = vunpack.c.l.b16 %v3870
    %v4553 = vunpack.c.h.b16 %v3870
    %v4554 = vunpack.c.l.b16 %v3871
    %v4555 = vunpack.c.h.b16 %v3871
    %v4556 = vunpack.c.l.b16 %v3872
    %v4557 = vunpack.c.h.b16 %v3872
    %v4558 = vunpack.c.l.b16 %v3873
    %v4559 = vunpack.c.h.b16 %v3873
    %v4560 = vunpack.c.l.b16 %v3874
    %v4561 = vunpack.c.h.b16 %v3874
    %v4562 = vunpack.c.l.b16 %v3875
    %v4563 = vunpack.c.h.b16 %v3875
    %v4564 = vunpack.c.l.b16 %v3876
    %v4565 = vunpack.c.h.b16 %v3876
    %v4566 = vunpack.c.l.b16 %v3877
    %v4567 = vunpack.c.h.b16 %v3877
    %v4568 = vunpack.c.l.b16 %v3878
    %v4569 = vunpack.c.h.b16 %v3878
    %v4570 = vunpack.c.l.b16 %v3879
    %v4571 = vunpack.c.h.b16 %v3879
    %v4572 = vunpack.c.l.b16 %v3880
    %v4573 = vunpack.c.h.b16 %v3880
    %v4574 = vunpack.c.l.b16 %v3881
    %v4575 = vunpack.c.h.b16 %v3881
    %v4576 = vunpack.c.l.b16 %v3882
    %v4577 = vunpack.c.h.b16 %v3882
    %v4578 = vunpack.c.l.b16 %v3883
    %v4579 = vunpack.c.h.b16 %v3883
    %v4580 = vunpack.c.l.b16 %v3884
    %v4581 = vunpack.c.h.b16 %v3884
    %v4582 = vunpack.c.l.b16 %v3885
    %v4583 = vunpack.c.h.b16 %v3885
    %v4584 = vunpack.c.l.b16 %v3886
    %v4585 = vunpack.c.h.b16 %v3886
    %v4586 = vunpack.c.l.b16 %v3887
    %v4587 = vunpack.c.h.b16 %v3887
    %v4588 = vunpack.c.l.b16 %v3888
    %v4589 = vunpack.c.h.b16 %v3888
    %v4590 = vunpack.c.l.b16 %v3889
    %v4591 = vunpack.c.h.b16 %v3889
    %v4592 = vunpack.c.l.b16 %v3890
    %v4593 = vunpack.c.h.b16 %v3890
    %v4594 = vunpack.c.l.b16 %v3891
    %v4595 = vunpack.c.h.b16 %v3891
    %v4596 = vunpack.c.l.b16 %v3892
    %v4597 = vunpack.c.h.b16 %v3892
    %v4598 = vunpack.c.l.b16 %v3893
    %v4599 = vunpack.c.h.b16 %v3893
    %v4600 = vunpack.c.l.b16 %v3894
    %v4601 = vunpack.c.h.b16 %v3894
    %v4602 = vunpack.c.l.b16 %v3895
    %v4603 = vunpack.c.h.b16 %v3895
    %v4604 = vunpack.c.l.b16 %v3896
    %v4605 = vunpack.c.h.b16 %v3896
    %v4606 = vunpack.c.l.b16 %v3897
    %v4607 = vunpack.c.h.b16 %v3897
    %v4608 = vunpack.c.l.b16 %v3898
    %v4609 = vunpack.c.h.b16 %v3898
    %v4610 = vunpack.c.l.b16 %v3899
    %v4611 = vunpack.c.h.b16 %v3899
    %v4612 = vunpack.c.l.b16 %v3900
    %v4613 = vunpack.c.h.b16 %v3900
    %v4614 = vunpack.c.l.b16 %v3901
    %v4615 = vunpack.c.h.b16 %v3901
    %v4616 = vunpack.c.l.b16 %v3902
    %v4617 = vunpack.c.h.b16 %v3902
    %v4618 = vunpack.c.l.b16 %v3903
    %v4619 = vunpack.c.h.b16 %v3903
    %v4620 = vunpack.c.l.b16 %v3904
    %v4621 = vunpack.c.h.b16 %v3904
    %v4622 = vunpack.c.l.b16 %v3905
    %v4623 = vunpack.c.h.b16 %v3905
    %v4624 = vunpack.c.l.b16 %v3906
    %v4625 = vunpack.c.h.b16 %v3906
    %v4626 = vunpack.c.l.b16 %v3907
    %v4627 = vunpack.c.h.b16 %v3907
    %v4628 = vunpack.c.l.b16 %v3908
    %v4629 = vunpack.c.h.b16 %v3908
    %v4630 = vunpack.c.l.b16 %v3909
    %v4631 = vunpack.c.h.b16 %v3909
    %v4632 = vunpack.c.l.b16 %v3910
    %v4633 = vunpack.c.h.b16 %v3910
    %v4634 = vunpack.c.l.b16 %v3911
    %v4635 = vunpack.c.h.b16 %v3911
    %v4636 = vunpack.c.l.b16 %v3912
    %v4637 = vunpack.c.h.b16 %v3912
    %v4638 = vunpack.c.l.b16 %v3913
    %v4639 = vunpack.c.h.b16 %v3913
    %v4640 = vunpack.c.l.b16 %v3914
    %v4641 = vunpack.c.h.b16 %v3914
    %v4642 = vunpack.c.l.b16 %v3915
    %v4643 = vunpack.c.h.b16 %v3915
    %v4644 = vunpack.c.l.b16 %v3916
    %v4645 = vunpack.c.h.b16 %v3916
    %v4646 = vunpack.c.l.b16 %v3917
    %v4647 = vunpack.c.h.b16 %v3917
    %v4648 = vunpack.c.l.b16 %v3918
    %v4649 = vunpack.c.h.b16 %v3918
    %v4650 = vunpack.c.l.b16 %v3919
    %v4651 = vunpack.c.h.b16 %v3919
    %v4652 = vunpack.c.l.b16 %v3920
    %v4653 = vunpack.c.h.b16 %v3920
    %v4654 = vunpack.c.l.b16 %v3921
    %v4655 = vunpack.c.h.b16 %v3921
    %v4656 = vunpack.c.l.b16 %v3922
    %v4657 = vunpack.c.h.b16 %v3922
    %v4658 = vunpack.c.l.b16 %v3923
    %v4659 = vunpack.c.h.b16 %v3923
    %v4660 = vunpack.c.l.b16 %v3924
    %v4661 = vunpack.c.h.b16 %v3924
    %v4662 = vunpack.c.l.b16 %v3925
    %v4663 = vunpack.c.h.b16 %v3925
    %v4664 = vunpack.c.l.b16 %v3926
    %v4665 = vunpack.c.h.b16 %v3926
    %v4666 = vunpack.c.l.b16 %v3927
    %v4667 = vunpack.c.h.b16 %v3927
    %v4668 = vunpack.c.l.b16 %v3928
    %v4669 = vunpack.c.h.b16 %v3928
    %v4670 = vunpack.c.l.b16 %v3929
    %v4671 = vunpack.c.h.b16 %v3929
    %v4672 = vunpack.c.l.b16 %v3930
    %v4673 = vunpack.c.h.b16 %v3930
    %v4674 = vunpack.c.l.b16 %v3931
    %v4675 = vunpack.c.h.b16 %v3931
    %v4676 = vunpack.c.l.b16 %v3932
    %v4677 = vunpack.c.h.b16 %v3932
    %v4678 = vunpack.c.l.b16 %v3933
    %v4679 = vunpack.c.h.b16 %v3933
    %v4680 = vunpack.c.l.b16 %v3934
    %v4681 = vunpack.c.h.b16 %v3934
    %v4682 = vunpack.c.l.b16 %v3935
    %v4683 = vunpack.c.h.b16 %v3935
    %v4684 = vunpack.c.l.b16 %v3936
    %v4685 = vunpack.c.h.b16 %v3936
    %v4686 = vunpack.c.l.b16 %v3937
    %v4687 = vunpack.c.h.b16 %v3937
    %v4688 = vunpack.c.l.b16 %v3938
    %v4689 = vunpack.c.h.b16 %v3938
    %v4690 = vunpack.c.l.b16 %v3939
    %v4691 = vunpack.c.h.b16 %v3939
    %v4692 = vunpack.c.l.b16 %v3940
    %v4693 = vunpack.c.h.b16 %v3940
    %v4694 = vunpack.c.l.b16 %v3941
    %v4695 = vunpack.c.h.b16 %v3941
    %v4696 = vunpack.c.l.b16 %v3942
    %v4697 = vunpack.c.h.b16 %v3942
    %v4698 = vunpack.c.l.b16 %v3943
    %v4699 = vunpack.c.h.b16 %v3943
    %v4700 = vunpack.c.l.b16 %v3944
    %v4701 = vunpack.c.h.b16 %v3944
    %v4702 = vunpack.c.l.b16 %v3945
    %v4703 = vunpack.c.h.b16 %v3945
    %v4704 = vunpack.c.l.b16 %v3946
    %v4705 = vunpack.c.h.b16 %v3946
    %v4706 = vunpack.c.l.b16 %v3947
    %v4707 = vunpack.c.h.b16 %v3947
    %v4708 = vunpack.c.l.b16 %v3948
    %v4709 = vunpack.c.h.b16 %v3948
    %v4710 = vunpack.c.l.b16 %v3949
    %v4711 = vunpack.c.h.b16 %v3949
    %v4712 = vunpack.c.l.b16 %v3950
    %v4713 = vunpack.c.h.b16 %v3950
    %v4714 = vunpack.c.l.b16 %v3951
    %v4715 = vunpack.c.h.b16 %v3951
    %v4716 = vunpack.c.l.b16 %v3952
    %v4717 = vunpack.c.h.b16 %v3952
    %v4718 = vunpack.c.l.b16 %v3953
    %v4719 = vunpack.c.h.b16 %v3953
    %v4720 = vunpack.c.l.b16 %v3954
    %v4721 = vunpack.c.h.b16 %v3954
    %v4722 = vunpack.c.l.b16 %v3955
    %v4723 = vunpack.c.h.b16 %v3955
    %v4724 = vunpack.c.l.b16 %v3956
    %v4725 = vunpack.c.h.b16 %v3956
    %v4726 = vunpack.c.l.b16 %v3957
    %v4727 = vunpack.c.h.b16 %v3957
    %v4728 = vunpack.c.l.b16 %v3958
    %v4729 = vunpack.c.h.b16 %v3958
    %v4730 = vunpack.c.l.b16 %v3959
    %v4731 = vunpack.c.h.b16 %v3959
    %v4732 = vunpack.c.l.b16 %v3960
    %v4733 = vunpack.c.h.b16 %v3960
    %v4734 = vunpack.c.l.b16 %v3961
    %v4735 = vunpack.c.h.b16 %v3961
    %v4736 = vunpack.c.l.b16 %v3962
    %v4737 = vunpack.c.h.b16 %v3962
    %v4738 = vunpack.c.l.b16 %v3963
    %v4739 = vunpack.c.h.b16 %v3963
    %v4740 = vunpack.c.l.b16 %v3964
    %v4741 = vunpack.c.h.b16 %v3964
    %v4742 = vunpack.c.l.b16 %v3965
    %v4743 = vunpack.c.h.b16 %v3965
    %v4744 = vunpack.c.l.b16 %v3966
    %v4745 = vunpack.c.h.b16 %v3966
    %v4746 = vunpack.c.l.b16 %v3967
    %v4747 = vunpack.c.h.b16 %v3967
    %v4748 = vunpack.c.l.b16 %v3968
    %v4749 = vunpack.c.h.b16 %v3968
    %v4750 = vunpack.c.l.b16 %v3969
    %v4751 = vunpack.c.h.b16 %v3969
    %v4752 = vunpack.c.l.b16 %v3970
    %v4753 = vunpack.c.h.b16 %v3970
    %v4754 = vunpack.c.l.b16 %v3971
    %v4755 = vunpack.c.h.b16 %v3971
    %v4756 = vunpack.c.l.b16 %v3972
    %v4757 = vunpack.c.h.b16 %v3972
    %v4758 = vunpack.c.l.b16 %v3973
    %v4759 = vunpack.c.h.b16 %v3973
    %v4760 = vunpack.c.l.b16 %v3974
    %v4761 = vunpack.c.h.b16 %v3974
    %v4762 = vunpack.c.l.b16 %v3975
    %v4763 = vunpack.c.h.b16 %v3975
    %v4764 = vunpack.c.l.b16 %v3976
    %v4765 = vunpack.c.h.b16 %v3976
    %v4766 = vunpack.c.l.b16 %v3977
    %v4767 = vunpack.c.h.b16 %v3977
    %v4768 = vunpack.c.l.b16 %v3978
    %v4769 = vunpack.c.h.b16 %v3978
    %v4770 = vunpack.c.l.b16 %v3979
    %v4771 = vunpack.c.h.b16 %v3979
    %v4772 = vunpack.c.l.b16 %v3980
    %v4773 = vunpack.c.h.b16 %v3980
    %v4774 = vunpack.c.l.b16 %v3981
    %v4775 = vunpack.c.h.b16 %v3981
    %v4776 = vunpack.c.l.b16 %v3982
    %v4777 = vunpack.c.h.b16 %v3982
    %v4778 = vunpack.c.l.b16 %v3983
    %v4779 = vunpack.c.h.b16 %v3983
    %v4780 = vunpack.c.l.b16 %v3984
    %v4781 = vunpack.c.h.b16 %v3984
    %v4782 = vunpack.c.l.b16 %v3985
    %v4783 = vunpack.c.h.b16 %v3985
    %v4784 = vunpack.c.l.b16 %v3986
    %v4785 = vunpack.c.h.b16 %v3986
    %v4786 = vunpack.c.l.b16 %v3987
    %v4787 = vunpack.c.h.b16 %v3987
    %v4788 = vunpack.c.l.b16 %v3988
    %v4789 = vunpack.c.h.b16 %v3988
    %v4790 = vunpack.c.l.b16 %v3989
    %v4791 = vunpack.c.h.b16 %v3989
    %v4792 = vunpack.c.l.b16 %v3990
    %v4793 = vunpack.c.h.b16 %v3990
    %v4794 = vunpack.c.l.b16 %v3991
    %v4795 = vunpack.c.h.b16 %v3991
    %v4796 = vunpack.c.l.b16 %v3992
    %v4797 = vunpack.c.h.b16 %v3992
    %v4798 = vunpack.c.l.b16 %v3993
    %v4799 = vunpack.c.h.b16 %v3993
    %v4800 = vunpack.c.l.b16 %v3994
    %v4801 = vunpack.c.h.b16 %v3994
    %v4802 = vunpack.c.l.b16 %v3995
    %v4803 = vunpack.c.h.b16 %v3995
    %v4804 = vunpack.c.l.b16 %v3996
    %v4805 = vunpack.c.h.b16 %v3996
    %v4806 = vunpack.c.l.b16 %v3997
    %v4807 = vunpack.c.h.b16 %v3997
    %v4808 = vpack.c.b16 %v4304, %v4296
    %v4809 = vpack.c.b16 %v4305, %v4297
    %v4810 = vpack.c.b16 %v4306, %v4298
    %v4811 = vpack.c.b16 %v4307, %v4299
    %v4812 = vpack.c.b16 %v4308, %v4300
    %v4813 = vpack.c.b16 %v4309, %v4301
    %v4814 = vpack.c.b16 %v4310, %v4302
    %v4815 = vpack.c.b16 %v4311, %v4303
    %v4816 = vpack.c.b16 %v4320, %v4312
    %v4817 = vpack.c.b16 %v4321, %v4313
    %v4818 = vpack.c.b16 %v4322, %v4314
    %v4819 = vpack.c.b16 %v4323, %v4315
    %v4820 = vpack.c.b16 %v4324, %v4316
    %v4821 = vpack.c.b16 %v4325, %v4317
    %v4822 = vpack.c.b16 %v4326, %v4318
    %v4823 = vpack.c.b16 %v4327, %v4319
    %v4824 = vpack.c.b16 %v4336, %v4328
    %v4825 = vpack.c.b16 %v4337, %v4329
    %v4826 = vpack.c.b16 %v4338, %v4330
    %v4827 = vpack.c.b16 %v4339, %v4331
    %v4828 = vpack.c.b16 %v4340, %v4332
    %v4829 = vpack.c.b16 %v4341, %v4333
    %v4830 = vpack.c.b16 %v4342, %v4334
    %v4831 = vpack.c.b16 %v4343, %v4335
    %v4832 = vpack.c.b16 %v4352, %v4344
    %v4833 = vpack.c.b16 %v4353, %v4345
    %v4834 = vpack.c.b16 %v4354, %v4346
    %v4835 = vpack.c.b16 %v4355, %v4347
    %v4836 = vpack.c.b16 %v4356, %v4348
    %v4837 = vpack.c.b16 %v4357, %v4349
    %v4838 = vpack.c.b16 %v4358, %v4350
    %v4839 = vpack.c.b16 %v4359, %v4351
    %v4840 = vpack.c.b16 %v4368, %v4360
    %v4841 = vpack.c.b16 %v4369, %v4361
    %v4842 = vpack.c.b16 %v4370, %v4362
    %v4843 = vpack.c.b16 %v4371, %v4363
    %v4844 = vpack.c.b16 %v4372, %v4364
    %v4845 = vpack.c.b16 %v4373, %v4365
    %v4846 = vpack.c.b16 %v4374, %v4366
    %v4847 = vpack.c.b16 %v4375, %v4367
    %v4848 = vpack.c.b16 %v4384, %v4376
    %v4849 = vpack.c.b16 %v4385, %v4377
    %v4850 = vpack.c.b16 %v4386, %v4378
    %v4851 = vpack.c.b16 %v4387, %v4379
    %v4852 = vpack.c.b16 %v4388, %v4380
    %v4853 = vpack.c.b16 %v4389, %v4381
    %v4854 = vpack.c.b16 %v4390, %v4382
    %v4855 = vpack.c.b16 %v4391, %v4383
    %v4856 = vpack.c.b16 %v4400, %v4392
    %v4857 = vpack.c.b16 %v4401, %v4393
    %v4858 = vpack.c.b16 %v4402, %v4394
    %v4859 = vpack.c.b16 %v4403, %v4395
    %v4860 = vpack.c.b16 %v4404, %v4396
    %v4861 = vpack.c.b16 %v4405, %v4397
    %v4862 = vpack.c.b16 %v4406, %v4398
    %v4863 = vpack.c.b16 %v4407, %v4399
    %v4864 = vpack.c.b16 %v4416, %v4408
    %v4865 = vpack.c.b16 %v4417, %v4409
    %v4866 = vpack.c.b16 %v4418, %v4410
    %v4867 = vpack.c.b16 %v4419, %v4411
    %v4868 = vpack.c.b16 %v4420, %v4412
    %v4869 = vpack.c.b16 %v4421, %v4413
    %v4870 = vpack.c.b16 %v4422, %v4414
    %v4871 = vpack.c.b16 %v4423, %v4415
    %v4872 = vpack.c.b16 %v4432, %v4424
    %v4873 = vpack.c.b16 %v4433, %v4425
    %v4874 = vpack.c.b16 %v4434, %v4426
    %v4875 = vpack.c.b16 %v4435, %v4427
    %v4876 = vpack.c.b16 %v4436, %v4428
    %v4877 = vpack.c.b16 %v4437, %v4429
    %v4878 = vpack.c.b16 %v4438, %v4430
    %v4879 = vpack.c.b16 %v4439, %v4431
    %v4880 = vpack.c.b16 %v4448, %v4440
    %v4881 = vpack.c.b16 %v4449, %v4441
    %v4882 = vpack.c.b16 %v4450, %v4442
    %v4883 = vpack.c.b16 %v4451, %v4443
    %v4884 = vpack.c.b16 %v4452, %v4444
    %v4885 = vpack.c.b16 %v4453, %v4445
    %v4886 = vpack.c.b16 %v4454, %v4446
    %v4887 = vpack.c.b16 %v4455, %v4447
    %v4888 = vpack.c.b16 %v4464, %v4456
    %v4889 = vpack.c.b16 %v4465, %v4457
    %v4890 = vpack.c.b16 %v4466, %v4458
    %v4891 = vpack.c.b16 %v4467, %v4459
    %v4892 = vpack.c.b16 %v4468, %v4460
    %v4893 = vpack.c.b16 %v4469, %v4461
    %v4894 = vpack.c.b16 %v4470, %v4462
    %v4895 = vpack.c.b16 %v4471, %v4463
    %v4896 = vpack.c.b16 %v4480, %v4472
    %v4897 = vpack.c.b16 %v4481, %v4473
    %v4898 = vpack.c.b16 %v4482, %v4474
    %v4899 = vpack.c.b16 %v4483, %v4475
    %v4900 = vpack.c.b16 %v4484, %v4476
    %v4901 = vpack.c.b16 %v4485, %v4477
    %v4902 = vpack.c.b16 %v4486, %v4478
    %v4903 = vpack.c.b16 %v4487, %v4479
    %v4904 = vpack.c.b16 %v4496, %v4488
    %v4905 = vpack.c.b16 %v4497, %v4489
    %v4906 = vpack.c.b16 %v4498, %v4490
    %v4907 = vpack.c.b16 %v4499, %v4491
    %v4908 = vpack.c.b16 %v4500, %v4492
    %v4909 = vpack.c.b16 %v4501, %v4493
    %v4910 = vpack.c.b16 %v4502, %v4494
    %v4911 = vpack.c.b16 %v4503, %v4495
    %v4912 = vpack.c.b16 %v4512, %v4504
    %v4913 = vpack.c.b16 %v4513, %v4505
    %v4914 = vpack.c.b16 %v4514, %v4506
    %v4915 = vpack.c.b16 %v4515, %v4507
    %v4916 = vpack.c.b16 %v4516, %v4508
    %v4917 = vpack.c.b16 %v4517, %v4509
    %v4918 = vpack.c.b16 %v4518, %v4510
    %v4919 = vpack.c.b16 %v4519, %v4511
    %v4920 = vpack.c.b16 %v4528, %v4520
    %v4921 = vpack.c.b16 %v4529, %v4521
    %v4922 = vpack.c.b16 %v4530, %v4522
    %v4923 = vpack.c.b16 %v4531, %v4523
    %v4924 = vpack.c.b16 %v4532, %v4524
    %v4925 = vpack.c.b16 %v4533, %v4525
    %v4926 = vpack.c.b16 %v4534, %v4526
    %v4927 = vpack.c.b16 %v4535, %v4527
    %v4928 = vpack.c.b16 %v4544, %v4536
    %v4929 = vpack.c.b16 %v4545, %v4537
    %v4930 = vpack.c.b16 %v4546, %v4538
    %v4931 = vpack.c.b16 %v4547, %v4539
    %v4932 = vpack.c.b16 %v4548, %v4540
    %v4933 = vpack.c.b16 %v4549, %v4541
    %v4934 = vpack.c.b16 %v4550, %v4542
    %v4935 = vpack.c.b16 %v4551, %v4543
    %v4936 = vpack.c.b16 %v4560, %v4552
    %v4937 = vpack.c.b16 %v4561, %v4553
    %v4938 = vpack.c.b16 %v4562, %v4554
    %v4939 = vpack.c.b16 %v4563, %v4555
    %v4940 = vpack.c.b16 %v4564, %v4556
    %v4941 = vpack.c.b16 %v4565, %v4557
    %v4942 = vpack.c.b16 %v4566, %v4558
    %v4943 = vpack.c.b16 %v4567, %v4559
    %v4944 = vpack.c.b16 %v4576, %v4568
    %v4945 = vpack.c.b16 %v4577, %v4569
    %v4946 = vpack.c.b16 %v4578, %v4570
    %v4947 = vpack.c.b16 %v4579, %v4571
    %v4948 = vpack.c.b16 %v4580, %v4572
    %v4949 = vpack.c.b16 %v4581, %v4573
    %v4950 = vpack.c.b16 %v4582, %v4574
    %v4951 = vpack.c.b16 %v4583, %v4575
    %v4952 = vpack.c.b16 %v4592, %v4584
    %v4953 = vpack.c.b16 %v4593, %v4585
    %v4954 = vpack.c.b16 %v4594, %v4586
    %v4955 = vpack.c.b16 %v4595, %v4587
    %v4956 = vpack.c.b16 %v4596, %v4588
    %v4957 = vpack.c.b16 %v4597, %v4589
    %v4958 = vpack.c.b16 %v4598, %v4590
    %v4959 = vpack.c.b16 %v4599, %v4591
    %v4960 = vpack.c.b16 %v4608, %v4600
    %v4961 = vpack.c.b16 %v4609, %v4601
    %v4962 = vpack.c.b16 %v4610, %v4602
    %v4963 = vpack.c.b16 %v4611, %v4603
    %v4964 = vpack.c.b16 %v4612, %v4604
    %v4965 = vpack.c.b16 %v4613, %v4605
    %v4966 = vpack.c.b16 %v4614, %v4606
    %v4967 = vpack.c.b16 %v4615, %v4607
    %v4968 = vpack.c.b16 %v4624, %v4616
    %v4969 = vpack.c.b16 %v4625, %v4617
    %v4970 = vpack.c.b16 %v4626, %v4618
    %v4971 = vpack.c.b16 %v4627, %v4619
    %v4972 = vpack.c.b16 %v4628, %v4620
    %v4973 = vpack.c.b16 %v4629, %v4621
    %v4974 = vpack.c.b16 %v4630, %v4622
    %v4975 = vpack.c.b16 %v4631, %v4623
    %v4976 = vpack.c.b16 %v4640, %v4632
    %v4977 = vpack.c.b16 %v4641, %v4633
    %v4978 = vpack.c.b16 %v4642, %v4634
    %v4979 = vpack.c.b16 %v4643, %v4635
    %v4980 = vpack.c.b16 %v4644, %v4636
    %v4981 = vpack.c.b16 %v4645, %v4637
    %v4982 = vpack.c.b16 %v4646, %v4638
    %v4983 = vpack.c.b16 %v4647, %v4639
    %v4984 = vpack.c.b16 %v4656, %v4648
    %v4985 = vpack.c.b16 %v4657, %v4649
    %v4986 = vpack.c.b16 %v4658, %v4650
    %v4987 = vpack.c.b16 %v4659, %v4651
    %v4988 = vpack.c.b16 %v4660, %v4652
    %v4989 = vpack.c.b16 %v4661, %v4653
    %v4990 = vpack.c.b16 %v4662, %v4654
    %v4991 = vpack.c.b16 %v4663, %v4655
    %v4992 = vpack.c.b16 %v4672, %v4664
    %v4993 = vpack.c.b16 %v4673, %v4665
    %v4994 = vpack.c.b16 %v4674, %v4666
    %v4995 = vpack.c.b16 %v4675, %v4667
    %v4996 = vpack.c.b16 %v4676, %v4668
    %v4997 = vpack.c.b16 %v4677, %v4669
    %v4998 = vpack.c.b16 %v4678, %v4670
    %v4999 = vpack.c.b16 %v4679, %v4671
    %v5000 = vpack.c.b16 %v4688, %v4680
    %v5001 = vpack.c.b16 %v4689, %v4681
    %v5002 = vpack.c.b16 %v4690, %v4682
    %v5003 = vpack.c.b16 %v4691, %v4683
    %v5004 = vpack.c.b16 %v4692, %v4684
    %v5005 = vpack.c.b16 %v4693, %v4685
    %v5006 = vpack.c.b16 %v4694, %v4686
    %v5007 = vpack.c.b16 %v4695, %v4687
    %v5008 = vpack.c.b16 %v4704, %v4696
    %v5009 = vpack.c.b16 %v4705, %v4697
    %v5010 = vpack.c.b16 %v4706, %v4698
    %v5011 = vpack.c.b16 %v4707, %v4699
    %v5012 = vpack.c.b16 %v4708, %v4700
    %v5013 = vpack.c.b16 %v4709, %v4701
    %v5014 = vpack.c.b16 %v4710, %v4702
    %v5015 = vpack.c.b16 %v4711, %v4703
    %v5016 = vpack.c.b16 %v4720, %v4712
    %v5017 = vpack.c.b16 %v4721, %v4713
    %v5018 = vpack.c.b16 %v4722, %v4714
    %v5019 = vpack.c.b16 %v4723, %v4715
    %v5020 = vpack.c.b16 %v4724, %v4716
    %v5021 = vpack.c.b16 %v4725, %v4717
    %v5022 = vpack.c.b16 %v4726, %v4718
    %v5023 = vpack.c.b16 %v4727, %v4719
    %v5024 = vpack.c.b16 %v4736, %v4728
    %v5025 = vpack.c.b16 %v4737, %v4729
    %v5026 = vpack.c.b16 %v4738, %v4730
    %v5027 = vpack.c.b16 %v4739, %v4731
    %v5028 = vpack.c.b16 %v4740, %v4732
    %v5029 = vpack.c.b16 %v4741, %v4733
    %v5030 = vpack.c.b16 %v4742, %v4734
    %v5031 = vpack.c.b16 %v4743, %v4735
    %v5032 = vpack.c.b16 %v4752, %v4744
    %v5033 = vpack.c.b16 %v4753, %v4745
    %v5034 = vpack.c.b16 %v4754, %v4746
    %v5035 = vpack.c.b16 %v4755, %v4747
    %v5036 = vpack.c.b16 %v4756, %v4748
    %v5037 = vpack.c.b16 %v4757, %v4749
    %v5038 = vpack.c.b16 %v4758, %v4750
    %v5039 = vpack.c.b16 %v4759, %v4751
    %v5040 = vpack.c.b16 %v4768, %v4760
    %v5041 = vpack.c.b16 %v4769, %v4761
    %v5042 = vpack.c.b16 %v4770, %v4762
    %v5043 = vpack.c.b16 %v4771, %v4763
    %v5044 = vpack.c.b16 %v4772, %v4764
    %v5045 = vpack.c.b16 %v4773, %v4765
    %v5046 = vpack.c.b16 %v4774, %v4766
    %v5047 = vpack.c.b16 %v4775, %v4767
    %v5048 = vpack.c.b16 %v4784, %v4776
    %v5049 = vpack.c.b16 %v4785, %v4777
    %v5050 = vpack.c.b16 %v4786, %v4778
    %v5051 = vpack.c.b16 %v4787, %v4779
    %v5052 = vpack.c.b16 %v4788, %v4780
    %v5053 = vpack.c.b16 %v4789, %v4781
    %v5054 = vpack.c.b16 %v4790, %v4782
    %v5055 = vpack.c.b16 %v4791, %v4783
    %v5056 = vpack.c.b16 %v4800, %v4792
    %v5057 = vpack.c.b16 %v4801, %v4793
    %v5058 = vpack.c.b16 %v4802, %v4794
    %v5059 = vpack.c.b16 %v4803, %v4795
    %v5060 = vpack.c.b16 %v4804, %v4796
    %v5061 = vpack.c.b16 %v4805, %v4797
    %v5062 = vpack.c.b16 %v4806, %v4798
    %v5063 = vpack.c.b16 %v4807, %v4799
    %5320 = vmatprep.subr.bf16.mxu0 %v4809
    %5321 = vmatpush1.bf16.msra.mxu0 %v4808
    %5322 = vmatprep.subr.bf16.mxu0 %v4817
    %5323 = vmatpush1.bf16.msra.mxu0 %v4816
    %5324 = vmatprep.subr.bf16.mxu0 %v4825
    %5325 = vmatpush1.bf16.msra.mxu0 %v4824
    %5326 = vmatprep.subr.bf16.mxu0 %v4833
    %5327 = vmatpush1.bf16.msra.mxu0 %v4832
    %5328 = vmatprep.subr.bf16.mxu0 %v4841
    %5329 = vmatpush1.bf16.msra.mxu0 %v4840
    %5330 = vmatprep.subr.bf16.mxu0 %v4849
    %5331 = vmatpush1.bf16.msra.mxu0 %v4848
    %5332 = vmatprep.subr.bf16.mxu0 %v4857
    %5333 = vmatpush1.bf16.msra.mxu0 %v4856
    %5334 = vmatprep.subr.bf16.mxu0 %v4865
    %5335 = vmatpush1.bf16.msra.mxu0 %v4864
    %5336 = vmatprep.subr.bf16.mxu0 %v4873
    %5337 = vmatpush1.bf16.msra.mxu0 %v4872
    %5338 = vmatprep.subr.bf16.mxu0 %v4881
    %5339 = vmatpush1.bf16.msra.mxu0 %v4880
    %5340 = vmatprep.subr.bf16.mxu0 %v4889
    %5341 = vmatpush1.bf16.msra.mxu0 %v4888
    %5342 = vmatprep.subr.bf16.mxu0 %v4897
    %5343 = vmatpush1.bf16.msra.mxu0 %v4896
    %5344 = vmatprep.subr.bf16.mxu0 %v4905
    %5345 = vmatpush1.bf16.msra.mxu0 %v4904
    %5346 = vmatprep.subr.bf16.mxu0 %v4913
    %5347 = vmatpush1.bf16.msra.mxu0 %v4912
    %5348 = vmatprep.subr.bf16.mxu0 %v4921
    %5349 = vmatpush1.bf16.msra.mxu0 %v4920
    %5350 = vmatprep.subr.bf16.mxu0 %v4929
    %5351 = vmatpush1.bf16.msra.mxu0 %v4928
    %5352 = vmatprep.mubr.bf16.mxu0 %v3739
    %5353 = vmatmul.mubr.bf16.gmra.mrb[0].mxu0 %v3738
    %v5354 = vpop.f32.mrb[0].mxu0
    %v5355 = vadd.f32 %v4003, %v5354
    %v5356 = vpop.f32.mrb[0].mxu0
    %v5357 = vadd.f32 %v4007, %v5356
    %v5358 = vpop.f32.mrb[0].mxu0
    %v5359 = vadd.f32 %v4003, %v5358
    %v5360 = vpop.f32.mrb[0].mxu0
    %v5361 = vadd.f32 %v4007, %v5360
    %5362 = vdwg.mxu0
    %5363 = vmatprep.subr.bf16.mxu0 %v4937
    %5364 = vmatpush1.bf16.msra.mxu0 %v4936
    %5365 = vmatprep.subr.bf16.mxu0 %v4945
    %5366 = vmatpush1.bf16.msra.mxu0 %v4944
    %5367 = vmatprep.subr.bf16.mxu0 %v4953
    %5368 = vmatpush1.bf16.msra.mxu0 %v4952
    %5369 = vmatprep.subr.bf16.mxu0 %v4961
    %5370 = vmatpush1.bf16.msra.mxu0 %v4960
    %5371 = vmatprep.subr.bf16.mxu0 %v4969
    %5372 = vmatpush1.bf16.msra.mxu0 %v4968
    %5373 = vmatprep.subr.bf16.mxu0 %v4977
    %5374 = vmatpush1.bf16.msra.mxu0 %v4976
    %5375 = vmatprep.subr.bf16.mxu0 %v4985
    %5376 = vmatpush1.bf16.msra.mxu0 %v4984
    %5377 = vmatprep.subr.bf16.mxu0 %v4993
    %5378 = vmatpush1.bf16.msra.mxu0 %v4992
    %5379 = vmatprep.subr.bf16.mxu0 %v5001
    %5380 = vmatpush1.bf16.msra.mxu0 %v5000
    %5381 = vmatprep.subr.bf16.mxu0 %v5009
    %5382 = vmatpush1.bf16.msra.mxu0 %v5008
    %5383 = vmatprep.subr.bf16.mxu0 %v5017
    %5384 = vmatpush1.bf16.msra.mxu0 %v5016
    %5385 = vmatprep.subr.bf16.mxu0 %v5025
    %5386 = vmatpush1.bf16.msra.mxu0 %v5024
    %5387 = vmatprep.subr.bf16.mxu0 %v5033
    %5388 = vmatpush1.bf16.msra.mxu0 %v5032
    %5389 = vmatprep.subr.bf16.mxu0 %v5041
    %5390 = vmatpush1.bf16.msra.mxu0 %v5040
    %5391 = vmatprep.subr.bf16.mxu0 %v5049
    %5392 = vmatpush1.bf16.msra.mxu0 %v5048
    %5393 = vmatprep.subr.bf16.mxu0 %v5057
    %5394 = vmatpush1.bf16.msra.mxu0 %v5056
    %5395 = vmatprep.mubr.bf16.mxu0 %v3741
    %5396 = vmatmul.mubr.bf16.gmra.mrb[0].mxu0 %v3740
    %v5397 = vpop.f32.mrb[0].mxu0
    %v5398 = vadd.f32 %v5355, %v5397
    %v5399 = vpop.f32.mrb[0].mxu0
    %v5400 = vadd.f32 %v5357, %v5399
    %v5401 = vpop.f32.mrb[0].mxu0
    %v5402 = vadd.f32 %v5359, %v5401
    %v5403 = vpop.f32.mrb[0].mxu0
    %v5404 = vadd.f32 %v5361, %v5403
    %5405 = vdwg.mxu0
    %5406 = vmatprep.subr.bf16.mxu0 %v4811
    %5407 = vmatpush1.bf16.msra.mxu0 %v4810
    %5408 = vmatprep.subr.bf16.mxu0 %v4819
    %5409 = vmatpush1.bf16.msra.mxu0 %v4818
    %5410 = vmatprep.subr.bf16.mxu0 %v4827
    %5411 = vmatpush1.bf16.msra.mxu0 %v4826
    %5412 = vmatprep.subr.bf16.mxu0 %v4835
    %5413 = vmatpush1.bf16.msra.mxu0 %v4834
    %5414 = vmatprep.subr.bf16.mxu0 %v4843
    %5415 = vmatpush1.bf16.msra.mxu0 %v4842
    %5416 = vmatprep.subr.bf16.mxu0 %v4851
    %5417 = vmatpush1.bf16.msra.mxu0 %v4850
    %5418 = vmatprep.subr.bf16.mxu0 %v4859
    %5419 = vmatpush1.bf16.msra.mxu0 %v4858
    %5420 = vmatprep.subr.bf16.mxu0 %v4867
    %5421 = vmatpush1.bf16.msra.mxu0 %v4866
    %5422 = vmatprep.subr.bf16.mxu0 %v4875
    %5423 = vmatpush1.bf16.msra.mxu0 %v4874
    %5424 = vmatprep.subr.bf16.mxu0 %v4883
    %5425 = vmatpush1.bf16.msra.mxu0 %v4882
    %5426 = vmatprep.subr.bf16.mxu0 %v4891
    %5427 = vmatpush1.bf16.msra.mxu0 %v4890
    %5428 = vmatprep.subr.bf16.mxu0 %v4899
    %5429 = vmatpush1.bf16.msra.mxu0 %v4898
    %5430 = vmatprep.subr.bf16.mxu0 %v4907
    %5431 = vmatpush1.bf16.msra.mxu0 %v4906
    %5432 = vmatprep.subr.bf16.mxu0 %v4915
    %5433 = vmatpush1.bf16.msra.mxu0 %v4914
    %5434 = vmatprep.subr.bf16.mxu0 %v4923
    %5435 = vmatpush1.bf16.msra.mxu0 %v4922
    %5436 = vmatprep.subr.bf16.mxu0 %v4931
    %5437 = vmatpush1.bf16.msra.mxu0 %v4930
    %5438 = vmatprep.mubr.bf16.mxu0 %v3739
    %5439 = vmatmul.mubr.bf16.gmra.mrb[0].mxu0 %v3738
    %v5440 = vpop.f32.mrb[0].mxu0
    %v5441 = vadd.f32 %v4011, %v5440
    %v5442 = vpop.f32.mrb[0].mxu0
    %v5443 = vadd.f32 %v4015, %v5442
    %v5444 = vpop.f32.mrb[0].mxu0
    %v5445 = vadd.f32 %v4011, %v5444
    %v5446 = vpop.f32.mrb[0].mxu0
    %v5447 = vadd.f32 %v4015, %v5446
    %5448 = vdwg.mxu0
    %5449 = vmatprep.subr.bf16.mxu0 %v4939
    %5450 = vmatpush1.bf16.msra.mxu0 %v4938
    %5451 = vmatprep.subr.bf16.mxu0 %v4947
    %5452 = vmatpush1.bf16.msra.mxu0 %v4946
    %5453 = vmatprep.subr.bf16.mxu0 %v4955
    %5454 = vmatpush1.bf16.msra.mxu0 %v4954
    %5455 = vmatprep.subr.bf16.mxu0 %v4963
    %5456 = vmatpush1.bf16.msra.mxu0 %v4962
    %5457 = vmatprep.subr.bf16.mxu0 %v4971
    %5458 = vmatpush1.bf16.msra.mxu0 %v4970
    %5459 = vmatprep.subr.bf16.mxu0 %v4979
    %5460 = vmatpush1.bf16.msra.mxu0 %v4978
    %5461 = vmatprep.subr.bf16.mxu0 %v4987
    %5462 = vmatpush1.bf16.msra.mxu0 %v4986
    %5463 = vmatprep.subr.bf16.mxu0 %v4995
    %5464 = vmatpush1.bf16.msra.mxu0 %v4994
    %5465 = vmatprep.subr.bf16.mxu0 %v5003
    %5466 = vmatpush1.bf16.msra.mxu0 %v5002
    %5467 = vmatprep.subr.bf16.mxu0 %v5011
    %5468 = vmatpush1.bf16.msra.mxu0 %v5010
    %5469 = vmatprep.subr.bf16.mxu0 %v5019
    %5470 = vmatpush1.bf16.msra.mxu0 %v5018
    %5471 = vmatprep.subr.bf16.mxu0 %v5027
    %5472 = vmatpush1.bf16.msra.mxu0 %v5026
    %5473 = vmatprep.subr.bf16.mxu0 %v5035
    %5474 = vmatpush1.bf16.msra.mxu0 %v5034
    %5475 = vmatprep.subr.bf16.mxu0 %v5043
    %5476 = vmatpush1.bf16.msra.mxu0 %v5042
    %5477 = vmatprep.subr.bf16.mxu0 %v5051
    %5478 = vmatpush1.bf16.msra.mxu0 %v5050
    %5479 = vmatprep.subr.bf16.mxu0 %v5059
    %5480 = vmatpush1.bf16.msra.mxu0 %v5058
    %5481 = vmatprep.mubr.bf16.mxu0 %v3741
    %5482 = vmatmul.mubr.bf16.gmra.mrb[0].mxu0 %v3740
    %v5483 = vpop.f32.mrb[0].mxu0
    %v5484 = vadd.f32 %v5441, %v5483
    %v5485 = vpop.f32.mrb[0].mxu0
    %v5486 = vadd.f32 %v5443, %v5485
    %v5487 = vpop.f32.mrb[0].mxu0
    %v5488 = vadd.f32 %v5445, %v5487
    %v5489 = vpop.f32.mrb[0].mxu0
    %v5490 = vadd.f32 %v5447, %v5489
    %5491 = vdwg.mxu0
    %5492 = vmatprep.subr.bf16.mxu0 %v4813
    %5493 = vmatpush1.bf16.msra.mxu0 %v4812
    %5494 = vmatprep.subr.bf16.mxu0 %v4821
    %5495 = vmatpush1.bf16.msra.mxu0 %v4820
    %5496 = vmatprep.subr.bf16.mxu0 %v4829
    %5497 = vmatpush1.bf16.msra.mxu0 %v4828
    %5498 = vmatprep.subr.bf16.mxu0 %v4837
    %5499 = vmatpush1.bf16.msra.mxu0 %v4836
    %5500 = vmatprep.subr.bf16.mxu0 %v4845
    %5501 = vmatpush1.bf16.msra.mxu0 %v4844
    %5502 = vmatprep.subr.bf16.mxu0 %v4853
    %5503 = vmatpush1.bf16.msra.mxu0 %v4852
    %5504 = vmatprep.subr.bf16.mxu0 %v4861
    %5505 = vmatpush1.bf16.msra.mxu0 %v4860
    %5506 = vmatprep.subr.bf16.mxu0 %v4869
    %5507 = vmatpush1.bf16.msra.mxu0 %v4868
    %5508 = vmatprep.subr.bf16.mxu0 %v4877
    %5509 = vmatpush1.bf16.msra.mxu0 %v4876
    %5510 = vmatprep.subr.bf16.mxu0 %v4885
    %5511 = vmatpush1.bf16.msra.mxu0 %v4884
    %5512 = vmatprep.subr.bf16.mxu0 %v4893
    %5513 = vmatpush1.bf16.msra.mxu0 %v4892
    %5514 = vmatprep.subr.bf16.mxu0 %v4901
    %5515 = vmatpush1.bf16.msra.mxu0 %v4900
    %5516 = vmatprep.subr.bf16.mxu0 %v4909
    %5517 = vmatpush1.bf16.msra.mxu0 %v4908
    %5518 = vmatprep.subr.bf16.mxu0 %v4917
    %5519 = vmatpush1.bf16.msra.mxu0 %v4916
    %5520 = vmatprep.subr.bf16.mxu0 %v4925
    %5521 = vmatpush1.bf16.msra.mxu0 %v4924
    %5522 = vmatprep.subr.bf16.mxu0 %v4933
    %5523 = vmatpush1.bf16.msra.mxu0 %v4932
    %5524 = vmatprep.mubr.bf16.mxu0 %v3739
    %5525 = vmatmul.mubr.bf16.gmra.mrb[0].mxu0 %v3738
    %v5526 = vpop.f32.mrb[0].mxu0
    %v5527 = vadd.f32 %v4019, %v5526
    %v5528 = vpop.f32.mrb[0].mxu0
    %v5529 = vadd.f32 %v4023, %v5528
    %v5530 = vpop.f32.mrb[0].mxu0
    %v5531 = vadd.f32 %v4019, %v5530
    %v5532 = vpop.f32.mrb[0].mxu0
    %v5533 = vadd.f32 %v4023, %v5532
    %5534 = vdwg.mxu0
    %5535 = vmatprep.subr.bf16.mxu0 %v4941
    %5536 = vmatpush1.bf16.msra.mxu0 %v4940
    %5537 = vmatprep.subr.bf16.mxu0 %v4949
    %5538 = vmatpush1.bf16.msra.mxu0 %v4948
    %5539 = vmatprep.subr.bf16.mxu0 %v4957
    %5540 = vmatpush1.bf16.msra.mxu0 %v4956
    %5541 = vmatprep.subr.bf16.mxu0 %v4965
    %5542 = vmatpush1.bf16.msra.mxu0 %v4964
    %5543 = vmatprep.subr.bf16.mxu0 %v4973
    %5544 = vmatpush1.bf16.msra.mxu0 %v4972
    %5545 = vmatprep.subr.bf16.mxu0 %v4981
    %5546 = vmatpush1.bf16.msra.mxu0 %v4980
    %5547 = vmatprep.subr.bf16.mxu0 %v4989
    %5548 = vmatpush1.bf16.msra.mxu0 %v4988
    %5549 = vmatprep.subr.bf16.mxu0 %v4997
    %5550 = vmatpush1.bf16.msra.mxu0 %v4996
    %5551 = vmatprep.subr.bf16.mxu0 %v5005
    %5552 = vmatpush1.bf16.msra.mxu0 %v5004
    %5553 = vmatprep.subr.bf16.mxu0 %v5013
    %5554 = vmatpush1.bf16.msra.mxu0 %v5012
    %5555 = vmatprep.subr.bf16.mxu0 %v5021
    %5556 = vmatpush1.bf16.msra.mxu0 %v5020
    %5557 = vmatprep.subr.bf16.mxu0 %v5029
    %5558 = vmatpush1.bf16.msra.mxu0 %v5028
    %5559 = vmatprep.subr.bf16.mxu0 %v5037
    %5560 = vmatpush1.bf16.msra.mxu0 %v5036
    %5561 = vmatprep.subr.bf16.mxu0 %v5045
    %5562 = vmatpush1.bf16.msra.mxu0 %v5044
    %5563 = vmatprep.subr.bf16.mxu0 %v5053
    %5564 = vmatpush1.bf16.msra.mxu0 %v5052
    %5565 = vmatprep.subr.bf16.mxu0 %v5061
    %5566 = vmatpush1.bf16.msra.mxu0 %v5060
    %5567 = vmatprep.mubr.bf16.mxu0 %v3741
    %5568 = vmatmul.mubr.bf16.gmra.mrb[0].mxu0 %v3740
    %v5569 = vpop.f32.mrb[0].mxu0
    %v5570 = vadd.f32 %v5527, %v5569
    %v5571 = vpop.f32.mrb[0].mxu0
    %v5572 = vadd.f32 %v5529, %v5571
    %v5573 = vpop.f32.mrb[0].mxu0
    %v5574 = vadd.f32 %v5531, %v5573
    %v5575 = vpop.f32.mrb[0].mxu0
    %v5576 = vadd.f32 %v5533, %v5575
    %5577 = vdwg.mxu0
    %5578 = vmatprep.subr.bf16.mxu0 %v4815
    %5579 = vmatpush1.bf16.msra.mxu0 %v4814
    %5580 = vmatprep.subr.bf16.mxu0 %v4823
    %5581 = vmatpush1.bf16.msra.mxu0 %v4822
    %5582 = vmatprep.subr.bf16.mxu0 %v4831
    %5583 = vmatpush1.bf16.msra.mxu0 %v4830
    %5584 = vmatprep.subr.bf16.mxu0 %v4839
    %5585 = vmatpush1.bf16.msra.mxu0 %v4838
    %5586 = vmatprep.subr.bf16.mxu0 %v4847
    %5587 = vmatpush1.bf16.msra.mxu0 %v4846
    %5588 = vmatprep.subr.bf16.mxu0 %v4855
    %5589 = vmatpush1.bf16.msra.mxu0 %v4854
    %5590 = vmatprep.subr.bf16.mxu0 %v4863
    %5591 = vmatpush1.bf16.msra.mxu0 %v4862
    %5592 = vmatprep.subr.bf16.mxu0 %v4871
    %5593 = vmatpush1.bf16.msra.mxu0 %v4870
    %5594 = vmatprep.subr.bf16.mxu0 %v4879
    %5595 = vmatpush1.bf16.msra.mxu0 %v4878
    %5596 = vmatprep.subr.bf16.mxu0 %v4887
    %5597 = vmatpush1.bf16.msra.mxu0 %v4886
    %5598 = vmatprep.subr.bf16.mxu0 %v4895
    %5599 = vmatpush1.bf16.msra.mxu0 %v4894
    %5600 = vmatprep.subr.bf16.mxu0 %v4903
    %5601 = vmatpush1.bf16.msra.mxu0 %v4902
    %5602 = vmatprep.subr.bf16.mxu0 %v4911
    %5603 = vmatpush1.bf16.msra.mxu0 %v4910
    %5604 = vmatprep.subr.bf16.mxu0 %v4919
    %5605 = vmatpush1.bf16.msra.mxu0 %v4918
    %5606 = vmatprep.subr.bf16.mxu0 %v4927
    %5607 = vmatpush1.bf16.msra.mxu0 %v4926
    %5608 = vmatprep.subr.bf16.mxu0 %v4935
    %5609 = vmatpush1.bf16.msra.mxu0 %v4934
    %5610 = vmatprep.mubr.bf16.mxu0 %v3739
    %5611 = vmatmul.mubr.bf16.gmra.mrb[0].mxu0 %v3738
    %v5612 = vpop.f32.mrb[0].mxu0
    %v5613 = vadd.f32 %v4027, %v5612
    %v5614 = vpop.f32.mrb[0].mxu0
    %v5615 = vadd.f32 %v4031, %v5614
    %v5616 = vpop.f32.mrb[0].mxu0
    %v5617 = vadd.f32 %v4027, %v5616
    %v5618 = vpop.f32.mrb[0].mxu0
    %v5619 = vadd.f32 %v4031, %v5618
    %5620 = vdwg.mxu0
    %5621 = vmatprep.subr.bf16.mxu0 %v4943
    %5622 = vmatpush1.bf16.msra.mxu0 %v4942
    %5623 = vmatprep.subr.bf16.mxu0 %v4951
    %5624 = vmatpush1.bf16.msra.mxu0 %v4950
    %5625 = vmatprep.subr.bf16.mxu0 %v4959
    %5626 = vmatpush1.bf16.msra.mxu0 %v4958
    %5627 = vmatprep.subr.bf16.mxu0 %v4967
    %5628 = vmatpush1.bf16.msra.mxu0 %v4966
    %5629 = vmatprep.subr.bf16.mxu0 %v4975
    %5630 = vmatpush1.bf16.msra.mxu0 %v4974
    %5631 = vmatprep.subr.bf16.mxu0 %v4983
    %5632 = vmatpush1.bf16.msra.mxu0 %v4982
    %5633 = vmatprep.subr.bf16.mxu0 %v4991
    %5634 = vmatpush1.bf16.msra.mxu0 %v4990
    %5635 = vmatprep.subr.bf16.mxu0 %v4999
    %5636 = vmatpush1.bf16.msra.mxu0 %v4998
    %5637 = vmatprep.subr.bf16.mxu0 %v5007
    %5638 = vmatpush1.bf16.msra.mxu0 %v5006
    %5639 = vmatprep.subr.bf16.mxu0 %v5015
    %5640 = vmatpush1.bf16.msra.mxu0 %v5014
    %5641 = vmatprep.subr.bf16.mxu0 %v5023
    %5642 = vmatpush1.bf16.msra.mxu0 %v5022
    %5643 = vmatprep.subr.bf16.mxu0 %v5031
    %5644 = vmatpush1.bf16.msra.mxu0 %v5030
    %5645 = vmatprep.subr.bf16.mxu0 %v5039
    %5646 = vmatpush1.bf16.msra.mxu0 %v5038
    %5647 = vmatprep.subr.bf16.mxu0 %v5047
    %5648 = vmatpush1.bf16.msra.mxu0 %v5046
    %5649 = vmatprep.subr.bf16.mxu0 %v5055
    %5650 = vmatpush1.bf16.msra.mxu0 %v5054
    %5651 = vmatprep.subr.bf16.mxu0 %v5063
    %5652 = vmatpush1.bf16.msra.mxu0 %v5062
    %5653 = vmatprep.mubr.bf16.mxu0 %v3741
    %5654 = vmatmul.mubr.bf16.gmra.mrb[0].mxu0 %v3740
    %v5655 = vpop.f32.mrb[0].mxu0
    %v5656 = vadd.f32 %v5613, %v5655
    %v5657 = vpop.f32.mrb[0].mxu0
    %v5658 = vadd.f32 %v5615, %v5657
    %v5659 = vpop.f32.mrb[0].mxu0
    %v5660 = vadd.f32 %v5617, %v5659
    %v5661 = vpop.f32.mrb[0].mxu0
    %v5662 = vadd.f32 %v5619, %v5661
    %5663 = vdwg.mxu0
    %v5664 = vmax.f32 %v5398, 0.0
    %v5665 = vmax.f32 %v5400, 0.0
    %v5666 = vmax.f32 %v5484, 0.0
    %v5667 = vmax.f32 %v5486, 0.0
    %v5668 = vmax.f32 %v5570, 0.0
    %v5669 = vmax.f32 %v5572, 0.0
    %v5670 = vmax.f32 %v5656, 0.0
    %v5671 = vmax.f32 %v5658, 0.0
    %v5672 = vmax.f32 %v5402, 0.0
    %v5673 = vmax.f32 %v5404, 0.0
    %v5674 = vmax.f32 %v5488, 0.0
    %v5675 = vmax.f32 %v5490, 0.0
    %v5676 = vmax.f32 %v5574, 0.0
    %v5677 = vmax.f32 %v5576, 0.0
    %v5678 = vmax.f32 %v5660, 0.0
    %v5679 = vmax.f32 %v5662, 0.0
    %v5680 = vpack.c.bf16 %v5672, %v5664
    %v5681 = vpack.c.bf16 %v5673, %v5665
    %v5682 = vpack.c.bf16 %v5674, %v5666
    %v5683 = vpack.c.bf16 %v5675, %v5667
    %v5684 = vpack.c.bf16 %v5676, %v5668
    %v5685 = vpack.c.bf16 %v5677, %v5669
    %v5686 = vpack.c.bf16 %v5678, %v5670
    %v5687 = vpack.c.bf16 %v5679, %v5671
    %v5688 = vld [vmem:[#allocation14] sm:$0xff]
    %v5689 = vld [vmem:[#allocation14 + $0x8] sm:$0xff]
    %v5690 = vld [vmem:[#allocation14 + $0x10] sm:$0xff]
    %v5691 = vld [vmem:[#allocation14 + $0x18] sm:$0xff]
    %v5692 = vld [vmem:[#allocation14 + $0x20] sm:$0xff]
    %v5693 = vld [vmem:[#allocation14 + $0x28] sm:$0xff]
    %v5694 = vld [vmem:[#allocation14 + $0x30] sm:$0xff]
    %v5695 = vld [vmem:[#allocation14 + $0x38] sm:$0xff]
    %v5696 = vld [vmem:[#allocation14 + $0x40] sm:$0xff]
    %v5697 = vld [vmem:[#allocation14 + $0x48] sm:$0xff]
    %v5698 = vld [vmem:[#allocation14 + $0x50] sm:$0xff]
    %v5699 = vld [vmem:[#allocation14 + $0x58] sm:$0xff]
    %v5700 = vld [vmem:[#allocation14 + $0x60] sm:$0xff]
    %v5701 = vld [vmem:[#allocation14 + $0x68] sm:$0xff]
    %v5702 = vld [vmem:[#allocation14 + $0x70] sm:$0xff]
    %v5703 = vld [vmem:[#allocation14 + $0x78] sm:$0xff]
    %v5704 = vld [vmem:[#allocation14 + $0x80] sm:$0xff]
    %v5705 = vld [vmem:[#allocation14 + $0x88] sm:$0xff]
    %v5706 = vld [vmem:[#allocation14 + $0x90] sm:$0xff]
    %v5707 = vld [vmem:[#allocation14 + $0x98] sm:$0xff]
    %v5708 = vld [vmem:[#allocation14 + $0xa0] sm:$0xff]
    %v5709 = vld [vmem:[#allocation14 + $0xa8] sm:$0xff]
    %v5710 = vld [vmem:[#allocation14 + $0xb0] sm:$0xff]
    %v5711 = vld [vmem:[#allocation14 + $0xb8] sm:$0xff]
    %v5712 = vld [vmem:[#allocation14 + $0xc0] sm:$0xff]
    %v5713 = vld [vmem:[#allocation14 + $0xc8] sm:$0xff]
    %v5714 = vld [vmem:[#allocation14 + $0xd0] sm:$0xff]
    %v5715 = vld [vmem:[#allocation14 + $0xd8] sm:$0xff]
    %v5716 = vld [vmem:[#allocation14 + $0xe0] sm:$0xff]
    %v5717 = vld [vmem:[#allocation14 + $0xe8] sm:$0xff]
    %v5718 = vld [vmem:[#allocation14 + $0xf0] sm:$0xff]
    %v5719 = vld [vmem:[#allocation14 + $0xf8] sm:$0xff]
    %v5720 = vld [vmem:[#allocation14 + $0x100] sm:$0xff]
    %v5721 = vld [vmem:[#allocation14 + $0x108] sm:$0xff]
    %v5722 = vld [vmem:[#allocation14 + $0x110] sm:$0xff]
    %v5723 = vld [vmem:[#allocation14 + $0x118] sm:$0xff]
    %v5724 = vld [vmem:[#allocation14 + $0x120] sm:$0xff]
    %v5725 = vld [vmem:[#allocation14 + $0x128] sm:$0xff]
    %v5726 = vld [vmem:[#allocation14 + $0x130] sm:$0xff]
    %v5727 = vld [vmem:[#allocation14 + $0x138] sm:$0xff]
    %v5728 = vld [vmem:[#allocation14 + $0x140] sm:$0xff]
    %v5729 = vld [vmem:[#allocation14 + $0x148] sm:$0xff]
    %v5730 = vld [vmem:[#allocation14 + $0x150] sm:$0xff]
    %v5731 = vld [vmem:[#allocation14 + $0x158] sm:$0xff]
    %v5732 = vld [vmem:[#allocation14 + $0x160] sm:$0xff]
    %v5733 = vld [vmem:[#allocation14 + $0x168] sm:$0xff]
    %v5734 = vld [vmem:[#allocation14 + $0x170] sm:$0xff]
    %v5735 = vld [vmem:[#allocation14 + $0x178] sm:$0xff]
    %v5736 = vld [vmem:[#allocation14 + $0x180] sm:$0xff]
    %v5737 = vld [vmem:[#allocation14 + $0x188] sm:$0xff]
    %v5738 = vld [vmem:[#allocation14 + $0x190] sm:$0xff]
    %v5739 = vld [vmem:[#allocation14 + $0x198] sm:$0xff]
    %v5740 = vld [vmem:[#allocation14 + $0x1a0] sm:$0xff]
    %v5741 = vld [vmem:[#allocation14 + $0x1a8] sm:$0xff]
    %v5742 = vld [vmem:[#allocation14 + $0x1b0] sm:$0xff]
    %v5743 = vld [vmem:[#allocation14 + $0x1b8] sm:$0xff]
    %v5744 = vld [vmem:[#allocation14 + $0x1c0] sm:$0xff]
    %v5745 = vld [vmem:[#allocation14 + $0x1c8] sm:$0xff]
    %v5746 = vld [vmem:[#allocation14 + $0x1d0] sm:$0xff]
    %v5747 = vld [vmem:[#allocation14 + $0x1d8] sm:$0xff]
    %v5748 = vld [vmem:[#allocation14 + $0x1e0] sm:$0xff]
    %v5749 = vld [vmem:[#allocation14 + $0x1e8] sm:$0xff]
    %v5750 = vld [vmem:[#allocation14 + $0x1f0] sm:$0xff]
    %v5751 = vld [vmem:[#allocation14 + $0x1f8] sm:$0xff]
    %v5752 = vld [vmem:[#allocation14 + $0x200] sm:$0xff]
    %v5753 = vld [vmem:[#allocation14 + $0x208] sm:$0xff]
    %v5754 = vld [vmem:[#allocation14 + $0x210] sm:$0xff]
    %v5755 = vld [vmem:[#allocation14 + $0x218] sm:$0xff]
    %v5756 = vld [vmem:[#allocation14 + $0x220] sm:$0xff]
    %v5757 = vld [vmem:[#allocation14 + $0x228] sm:$0xff]
    %v5758 = vld [vmem:[#allocation14 + $0x230] sm:$0xff]
    %v5759 = vld [vmem:[#allocation14 + $0x238] sm:$0xff]
    %v5760 = vld [vmem:[#allocation14 + $0x240] sm:$0xff]
    %v5761 = vld [vmem:[#allocation14 + $0x248] sm:$0xff]
    %v5762 = vld [vmem:[#allocation14 + $0x250] sm:$0xff]
    %v5763 = vld [vmem:[#allocation14 + $0x258] sm:$0xff]
    %v5764 = vld [vmem:[#allocation14 + $0x260] sm:$0xff]
    %v5765 = vld [vmem:[#allocation14 + $0x268] sm:$0xff]
    %v5766 = vld [vmem:[#allocation14 + $0x270] sm:$0xff]
    %v5767 = vld [vmem:[#allocation14 + $0x278] sm:$0xff]
    %v5768 = vld [vmem:[#allocation14 + $0x280] sm:$0xff]
    %v5769 = vld [vmem:[#allocation14 + $0x288] sm:$0xff]
    %v5770 = vld [vmem:[#allocation14 + $0x290] sm:$0xff]
    %v5771 = vld [vmem:[#allocation14 + $0x298] sm:$0xff]
    %v5772 = vld [vmem:[#allocation14 + $0x2a0] sm:$0xff]
    %v5773 = vld [vmem:[#allocation14 + $0x2a8] sm:$0xff]
    %v5774 = vld [vmem:[#allocation14 + $0x2b0] sm:$0xff]
    %v5775 = vld [vmem:[#allocation14 + $0x2b8] sm:$0xff]
    %v5776 = vld [vmem:[#allocation14 + $0x2c0] sm:$0xff]
    %v5777 = vld [vmem:[#allocation14 + $0x2c8] sm:$0xff]
    %v5778 = vld [vmem:[#allocation14 + $0x2d0] sm:$0xff]
    %v5779 = vld [vmem:[#allocation14 + $0x2d8] sm:$0xff]
    %v5780 = vld [vmem:[#allocation14 + $0x2e0] sm:$0xff]
    %v5781 = vld [vmem:[#allocation14 + $0x2e8] sm:$0xff]
    %v5782 = vld [vmem:[#allocation14 + $0x2f0] sm:$0xff]
    %v5783 = vld [vmem:[#allocation14 + $0x2f8] sm:$0xff]
    %v5784 = vld [vmem:[#allocation14 + $0x300] sm:$0xff]
    %v5785 = vld [vmem:[#allocation14 + $0x308] sm:$0xff]
    %v5786 = vld [vmem:[#allocation14 + $0x310] sm:$0xff]
    %v5787 = vld [vmem:[#allocation14 + $0x318] sm:$0xff]
    %v5788 = vld [vmem:[#allocation14 + $0x320] sm:$0xff]
    %v5789 = vld [vmem:[#allocation14 + $0x328] sm:$0xff]
    %v5790 = vld [vmem:[#allocation14 + $0x330] sm:$0xff]
    %v5791 = vld [vmem:[#allocation14 + $0x338] sm:$0xff]
    %v5792 = vld [vmem:[#allocation14 + $0x340] sm:$0xff]
    %v5793 = vld [vmem:[#allocation14 + $0x348] sm:$0xff]
    %v5794 = vld [vmem:[#allocation14 + $0x350] sm:$0xff]
    %v5795 = vld [vmem:[#allocation14 + $0x358] sm:$0xff]
    %v5796 = vld [vmem:[#allocation14 + $0x360] sm:$0xff]
    %v5797 = vld [vmem:[#allocation14 + $0x368] sm:$0xff]
    %v5798 = vld [vmem:[#allocation14 + $0x370] sm:$0xff]
    %v5799 = vld [vmem:[#allocation14 + $0x378] sm:$0xff]
    %v5800 = vld [vmem:[#allocation14 + $0x380] sm:$0xff]
    %v5801 = vld [vmem:[#allocation14 + $0x388] sm:$0xff]
    %v5802 = vld [vmem:[#allocation14 + $0x390] sm:$0xff]
    %v5803 = vld [vmem:[#allocation14 + $0x398] sm:$0xff]
    %v5804 = vld [vmem:[#allocation14 + $0x3a0] sm:$0xff]
    %v5805 = vld [vmem:[#allocation14 + $0x3a8] sm:$0xff]
    %v5806 = vld [vmem:[#allocation14 + $0x3b0] sm:$0xff]
    %v5807 = vld [vmem:[#allocation14 + $0x3b8] sm:$0xff]
    %v5808 = vld [vmem:[#allocation14 + $0x3c0] sm:$0xff]
    %v5809 = vld [vmem:[#allocation14 + $0x3c8] sm:$0xff]
    %v5810 = vld [vmem:[#allocation14 + $0x3d0] sm:$0xff]
    %v5811 = vld [vmem:[#allocation14 + $0x3d8] sm:$0xff]
    %v5812 = vld [vmem:[#allocation14 + $0x3e0] sm:$0xff]
    %v5813 = vld [vmem:[#allocation14 + $0x3e8] sm:$0xff]
    %v5814 = vld [vmem:[#allocation14 + $0x3f0] sm:$0xff]
    %v5815 = vld [vmem:[#allocation14 + $0x3f8] sm:$0xff]
    %v5816 = vld [vmem:[%s12] sm:$0x3]
    %v5818 = vlaneseq
    %v5819 = vshrl.u32 %v5818, 7
    %v5820 = vsub.s32 0, %v5819
    %v5821 = vrot.slane %v5816, %v5820
    %v5822 = vlaneseq
    %v5823 = vshrl.u32 %v5822, 7
    %v5824 = vsub.s32 1, %v5823
    %v5825 = vrot.slane %v5816, %v5824
    %v5956 = vunpack.c.l.b16 %v5688
    %v5957 = vunpack.c.h.b16 %v5688
    %v5958 = vunpack.c.l.b16 %v5689
    %v5959 = vunpack.c.h.b16 %v5689
    %v5960 = vunpack.c.l.b16 %v5690
    %v5961 = vunpack.c.h.b16 %v5690
    %v5962 = vunpack.c.l.b16 %v5691
    %v5963 = vunpack.c.h.b16 %v5691
    %v5964 = vunpack.c.l.b16 %v5692
    %v5965 = vunpack.c.h.b16 %v5692
    %v5966 = vunpack.c.l.b16 %v5693
    %v5967 = vunpack.c.h.b16 %v5693
    %v5968 = vunpack.c.l.b16 %v5694
    %v5969 = vunpack.c.h.b16 %v5694
    %v5970 = vunpack.c.l.b16 %v5695
    %v5971 = vunpack.c.h.b16 %v5695
    %v5972 = vunpack.c.l.b16 %v5696
    %v5973 = vunpack.c.h.b16 %v5696
    %v5974 = vunpack.c.l.b16 %v5697
    %v5975 = vunpack.c.h.b16 %v5697
    %v5976 = vunpack.c.l.b16 %v5698
    %v5977 = vunpack.c.h.b16 %v5698
    %v5978 = vunpack.c.l.b16 %v5699
    %v5979 = vunpack.c.h.b16 %v5699
    %v5980 = vunpack.c.l.b16 %v5700
    %v5981 = vunpack.c.h.b16 %v5700
    %v5982 = vunpack.c.l.b16 %v5701
    %v5983 = vunpack.c.h.b16 %v5701
    %v5984 = vunpack.c.l.b16 %v5702
    %v5985 = vunpack.c.h.b16 %v5702
    %v5986 = vunpack.c.l.b16 %v5703
    %v5987 = vunpack.c.h.b16 %v5703
    %v5988 = vunpack.c.l.b16 %v5704
    %v5989 = vunpack.c.h.b16 %v5704
    %v5990 = vunpack.c.l.b16 %v5705
    %v5991 = vunpack.c.h.b16 %v5705
    %v5992 = vunpack.c.l.b16 %v5706
    %v5993 = vunpack.c.h.b16 %v5706
    %v5994 = vunpack.c.l.b16 %v5707
    %v5995 = vunpack.c.h.b16 %v5707
    %v5996 = vunpack.c.l.b16 %v5708
    %v5997 = vunpack.c.h.b16 %v5708
    %v5998 = vunpack.c.l.b16 %v5709
    %v5999 = vunpack.c.h.b16 %v5709
    %v6000 = vunpack.c.l.b16 %v5710
    %v6001 = vunpack.c.h.b16 %v5710
    %v6002 = vunpack.c.l.b16 %v5711
    %v6003 = vunpack.c.h.b16 %v5711
    %v6004 = vunpack.c.l.b16 %v5712
    %v6005 = vunpack.c.h.b16 %v5712
    %v6006 = vunpack.c.l.b16 %v5713
    %v6007 = vunpack.c.h.b16 %v5713
    %v6008 = vunpack.c.l.b16 %v5714
    %v6009 = vunpack.c.h.b16 %v5714
    %v6010 = vunpack.c.l.b16 %v5715
    %v6011 = vunpack.c.h.b16 %v5715
    %v6012 = vunpack.c.l.b16 %v5716
    %v6013 = vunpack.c.h.b16 %v5716
    %v6014 = vunpack.c.l.b16 %v5717
    %v6015 = vunpack.c.h.b16 %v5717
    %v6016 = vunpack.c.l.b16 %v5718
    %v6017 = vunpack.c.h.b16 %v5718
    %v6018 = vunpack.c.l.b16 %v5719
    %v6019 = vunpack.c.h.b16 %v5719
    %v6020 = vunpack.c.l.b16 %v5720
    %v6021 = vunpack.c.h.b16 %v5720
    %v6022 = vunpack.c.l.b16 %v5721
    %v6023 = vunpack.c.h.b16 %v5721
    %v6024 = vunpack.c.l.b16 %v5722
    %v6025 = vunpack.c.h.b16 %v5722
    %v6026 = vunpack.c.l.b16 %v5723
    %v6027 = vunpack.c.h.b16 %v5723
    %v6028 = vunpack.c.l.b16 %v5724
    %v6029 = vunpack.c.h.b16 %v5724
    %v6030 = vunpack.c.l.b16 %v5725
    %v6031 = vunpack.c.h.b16 %v5725
    %v6032 = vunpack.c.l.b16 %v5726
    %v6033 = vunpack.c.h.b16 %v5726
    %v6034 = vunpack.c.l.b16 %v5727
    %v6035 = vunpack.c.h.b16 %v5727
    %v6036 = vunpack.c.l.b16 %v5728
    %v6037 = vunpack.c.h.b16 %v5728
    %v6038 = vunpack.c.l.b16 %v5729
    %v6039 = vunpack.c.h.b16 %v5729
    %v6040 = vunpack.c.l.b16 %v5730
    %v6041 = vunpack.c.h.b16 %v5730
    %v6042 = vunpack.c.l.b16 %v5731
    %v6043 = vunpack.c.h.b16 %v5731
    %v6044 = vunpack.c.l.b16 %v5732
    %v6045 = vunpack.c.h.b16 %v5732
    %v6046 = vunpack.c.l.b16 %v5733
    %v6047 = vunpack.c.h.b16 %v5733
    %v6048 = vunpack.c.l.b16 %v5734
    %v6049 = vunpack.c.h.b16 %v5734
    %v6050 = vunpack.c.l.b16 %v5735
    %v6051 = vunpack.c.h.b16 %v5735
    %v6052 = vunpack.c.l.b16 %v5736
    %v6053 = vunpack.c.h.b16 %v5736
    %v6054 = vunpack.c.l.b16 %v5737
    %v6055 = vunpack.c.h.b16 %v5737
    %v6056 = vunpack.c.l.b16 %v5738
    %v6057 = vunpack.c.h.b16 %v5738
    %v6058 = vunpack.c.l.b16 %v5739
    %v6059 = vunpack.c.h.b16 %v5739
    %v6060 = vunpack.c.l.b16 %v5740
    %v6061 = vunpack.c.h.b16 %v5740
    %v6062 = vunpack.c.l.b16 %v5741
    %v6063 = vunpack.c.h.b16 %v5741
    %v6064 = vunpack.c.l.b16 %v5742
    %v6065 = vunpack.c.h.b16 %v5742
    %v6066 = vunpack.c.l.b16 %v5743
    %v6067 = vunpack.c.h.b16 %v5743
    %v6068 = vunpack.c.l.b16 %v5744
    %v6069 = vunpack.c.h.b16 %v5744
    %v6070 = vunpack.c.l.b16 %v5745
    %v6071 = vunpack.c.h.b16 %v5745
    %v6072 = vunpack.c.l.b16 %v5746
    %v6073 = vunpack.c.h.b16 %v5746
    %v6074 = vunpack.c.l.b16 %v5747
    %v6075 = vunpack.c.h.b16 %v5747
    %v6076 = vunpack.c.l.b16 %v5748
    %v6077 = vunpack.c.h.b16 %v5748
    %v6078 = vunpack.c.l.b16 %v5749
    %v6079 = vunpack.c.h.b16 %v5749
    %v6080 = vunpack.c.l.b16 %v5750
    %v6081 = vunpack.c.h.b16 %v5750
    %v6082 = vunpack.c.l.b16 %v5751
    %v6083 = vunpack.c.h.b16 %v5751
    %v6084 = vunpack.c.l.b16 %v5752
    %v6085 = vunpack.c.h.b16 %v5752
    %v6086 = vunpack.c.l.b16 %v5753
    %v6087 = vunpack.c.h.b16 %v5753
    %v6088 = vunpack.c.l.b16 %v5754
    %v6089 = vunpack.c.h.b16 %v5754
    %v6090 = vunpack.c.l.b16 %v5755
    %v6091 = vunpack.c.h.b16 %v5755
    %v6092 = vunpack.c.l.b16 %v5756
    %v6093 = vunpack.c.h.b16 %v5756
    %v6094 = vunpack.c.l.b16 %v5757
    %v6095 = vunpack.c.h.b16 %v5757
    %v6096 = vunpack.c.l.b16 %v5758
    %v6097 = vunpack.c.h.b16 %v5758
    %v6098 = vunpack.c.l.b16 %v5759
    %v6099 = vunpack.c.h.b16 %v5759
    %v6100 = vunpack.c.l.b16 %v5760
    %v6101 = vunpack.c.h.b16 %v5760
    %v6102 = vunpack.c.l.b16 %v5761
    %v6103 = vunpack.c.h.b16 %v5761
    %v6104 = vunpack.c.l.b16 %v5762
    %v6105 = vunpack.c.h.b16 %v5762
    %v6106 = vunpack.c.l.b16 %v5763
    %v6107 = vunpack.c.h.b16 %v5763
    %v6108 = vunpack.c.l.b16 %v5764
    %v6109 = vunpack.c.h.b16 %v5764
    %v6110 = vunpack.c.l.b16 %v5765
    %v6111 = vunpack.c.h.b16 %v5765
    %v6112 = vunpack.c.l.b16 %v5766
    %v6113 = vunpack.c.h.b16 %v5766
    %v6114 = vunpack.c.l.b16 %v5767
    %v6115 = vunpack.c.h.b16 %v5767
    %v6116 = vunpack.c.l.b16 %v5768
    %v6117 = vunpack.c.h.b16 %v5768
    %v6118 = vunpack.c.l.b16 %v5769
    %v6119 = vunpack.c.h.b16 %v5769
    %v6120 = vunpack.c.l.b16 %v5770
    %v6121 = vunpack.c.h.b16 %v5770
    %v6122 = vunpack.c.l.b16 %v5771
    %v6123 = vunpack.c.h.b16 %v5771
    %v6124 = vunpack.c.l.b16 %v5772
    %v6125 = vunpack.c.h.b16 %v5772
    %v6126 = vunpack.c.l.b16 %v5773
    %v6127 = vunpack.c.h.b16 %v5773
    %v6128 = vunpack.c.l.b16 %v5774
    %v6129 = vunpack.c.h.b16 %v5774
    %v6130 = vunpack.c.l.b16 %v5775
    %v6131 = vunpack.c.h.b16 %v5775
    %v6132 = vunpack.c.l.b16 %v5776
    %v6133 = vunpack.c.h.b16 %v5776
    %v6134 = vunpack.c.l.b16 %v5777
    %v6135 = vunpack.c.h.b16 %v5777
    %v6136 = vunpack.c.l.b16 %v5778
    %v6137 = vunpack.c.h.b16 %v5778
    %v6138 = vunpack.c.l.b16 %v5779
    %v6139 = vunpack.c.h.b16 %v5779
    %v6140 = vunpack.c.l.b16 %v5780
    %v6141 = vunpack.c.h.b16 %v5780
    %v6142 = vunpack.c.l.b16 %v5781
    %v6143 = vunpack.c.h.b16 %v5781
    %v6144 = vunpack.c.l.b16 %v5782
    %v6145 = vunpack.c.h.b16 %v5782
    %v6146 = vunpack.c.l.b16 %v5783
    %v6147 = vunpack.c.h.b16 %v5783
    %v6148 = vunpack.c.l.b16 %v5784
    %v6149 = vunpack.c.h.b16 %v5784
    %v6150 = vunpack.c.l.b16 %v5785
    %v6151 = vunpack.c.h.b16 %v5785
    %v6152 = vunpack.c.l.b16 %v5786
    %v6153 = vunpack.c.h.b16 %v5786
    %v6154 = vunpack.c.l.b16 %v5787
    %v6155 = vunpack.c.h.b16 %v5787
    %v6156 = vunpack.c.l.b16 %v5788
    %v6157 = vunpack.c.h.b16 %v5788
    %v6158 = vunpack.c.l.b16 %v5789
    %v6159 = vunpack.c.h.b16 %v5789
    %v6160 = vunpack.c.l.b16 %v5790
    %v6161 = vunpack.c.h.b16 %v5790
    %v6162 = vunpack.c.l.b16 %v5791
    %v6163 = vunpack.c.h.b16 %v5791
    %v6164 = vunpack.c.l.b16 %v5792
    %v6165 = vunpack.c.h.b16 %v5792
    %v6166 = vunpack.c.l.b16 %v5793
    %v6167 = vunpack.c.h.b16 %v5793
    %v6168 = vunpack.c.l.b16 %v5794
    %v6169 = vunpack.c.h.b16 %v5794
    %v6170 = vunpack.c.l.b16 %v5795
    %v6171 = vunpack.c.h.b16 %v5795
    %v6172 = vunpack.c.l.b16 %v5796
    %v6173 = vunpack.c.h.b16 %v5796
    %v6174 = vunpack.c.l.b16 %v5797
    %v6175 = vunpack.c.h.b16 %v5797
    %v6176 = vunpack.c.l.b16 %v5798
    %v6177 = vunpack.c.h.b16 %v5798
    %v6178 = vunpack.c.l.b16 %v5799
    %v6179 = vunpack.c.h.b16 %v5799
    %v6180 = vunpack.c.l.b16 %v5800
    %v6181 = vunpack.c.h.b16 %v5800
    %v6182 = vunpack.c.l.b16 %v5801
    %v6183 = vunpack.c.h.b16 %v5801
    %v6184 = vunpack.c.l.b16 %v5802
    %v6185 = vunpack.c.h.b16 %v5802
    %v6186 = vunpack.c.l.b16 %v5803
    %v6187 = vunpack.c.h.b16 %v5803
    %v6188 = vunpack.c.l.b16 %v5804
    %v6189 = vunpack.c.h.b16 %v5804
    %v6190 = vunpack.c.l.b16 %v5805
    %v6191 = vunpack.c.h.b16 %v5805
    %v6192 = vunpack.c.l.b16 %v5806
    %v6193 = vunpack.c.h.b16 %v5806
    %v6194 = vunpack.c.l.b16 %v5807
    %v6195 = vunpack.c.h.b16 %v5807
    %v6196 = vunpack.c.l.b16 %v5808
    %v6197 = vunpack.c.h.b16 %v5808
    %v6198 = vunpack.c.l.b16 %v5809
    %v6199 = vunpack.c.h.b16 %v5809
    %v6200 = vunpack.c.l.b16 %v5810
    %v6201 = vunpack.c.h.b16 %v5810
    %v6202 = vunpack.c.l.b16 %v5811
    %v6203 = vunpack.c.h.b16 %v5811
    %v6204 = vunpack.c.l.b16 %v5812
    %v6205 = vunpack.c.h.b16 %v5812
    %v6206 = vunpack.c.l.b16 %v5813
    %v6207 = vunpack.c.h.b16 %v5813
    %v6208 = vunpack.c.l.b16 %v5814
    %v6209 = vunpack.c.h.b16 %v5814
    %v6210 = vunpack.c.l.b16 %v5815
    %v6211 = vunpack.c.h.b16 %v5815
    %v6212 = vpack.c.b16 %v5958, %v5956
    %v6213 = vpack.c.b16 %v5959, %v5957
    %v6214 = vpack.c.b16 %v5962, %v5960
    %v6215 = vpack.c.b16 %v5963, %v5961
    %v6216 = vpack.c.b16 %v5966, %v5964
    %v6217 = vpack.c.b16 %v5967, %v5965
    %v6218 = vpack.c.b16 %v5970, %v5968
    %v6219 = vpack.c.b16 %v5971, %v5969
    %v6220 = vpack.c.b16 %v5974, %v5972
    %v6221 = vpack.c.b16 %v5975, %v5973
    %v6222 = vpack.c.b16 %v5978, %v5976
    %v6223 = vpack.c.b16 %v5979, %v5977
    %v6224 = vpack.c.b16 %v5982, %v5980
    %v6225 = vpack.c.b16 %v5983, %v5981
    %v6226 = vpack.c.b16 %v5986, %v5984
    %v6227 = vpack.c.b16 %v5987, %v5985
    %v6228 = vpack.c.b16 %v5990, %v5988
    %v6229 = vpack.c.b16 %v5991, %v5989
    %v6230 = vpack.c.b16 %v5994, %v5992
    %v6231 = vpack.c.b16 %v5995, %v5993
    %v6232 = vpack.c.b16 %v5998, %v5996
    %v6233 = vpack.c.b16 %v5999, %v5997
    %v6234 = vpack.c.b16 %v6002, %v6000
    %v6235 = vpack.c.b16 %v6003, %v6001
    %v6236 = vpack.c.b16 %v6006, %v6004
    %v6237 = vpack.c.b16 %v6007, %v6005
    %v6238 = vpack.c.b16 %v6010, %v6008
    %v6239 = vpack.c.b16 %v6011, %v6009
    %v6240 = vpack.c.b16 %v6014, %v6012
    %v6241 = vpack.c.b16 %v6015, %v6013
    %v6242 = vpack.c.b16 %v6018, %v6016
    %v6243 = vpack.c.b16 %v6019, %v6017
    %v6244 = vpack.c.b16 %v6022, %v6020
    %v6245 = vpack.c.b16 %v6023, %v6021
    %v6246 = vpack.c.b16 %v6026, %v6024
    %v6247 = vpack.c.b16 %v6027, %v6025
    %v6248 = vpack.c.b16 %v6030, %v6028
    %v6249 = vpack.c.b16 %v6031, %v6029
    %v6250 = vpack.c.b16 %v6034, %v6032
    %v6251 = vpack.c.b16 %v6035, %v6033
    %v6252 = vpack.c.b16 %v6038, %v6036
    %v6253 = vpack.c.b16 %v6039, %v6037
    %v6254 = vpack.c.b16 %v6042, %v6040
    %v6255 = vpack.c.b16 %v6043, %v6041
    %v6256 = vpack.c.b16 %v6046, %v6044
    %v6257 = vpack.c.b16 %v6047, %v6045
    %v6258 = vpack.c.b16 %v6050, %v6048
    %v6259 = vpack.c.b16 %v6051, %v6049
    %v6260 = vpack.c.b16 %v6054, %v6052
    %v6261 = vpack.c.b16 %v6055, %v6053
    %v6262 = vpack.c.b16 %v6058, %v6056
    %v6263 = vpack.c.b16 %v6059, %v6057
    %v6264 = vpack.c.b16 %v6062, %v6060
    %v6265 = vpack.c.b16 %v6063, %v6061
    %v6266 = vpack.c.b16 %v6066, %v6064
    %v6267 = vpack.c.b16 %v6067, %v6065
    %v6268 = vpack.c.b16 %v6070, %v6068
    %v6269 = vpack.c.b16 %v6071, %v6069
    %v6270 = vpack.c.b16 %v6074, %v6072
    %v6271 = vpack.c.b16 %v6075, %v6073
    %v6272 = vpack.c.b16 %v6078, %v6076
    %v6273 = vpack.c.b16 %v6079, %v6077
    %v6274 = vpack.c.b16 %v6082, %v6080
    %v6275 = vpack.c.b16 %v6083, %v6081
    %v6276 = vpack.c.b16 %v6086, %v6084
    %v6277 = vpack.c.b16 %v6087, %v6085
    %v6278 = vpack.c.b16 %v6090, %v6088
    %v6279 = vpack.c.b16 %v6091, %v6089
    %v6280 = vpack.c.b16 %v6094, %v6092
    %v6281 = vpack.c.b16 %v6095, %v6093
    %v6282 = vpack.c.b16 %v6098, %v6096
    %v6283 = vpack.c.b16 %v6099, %v6097
    %v6284 = vpack.c.b16 %v6102, %v6100
    %v6285 = vpack.c.b16 %v6103, %v6101
    %v6286 = vpack.c.b16 %v6106, %v6104
    %v6287 = vpack.c.b16 %v6107, %v6105
    %v6288 = vpack.c.b16 %v6110, %v6108
    %v6289 = vpack.c.b16 %v6111, %v6109
    %v6290 = vpack.c.b16 %v6114, %v6112
    %v6291 = vpack.c.b16 %v6115, %v6113
    %v6292 = vpack.c.b16 %v6118, %v6116
    %v6293 = vpack.c.b16 %v6119, %v6117
    %v6294 = vpack.c.b16 %v6122, %v6120
    %v6295 = vpack.c.b16 %v6123, %v6121
    %v6296 = vpack.c.b16 %v6126, %v6124
    %v6297 = vpack.c.b16 %v6127, %v6125
    %v6298 = vpack.c.b16 %v6130, %v6128
    %v6299 = vpack.c.b16 %v6131, %v6129
    %v6300 = vpack.c.b16 %v6134, %v6132
    %v6301 = vpack.c.b16 %v6135, %v6133
    %v6302 = vpack.c.b16 %v6138, %v6136
    %v6303 = vpack.c.b16 %v6139, %v6137
    %v6304 = vpack.c.b16 %v6142, %v6140
    %v6305 = vpack.c.b16 %v6143, %v6141
    %v6306 = vpack.c.b16 %v6146, %v6144
    %v6307 = vpack.c.b16 %v6147, %v6145
    %v6308 = vpack.c.b16 %v6150, %v6148
    %v6309 = vpack.c.b16 %v6151, %v6149
    %v6310 = vpack.c.b16 %v6154, %v6152
    %v6311 = vpack.c.b16 %v6155, %v6153
    %v6312 = vpack.c.b16 %v6158, %v6156
    %v6313 = vpack.c.b16 %v6159, %v6157
    %v6314 = vpack.c.b16 %v6162, %v6160
    %v6315 = vpack.c.b16 %v6163, %v6161
    %v6316 = vpack.c.b16 %v6166, %v6164
    %v6317 = vpack.c.b16 %v6167, %v6165
    %v6318 = vpack.c.b16 %v6170, %v6168
    %v6319 = vpack.c.b16 %v6171, %v6169
    %v6320 = vpack.c.b16 %v6174, %v6172
    %v6321 = vpack.c.b16 %v6175, %v6173
    %v6322 = vpack.c.b16 %v6178, %v6176
    %v6323 = vpack.c.b16 %v6179, %v6177
    %v6324 = vpack.c.b16 %v6182, %v6180
    %v6325 = vpack.c.b16 %v6183, %v6181
    %v6326 = vpack.c.b16 %v6186, %v6184
    %v6327 = vpack.c.b16 %v6187, %v6185
    %v6328 = vpack.c.b16 %v6190, %v6188
    %v6329 = vpack.c.b16 %v6191, %v6189
    %v6330 = vpack.c.b16 %v6194, %v6192
    %v6331 = vpack.c.b16 %v6195, %v6193
    %v6332 = vpack.c.b16 %v6198, %v6196
    %v6333 = vpack.c.b16 %v6199, %v6197
    %v6334 = vpack.c.b16 %v6202, %v6200
    %v6335 = vpack.c.b16 %v6203, %v6201
    %v6336 = vpack.c.b16 %v6206, %v6204
    %v6337 = vpack.c.b16 %v6207, %v6205
    %v6338 = vpack.c.b16 %v6210, %v6208
    %v6339 = vpack.c.b16 %v6211, %v6209
    %6468 = vmatprep.subr.bf16.mxu0 %v6213
    %6469 = vmatpush1.bf16.msra.mxu0 %v6212
    %6470 = vmatprep.subr.bf16.mxu0 %v6215
    %6471 = vmatpush1.bf16.msra.mxu0 %v6214
    %6472 = vmatprep.subr.bf16.mxu0 %v6217
    %6473 = vmatpush1.bf16.msra.mxu0 %v6216
    %6474 = vmatprep.subr.bf16.mxu0 %v6219
    %6475 = vmatpush1.bf16.msra.mxu0 %v6218
    %6476 = vmatprep.subr.bf16.mxu0 %v6221
    %6477 = vmatpush1.bf16.msra.mxu0 %v6220
    %6478 = vmatprep.subr.bf16.mxu0 %v6223
    %6479 = vmatpush1.bf16.msra.mxu0 %v6222
    %6480 = vmatprep.subr.bf16.mxu0 %v6225
    %6481 = vmatpush1.bf16.msra.mxu0 %v6224
    %6482 = vmatprep.subr.bf16.mxu0 %v6227
    %6483 = vmatpush1.bf16.msra.mxu0 %v6226
    %6484 = vmatprep.subr.bf16.mxu0 %v6229
    %6485 = vmatpush1.bf16.msra.mxu0 %v6228
    %6486 = vmatprep.subr.bf16.mxu0 %v6231
    %6487 = vmatpush1.bf16.msra.mxu0 %v6230
    %6488 = vmatprep.subr.bf16.mxu0 %v6233
    %6489 = vmatpush1.bf16.msra.mxu0 %v6232
    %6490 = vmatprep.subr.bf16.mxu0 %v6235
    %6491 = vmatpush1.bf16.msra.mxu0 %v6234
    %6492 = vmatprep.subr.bf16.mxu0 %v6237
    %6493 = vmatpush1.bf16.msra.mxu0 %v6236
    %6494 = vmatprep.subr.bf16.mxu0 %v6239
    %6495 = vmatpush1.bf16.msra.mxu0 %v6238
    %6496 = vmatprep.subr.bf16.mxu0 %v6241
    %6497 = vmatpush1.bf16.msra.mxu0 %v6240
    %6498 = vmatprep.subr.bf16.mxu0 %v6243
    %6499 = vmatpush1.bf16.msra.mxu0 %v6242
    %6500 = vmatprep.mubr.bf16.mxu0 %v5681
    %6501 = vmatmul.mubr.bf16.gmra.mrb[0].mxu0 %v5680
    %v6502 = vpop.f32.mrb[0].mxu0
    %v6503 = vadd.f32 %v5821, %v6502
    %v6504 = vpop.f32.mrb[0].mxu0
    %v6505 = vadd.f32 %v5825, %v6504
    %v6506 = vpop.f32.mrb[0].mxu0
    %v6507 = vadd.f32 %v5821, %v6506
    %v6508 = vpop.f32.mrb[0].mxu0
    %v6509 = vadd.f32 %v5825, %v6508
    %6510 = vdwg.mxu0
    %6511 = vmatprep.subr.bf16.mxu0 %v6245
    %6512 = vmatpush1.bf16.msra.mxu0 %v6244
    %6513 = vmatprep.subr.bf16.mxu0 %v6247
    %6514 = vmatpush1.bf16.msra.mxu0 %v6246
    %6515 = vmatprep.subr.bf16.mxu0 %v6249
    %6516 = vmatpush1.bf16.msra.mxu0 %v6248
    %6517 = vmatprep.subr.bf16.mxu0 %v6251
    %6518 = vmatpush1.bf16.msra.mxu0 %v6250
    %6519 = vmatprep.subr.bf16.mxu0 %v6253
    %6520 = vmatpush1.bf16.msra.mxu0 %v6252
    %6521 = vmatprep.subr.bf16.mxu0 %v6255
    %6522 = vmatpush1.bf16.msra.mxu0 %v6254
    %6523 = vmatprep.subr.bf16.mxu0 %v6257
    %6524 = vmatpush1.bf16.msra.mxu0 %v6256
    %6525 = vmatprep.subr.bf16.mxu0 %v6259
    %6526 = vmatpush1.bf16.msra.mxu0 %v6258
    %6527 = vmatprep.subr.bf16.mxu0 %v6261
    %6528 = vmatpush1.bf16.msra.mxu0 %v6260
    %6529 = vmatprep.subr.bf16.mxu0 %v6263
    %6530 = vmatpush1.bf16.msra.mxu0 %v6262
    %6531 = vmatprep.subr.bf16.mxu0 %v6265
    %6532 = vmatpush1.bf16.msra.mxu0 %v6264
    %6533 = vmatprep.subr.bf16.mxu0 %v6267
    %6534 = vmatpush1.bf16.msra.mxu0 %v6266
    %6535 = vmatprep.subr.bf16.mxu0 %v6269
    %6536 = vmatpush1.bf16.msra.mxu0 %v6268
    %6537 = vmatprep.subr.bf16.mxu0 %v6271
    %6538 = vmatpush1.bf16.msra.mxu0 %v6270
    %6539 = vmatprep.subr.bf16.mxu0 %v6273
    %6540 = vmatpush1.bf16.msra.mxu0 %v6272
    %6541 = vmatprep.subr.bf16.mxu0 %v6275
    %6542 = vmatpush1.bf16.msra.mxu0 %v6274
    %6543 = vmatprep.mubr.bf16.mxu0 %v5683
    %6544 = vmatmul.mubr.bf16.gmra.mrb[0].mxu0 %v5682
    %v6545 = vpop.f32.mrb[0].mxu0
    %v6546 = vadd.f32 %v6503, %v6545
    %v6547 = vpop.f32.mrb[0].mxu0
    %v6548 = vadd.f32 %v6505, %v6547
    %v6549 = vpop.f32.mrb[0].mxu0
    %v6550 = vadd.f32 %v6507, %v6549
    %v6551 = vpop.f32.mrb[0].mxu0
    %v6552 = vadd.f32 %v6509, %v6551
    %6553 = vdwg.mxu0
    %6554 = vmatprep.subr.bf16.mxu0 %v6277
    %6555 = vmatpush1.bf16.msra.mxu0 %v6276
    %6556 = vmatprep.subr.bf16.mxu0 %v6279
    %6557 = vmatpush1.bf16.msra.mxu0 %v6278
    %6558 = vmatprep.subr.bf16.mxu0 %v6281
    %6559 = vmatpush1.bf16.msra.mxu0 %v6280
    %6560 = vmatprep.subr.bf16.mxu0 %v6283
    %6561 = vmatpush1.bf16.msra.mxu0 %v6282
    %6562 = vmatprep.subr.bf16.mxu0 %v6285
    %6563 = vmatpush1.bf16.msra.mxu0 %v6284
    %6564 = vmatprep.subr.bf16.mxu0 %v6287
    %6565 = vmatpush1.bf16.msra.mxu0 %v6286
    %6566 = vmatprep.subr.bf16.mxu0 %v6289
    %6567 = vmatpush1.bf16.msra.mxu0 %v6288
    %6568 = vmatprep.subr.bf16.mxu0 %v6291
    %6569 = vmatpush1.bf16.msra.mxu0 %v6290
    %6570 = vmatprep.subr.bf16.mxu0 %v6293
    %6571 = vmatpush1.bf16.msra.mxu0 %v6292
    %6572 = vmatprep.subr.bf16.mxu0 %v6295
    %6573 = vmatpush1.bf16.msra.mxu0 %v6294
    %6574 = vmatprep.subr.bf16.mxu0 %v6297
    %6575 = vmatpush1.bf16.msra.mxu0 %v6296
    %6576 = vmatprep.subr.bf16.mxu0 %v6299
    %6577 = vmatpush1.bf16.msra.mxu0 %v6298
    %6578 = vmatprep.subr.bf16.mxu0 %v6301
    %6579 = vmatpush1.bf16.msra.mxu0 %v6300
    %6580 = vmatprep.subr.bf16.mxu0 %v6303
    %6581 = vmatpush1.bf16.msra.mxu0 %v6302
    %6582 = vmatprep.subr.bf16.mxu0 %v6305
    %6583 = vmatpush1.bf16.msra.mxu0 %v6304
    %6584 = vmatprep.subr.bf16.mxu0 %v6307
    %6585 = vmatpush1.bf16.msra.mxu0 %v6306
    %6586 = vmatprep.mubr.bf16.mxu0 %v5685
    %6587 = vmatmul.mubr.bf16.gmra.mrb[0].mxu0 %v5684
    %v6588 = vpop.f32.mrb[0].mxu0
    %v6589 = vadd.f32 %v6546, %v6588
    %v6590 = vpop.f32.mrb[0].mxu0
    %v6591 = vadd.f32 %v6548, %v6590
    %v6592 = vpop.f32.mrb[0].mxu0
    %v6593 = vadd.f32 %v6550, %v6592
    %v6594 = vpop.f32.mrb[0].mxu0
    %v6595 = vadd.f32 %v6552, %v6594
    %6596 = vdwg.mxu0
    %6597 = vmatprep.subr.bf16.mxu0 %v6309
    %6598 = vmatpush1.bf16.msra.mxu0 %v6308
    %6599 = vmatprep.subr.bf16.mxu0 %v6311
    %6600 = vmatpush1.bf16.msra.mxu0 %v6310
    %6601 = vmatprep.subr.bf16.mxu0 %v6313
    %6602 = vmatpush1.bf16.msra.mxu0 %v6312
    %6603 = vmatprep.subr.bf16.mxu0 %v6315
    %6604 = vmatpush1.bf16.msra.mxu0 %v6314
    %6605 = vmatprep.subr.bf16.mxu0 %v6317
    %6606 = vmatpush1.bf16.msra.mxu0 %v6316
    %6607 = vmatprep.subr.bf16.mxu0 %v6319
    %6608 = vmatpush1.bf16.msra.mxu0 %v6318
    %6609 = vmatprep.subr.bf16.mxu0 %v6321
    %6610 = vmatpush1.bf16.msra.mxu0 %v6320
    %6611 = vmatprep.subr.bf16.mxu0 %v6323
    %6612 = vmatpush1.bf16.msra.mxu0 %v6322
    %6613 = vmatprep.subr.bf16.mxu0 %v6325
    %6614 = vmatpush1.bf16.msra.mxu0 %v6324
    %6615 = vmatprep.subr.bf16.mxu0 %v6327
    %6616 = vmatpush1.bf16.msra.mxu0 %v6326
    %6617 = vmatprep.subr.bf16.mxu0 %v6329
    %6618 = vmatpush1.bf16.msra.mxu0 %v6328
    %6619 = vmatprep.subr.bf16.mxu0 %v6331
    %6620 = vmatpush1.bf16.msra.mxu0 %v6330
    %6621 = vmatprep.subr.bf16.mxu0 %v6333
    %6622 = vmatpush1.bf16.msra.mxu0 %v6332
    %6623 = vmatprep.subr.bf16.mxu0 %v6335
    %6624 = vmatpush1.bf16.msra.mxu0 %v6334
    %6625 = vmatprep.subr.bf16.mxu0 %v6337
    %6626 = vmatpush1.bf16.msra.mxu0 %v6336
    %6627 = vmatprep.subr.bf16.mxu0 %v6339
    %6628 = vmatpush1.bf16.msra.mxu0 %v6338
    %6629 = vmatprep.mubr.bf16.mxu0 %v5687
    %6630 = vmatmul.mubr.bf16.gmra.mrb[0].mxu0 %v5686
    %v6631 = vpop.f32.mrb[0].mxu0
    %v6632 = vadd.f32 %v6589, %v6631
    %v6633 = vpop.f32.mrb[0].mxu0
    %v6634 = vadd.f32 %v6591, %v6633
    %v6635 = vpop.f32.mrb[0].mxu0
    %v6636 = vadd.f32 %v6593, %v6635
    %v6637 = vpop.f32.mrb[0].mxu0
    %v6638 = vadd.f32 %v6595, %v6637
    %6639 = vdwg.mxu0
    %v6640 = vtanh.pop %v6632
    %v6641 = vtanh.pop %v6634
    %v6642 = vtanh.pop %v6636
    %v6643 = vtanh.pop %v6638
    %6644 = vst [vmem:[#allocation16] sm:$0xff] %v6640
    %6645 = vst [vmem:[#allocation16 + $0x8] sm:$0xff] %v6641
    %6646 = vst [vmem:[#allocation16 + $0x10] sm:$0xff] %v6642
    %6647 = vst [vmem:[#allocation16 + $0x18] sm:$0xff] %v6643
    // Predicated region
    $region86: #{tpu_custom_call.1} parent=1 // pred_check
      _
    $region87: #{tpu_custom_call.1} parent=1 // pred_check_branch
      %6649 = sbr.rel (0) target = $region89
    $region88: #{tpu_custom_call.1} parent=1 // pred_region
      %s6651 = ssub.s32 512, 512
      %6652 = vsyncadd [#allocation4], %s6651
      %s6653 = sshll.u32 [#allocation16], 4
      %s6654 = int_to_ptr.vmem [resolvable:$true] %s6653
      %6659 = dma.vmem_to_hbm [thread:$0]  %s6654, 512, %s13, [#allocation4], 256, 256, 16
    $region89: #{tpu_custom_call.1} parent=1 // pred_fallthru
      _
    // Predicated region
    $region90: #{tpu_custom_call.1} parent=1 // pred_check
      _
    $region91: #{tpu_custom_call.1} parent=1 // pred_check_branch
      %6661 = sbr.rel (0) target = $region93
    $region92: #{tpu_custom_call.1} parent=1 // pred_region
      %s6663 = ssub.s32 256, 256
      %6664 = vsyncadd [#allocation18], %s6663
      %s6665 = sshll.u32 [#allocation17], 4
      %s6666 = int_to_ptr.vmem [resolvable:$true] %s6665
      %6671 = dma.vmem_to_hbm [thread:$0]  %s6666, 256, %s14, [#allocation18], 128, 128, 8
    $region93: #{tpu_custom_call.1} parent=1 // pred_fallthru
      _
    // Predicated region
    $region94: #{tpu_custom_call.1} parent=1 // pred_check
      _
    $region95: #{tpu_custom_call.1} parent=1 // pred_check_branch
      %6673 = sbr.rel (0) target = $region97
    $region96: #{tpu_custom_call.1} parent=1 // pred_region
      %6674 = dma.done [#allocation4], 512
    $region97: #{tpu_custom_call.1} parent=1 // pred_fallthru
      _
    // Predicated region
    $region98: #{tpu_custom_call.1} parent=1 // pred_check
      _
    $region99: #{tpu_custom_call.1} parent=1 // pred_check_branch
      %6676 = sbr.rel (0) target = $region101
    $region100: #{tpu_custom_call.1} parent=1 // pred_region
      %6677 = dma.done [#allocation18], 256
    $region101: #{tpu_custom_call.1} parent=1 // pred_fallthru
      _
    %6678 = vsyncpa [#allocation3], 1
    %6679 = vsyncpa [#allocation6], 1
    %6680 = vsyncpa [#allocation9], 1
    %6681 = vsyncpa [#allocation12], 1
    %6682 = vsyncpa [#allocation15], 1
    %6683 = vsyncpa [#allocation4], 1
    %6684 = vsyncpa [#allocation18], 1

</llo_original>
